<compile_context>
chip_gen: v7x
topology: tpu7x:2x2x1
jax: 0.10.0
libtpu: 0.0.40
codegen_flags: <defaults>
</compile_context>

<pallas_src>
import jax
import jax.numpy as jnp
from jax import lax
from jax.experimental import pallas as pl
from jax.experimental.pallas import tpu as pltpu


def _unet_block_kernel(x_ref, w1_ref, s1_ref, b1_ref, w2_ref, s2_ref, b2_ref,
                       o_ref, xpad_ref, apad_ref):
    """Fused (Conv3x3 + BN + ReLU) x 2 for one batch element.

    x_ref:  (1, H, W, Cin)      bf16 input tile
    w?_ref: (9*C, Cout)         bf16 im2col weights, contraction order (dx, dy, c)
    s?_ref, b?_ref: (1, Cout)   f32 folded BN scale / shift (includes conv bias)
    o_ref:  (1, H, W, Cout)     f32 output tile
    xpad_ref: (H+2, W+2, Cin)   bf16 VMEM scratch (zero halo + input interior)
    apad_ref: (H+2, W+2, Cmid)  bf16 VMEM scratch (zero halo + layer-1 activation)
    """
    H = o_ref.shape[1]
    W = o_ref.shape[2]

    # Zero halos every step (interior is fully overwritten below).  Cheap at this size
    # and robust to the grid being sharded across cores ("parallel").
    xpad_ref[...] = jnp.zeros_like(xpad_ref)
    apad_ref[...] = jnp.zeros_like(apad_ref)

    def conv3x3_bn_relu(src_ref, w_ref, s_ref, b_ref):
        c = src_ref.shape[2]
        cout = w_ref.shape[1]
        # 3 row slices along the leading (major) dim -- aligned, no relayout.
        rows = [src_ref[dy:dy + H, :, :] for dy in range(3)]
        xcat = jnp.concatenate(rows, axis=-1)                  # (H, W+2, 3*c)
        # 3 column windows (dx taps); only dx=1,2 are sublane-shifted.
        cols = [xcat[:, dx:dx + W, :] for dx in range(3)]
        patch = jnp.concatenate(cols, axis=-1)                 # (H, W, 9*c)
        # Single large-K MXU matmul, f32 accumulation.
        acc = jnp.dot(patch.reshape(H * W, 9 * c), w_ref[...],
                      preferred_element_type=jnp.float32)      # (H*W, cout)
        y = acc.reshape(H, W, cout)
        y = y * s_ref[...].reshape(1, 1, cout) + b_ref[...].reshape(1, 1, cout)
        return jnp.maximum(y, 0.0)                             # f32

    # ---- layer 1 ----
    xpad_ref[pl.ds(1, H), pl.ds(1, W), :] = x_ref[0].astype(xpad_ref.dtype)
    a1 = conv3x3_bn_relu(xpad_ref, w1_ref, s1_ref, b1_ref)
    apad_ref[pl.ds(1, H), pl.ds(1, W), :] = a1.astype(apad_ref.dtype)

    # ---- layer 2 ----
    a2 = conv3x3_bn_relu(apad_ref, w2_ref, s2_ref, b2_ref)
    o_ref[0] = a2.astype(o_ref.dtype)


def unet_conv_block_nhwc(x_nhwc, params):
    """x_nhwc: (N, H, W, Cin) -> (N, H, W, Cout), single fused pallas_call."""
    (w1, s1, b1), (w2, s2, b2) = params
    N, H, W, c_in = x_nhwc.shape
    c_mid = w1.shape[1]
    c_out = w2.shape[1]
    assert w1.shape[0] == 9 * c_in and w2.shape[0] == 9 * c_mid

    return pl.pallas_call(
        _unet_block_kernel,
        out_shape=jax.ShapeDtypeStruct((N, H, W, c_out), jnp.float32),
        grid=(N,),
        in_specs=[
            pl.BlockSpec((1, H, W, c_in), lambda n: (n, 0, 0, 0)),
            pl.BlockSpec((9 * c_in, c_mid), lambda n: (0, 0)),
            pl.BlockSpec((1, c_mid), lambda n: (0, 0)),
            pl.BlockSpec((1, c_mid), lambda n: (0, 0)),
            pl.BlockSpec((9 * c_mid, c_out), lambda n: (0, 0)),
            pl.BlockSpec((1, c_out), lambda n: (0, 0)),
            pl.BlockSpec((1, c_out), lambda n: (0, 0)),
        ],
        out_specs=pl.BlockSpec((1, H, W, c_out), lambda n: (n, 0, 0, 0)),
        scratch_shapes=[
            pltpu.VMEM((H + 2, W + 2, c_in), jnp.bfloat16),
            pltpu.VMEM((H + 2, W + 2, c_mid), jnp.bfloat16),
        ],
        compiler_params=pltpu.CompilerParams(
            dimension_semantics=("parallel",)),
    )(x_nhwc.astype(jnp.bfloat16), w1, s1, b1, w2, s2, b2)


def _max_pool2x2_nhwc(x):
    # Memory-bound 2x2 / stride-2 max pool in NHWC (matches F.max_pool2d(x, 2)).
    N, H, W, C = x.shape
    x = x[:, :2 * (H // 2), :2 * (W // 2), :]
    return x.reshape(N, H // 2, 2, W // 2, 2, C).max(axis=(2, 4))


def _fold_bn(gamma, beta, running_mean, running_var, conv_bias, eps=1e-5):
    scale = gamma / jnp.sqrt(running_var + eps)
    shift = beta + (conv_bias - running_mean) * scale
    return scale.reshape(1, -1), shift.reshape(1, -1)


class UNetConvBlockPallas:
    """Mirror of the PyTorch UNetConvBlock forward (inference-mode BN)."""

    def __init__(self, in_channels, out_channels, pooling=False, key=None):
        if key is None:
            key = jax.random.PRNGKey(0)
        self.pooling = pooling
        keys = jax.random.split(key, 8)

        def make_layer(kw, kb, kg, kbe, cin, cout):
            w = 0.1 * jax.random.normal(kw, (3, 3, cin, cout), jnp.float32)   # HWIO (dy,dx,ci,co)
            b = 0.05 * jax.random.normal(kb, (cout,), jnp.float32)
            gamma = 1.0 + 0.1 * jax.random.normal(kg, (cout,), jnp.float32)
            beta = 0.05 * jax.random.normal(kbe, (cout,), jnp.float32)
            running_mean = jnp.zeros((cout,), jnp.float32)
            running_var = jnp.ones((cout,), jnp.float32)
            scale, shift = _fold_bn(gamma, beta, running_mean, running_var, b)
            w_bf16 = w.astype(jnp.bfloat16)
            # Kernel im2col channel order is (dx, dy, cin) on the contraction axis.
            w_mat = jnp.transpose(w_bf16, (1, 0, 2, 3)).reshape(9 * cin, cout)
            return dict(w_hwio=w_bf16, w_mat=w_mat, scale=scale, shift=shift)

        self.layer1 = make_layer(keys[0], keys[1], keys[2], keys[3],
                                 in_channels, out_channels)
        self.layer2 = make_layer(keys[4], keys[5], keys[6], keys[7],
                                 out_channels, out_channels)

    def params(self):
        l1, l2 = self.layer1, self.layer2
        return ((l1["w_mat"], l1["scale"], l1["shift"]),
                (l2["w_mat"], l2["scale"], l2["shift"]))

    def __call__(self, x_nchw):
        # NCHW <-> NHWC only at the module boundary.
        x = jnp.transpose(x_nchw, (0, 2, 3, 1))
        if self.pooling:
            x = _max_pool2x2_nhwc(x)
        y = unet_conv_block_nhwc(x, self.params())
        return jnp.transpose(y, (0, 3, 1, 2))


def _reference_forward(x_nchw, block):
    """Pure-JAX reference with identical numerics (bf16 conv inputs, f32 accumulation)."""
    x = jnp.transpose(x_nchw, (0, 2, 3, 1))
    if block.pooling:
        x = _max_pool2x2_nhwc(x)
    x = x.astype(jnp.bfloat16)
    y = None
    for layer in (block.layer1, block.layer2):
        y = lax.conv_general_dilated(
            x, layer["w_hwio"], window_strides=(1, 1), padding="SAME",
            dimension_numbers=("NHWC", "HWIO", "NHWC"),
            preferred_element_type=jnp.float32)
        y = jnp.maximum(y * layer["scale"].reshape(1, 1, 1, -1)
                        + layer["shift"].reshape(1, 1, 1, -1), 0.0)
        x = y.astype(jnp.bfloat16)
    return jnp.transpose(y, (0, 3, 1, 2)).astype(jnp.float32)


if __name__ == "__main__":
    key = jax.random.PRNGKey(0)
    k_x, k_p = jax.random.split(key)

    # Small shapes consistent with the module: NCHW input.
    N, C_in, H, W = 2, 4, 16, 16
    C_out = 8
    x = jax.random.normal(k_x, (N, C_in, H, W), jnp.float32)

    # pooling=False (module default)
    block = UNetConvBlockPallas(C_in, C_out, pooling=False, key=k_p)
    out = jax.block_until_ready(block(x))
    ref = _reference_forward(x, block)
    assert out.shape == (N, C_out, H, W)
    assert jnp.allclose(out, ref, rtol=2e-2, atol=2e-2), \
        float(jnp.max(jnp.abs(out - ref)))

    # pooling=True path
    block_p = UNetConvBlockPallas(C_in, C_out, pooling=True, key=k_p)
    out_p = jax.block_until_ready(block_p(x))
    ref_p = _reference_forward(x, block_p)
    assert out_p.shape == (N, C_out, H // 2, W // 2)
    assert jnp.allclose(out_p, ref_p, rtol=2e-2, atol=2e-2), \
        float(jnp.max(jnp.abs(out_p - ref_p)))

    print("KERNEL_OK")
</pallas_src>

<mosaic_0001>
module attributes {stable_mosaic.version = 11 : i64} {
  func.func @_unet_block_kernel(%arg0: i32, %arg1: memref<1x16x16x4xbf16, #tpu.memory_space<vmem>>, %arg2: memref<36x8xbf16, #tpu.memory_space<vmem>>, %arg3: memref<1x8xf32, #tpu.memory_space<vmem>>, %arg4: memref<1x8xf32, #tpu.memory_space<vmem>>, %arg5: memref<72x8xbf16, #tpu.memory_space<vmem>>, %arg6: memref<1x8xf32, #tpu.memory_space<vmem>>, %arg7: memref<1x8xf32, #tpu.memory_space<vmem>>, %arg8: memref<1x16x16x8xf32, #tpu.memory_space<vmem>>, %arg9: memref<18x18x4xbf16, #tpu.memory_space<vmem>>, %arg10: memref<18x18x8xbf16, #tpu.memory_space<vmem>>) attributes {dimension_semantics = [#tpu.dimension_semantics<parallel>], iteration_bounds = array<i64: 2>, scalar_prefetch = 0 : i64, scratch_operands = 2 : i64, tpu.core_type = #tpu.core_type<tc>, window_params = [{transform_indices = @transform_0, window_bounds = array<i64: 1, 16, 16, 4>}, {pipeline_mode = #tpu.pipeline_mode<synchronous>, transform_indices = @transform_1, window_bounds = array<i64: 36, 8>}, {pipeline_mode = #tpu.pipeline_mode<synchronous>, transform_indices = @transform_2, window_bounds = array<i64: 1, 8>}, {pipeline_mode = #tpu.pipeline_mode<synchronous>, transform_indices = @transform_3, window_bounds = array<i64: 1, 8>}, {pipeline_mode = #tpu.pipeline_mode<synchronous>, transform_indices = @transform_4, window_bounds = array<i64: 72, 8>}, {pipeline_mode = #tpu.pipeline_mode<synchronous>, transform_indices = @transform_5, window_bounds = array<i64: 1, 8>}, {pipeline_mode = #tpu.pipeline_mode<synchronous>, transform_indices = @transform_6, window_bounds = array<i64: 1, 8>}, {transform_indices = @transform_7, window_bounds = array<i64: 1, 16, 16, 8>}]} {
    %cst = arith.constant 0.000000e+00 : bf16
    %0 = vector.broadcast %cst : bf16 to vector<18x18x4xbf16>
    %c0 = arith.constant 0 : index
    %c0_0 = arith.constant 0 : index
    %c0_1 = arith.constant 0 : index
    %1 = vector.load %arg9[%c0, %c0_0, %c0_1] : memref<18x18x4xbf16, #tpu.memory_space<vmem>>, vector<18x18x4xbf16>
    tpu.vector_store %arg9[%c0, %c0_0, %c0_1], %0 {strides = array<i32>} : memref<18x18x4xbf16, #tpu.memory_space<vmem>>, vector<18x18x4xbf16>,
    %cst_2 = arith.constant 0.000000e+00 : bf16
    %2 = vector.broadcast %cst_2 : bf16 to vector<18x18x8xbf16>
    %c0_3 = arith.constant 0 : index
    %c0_4 = arith.constant 0 : index
    %c0_5 = arith.constant 0 : index
    %3 = vector.load %arg10[%c0_3, %c0_4, %c0_5] : memref<18x18x8xbf16, #tpu.memory_space<vmem>>, vector<18x18x8xbf16>
    tpu.vector_store %arg10[%c0_3, %c0_4, %c0_5], %2 {strides = array<i32>} : memref<18x18x8xbf16, #tpu.memory_space<vmem>>, vector<18x18x8xbf16>,
    %c0_6 = arith.constant 0 : index
    %c0_7 = arith.constant 0 : index
    %c0_8 = arith.constant 0 : index
    %c0_9 = arith.constant 0 : index
    %4 = vector.load %arg1[%c0_6, %c0_7, %c0_8, %c0_9] : memref<1x16x16x4xbf16, #tpu.memory_space<vmem>>, vector<1x16x16x4xbf16>
    %5 = vector.shape_cast %4 : vector<1x16x16x4xbf16> to vector<16x16x4xbf16>
    %c1 = arith.constant 1 : index
    %c1_10 = arith.constant 1 : index
    %c0_11 = arith.constant 0 : index
    %6 = vector.load %arg9[%c1, %c1_10, %c0_11] : memref<18x18x4xbf16, #tpu.memory_space<vmem>>, vector<16x16x4xbf16>
    tpu.vector_store %arg9[%c1, %c1_10, %c0_11], %5 {strides = array<i32>} : memref<18x18x4xbf16, #tpu.memory_space<vmem>>, vector<16x16x4xbf16>,
    %c0_12 = arith.constant 0 : index
    %c0_13 = arith.constant 0 : index
    %c0_14 = arith.constant 0 : index
    %7 = vector.load %arg9[%c0_12, %c0_13, %c0_14] : memref<18x18x4xbf16, #tpu.memory_space<vmem>>, vector<16x18x4xbf16>
    %c1_15 = arith.constant 1 : index
    %c0_16 = arith.constant 0 : index
    %c0_17 = arith.constant 0 : index
    %8 = vector.load %arg9[%c1_15, %c0_16, %c0_17] : memref<18x18x4xbf16, #tpu.memory_space<vmem>>, vector<16x18x4xbf16>
    %c2 = arith.constant 2 : index
    %c0_18 = arith.constant 0 : index
    %c0_19 = arith.constant 0 : index
    %9 = vector.load %arg9[%c2, %c0_18, %c0_19] : memref<18x18x4xbf16, #tpu.memory_space<vmem>>, vector<16x18x4xbf16>
    %10 = tpu.concatenate %7, %8, %9 in 2 : vector<16x18x4xbf16>, vector<16x18x4xbf16>, vector<16x18x4xbf16> -> vector<16x18x12xbf16>
    %11 = vector.extract_strided_slice %10 {offsets = [0, 0, 0], sizes = [16, 16, 12], strides = [1, 1, 1]} : vector<16x18x12xbf16> to vector<16x16x12xbf16>
    %12 = vector.extract_strided_slice %10 {offsets = [0, 1, 0], sizes = [16, 16, 12], strides = [1, 1, 1]} : vector<16x18x12xbf16> to vector<16x16x12xbf16>
    %13 = vector.extract_strided_slice %10 {offsets = [0, 2, 0], sizes = [16, 16, 12], strides = [1, 1, 1]} : vector<16x18x12xbf16> to vector<16x16x12xbf16>
    %14 = tpu.concatenate %11, %12, %13 in 2 : vector<16x16x12xbf16>, vector<16x16x12xbf16>, vector<16x16x12xbf16> -> vector<16x16x36xbf16>
    %15 = vector.shape_cast %14 : vector<16x16x36xbf16> to vector<256x36xbf16>
    %c0_20 = arith.constant 0 : index
    %c0_21 = arith.constant 0 : index
    %16 = vector.load %arg2[%c0_20, %c0_21] : memref<36x8xbf16, #tpu.memory_space<vmem>>, vector<36x8xbf16>
    %cst_22 = arith.constant dense<0.000000e+00> : vector<256x8xf32>
    %17 = tpu.matmul %15, %16, %cst_22 {dimension_numbers = #tpu.dot_dimension_numbers<[1], [0], [0], [1], [0, 0, 1, 1], [], []>} : vector<256x36xbf16>, vector<36x8xbf16>, vector<256x8xf32> -> vector<256x8xf32>
    %18 = vector.shape_cast %17 : vector<256x8xf32> to vector<16x16x8xf32>
    %c0_23 = arith.constant 0 : index
    %c0_24 = arith.constant 0 : index
    %19 = vector.load %arg3[%c0_23, %c0_24] : memref<1x8xf32, #tpu.memory_space<vmem>>, vector<1x8xf32>
    %20 = vector.shape_cast %19 : vector<1x8xf32> to vector<1x1x8xf32>
    %21 = vector.broadcast %20 : vector<1x1x8xf32> to vector<16x16x8xf32>
    %22 = arith.mulf %18, %21 : vector<16x16x8xf32>
    %c0_25 = arith.constant 0 : index
    %c0_26 = arith.constant 0 : index
    %23 = vector.load %arg4[%c0_25, %c0_26] : memref<1x8xf32, #tpu.memory_space<vmem>>, vector<1x8xf32>
    %24 = vector.shape_cast %23 : vector<1x8xf32> to vector<1x1x8xf32>
    %25 = vector.broadcast %24 : vector<1x1x8xf32> to vector<16x16x8xf32>
    %26 = arith.addf %22, %25 : vector<16x16x8xf32>
    %cst_27 = arith.constant 0.000000e+00 : f32
    %27 = vector.broadcast %cst_27 : f32 to vector<16x16x8xf32>
    %28 = arith.maximumf %26, %27 : vector<16x16x8xf32>
    %29 = arith.truncf %28 : vector<16x16x8xf32> to vector<16x16x8xbf16>
    %c1_28 = arith.constant 1 : index
    %c1_29 = arith.constant 1 : index
    %c0_30 = arith.constant 0 : index
    %30 = vector.load %arg10[%c1_28, %c1_29, %c0_30] : memref<18x18x8xbf16, #tpu.memory_space<vmem>>, vector<16x16x8xbf16>
    tpu.vector_store %arg10[%c1_28, %c1_29, %c0_30], %29 {strides = array<i32>} : memref<18x18x8xbf16, #tpu.memory_space<vmem>>, vector<16x16x8xbf16>,
    %c0_31 = arith.constant 0 : index
    %c0_32 = arith.constant 0 : index
    %c0_33 = arith.constant 0 : index
    %31 = vector.load %arg10[%c0_31, %c0_32, %c0_33] : memref<18x18x8xbf16, #tpu.memory_space<vmem>>, vector<16x18x8xbf16>
    %c1_34 = arith.constant 1 : index
    %c0_35 = arith.constant 0 : index
    %c0_36 = arith.constant 0 : index
    %32 = vector.load %arg10[%c1_34, %c0_35, %c0_36] : memref<18x18x8xbf16, #tpu.memory_space<vmem>>, vector<16x18x8xbf16>
    %c2_37 = arith.constant 2 : index
    %c0_38 = arith.constant 0 : index
    %c0_39 = arith.constant 0 : index
    %33 = vector.load %arg10[%c2_37, %c0_38, %c0_39] : memref<18x18x8xbf16, #tpu.memory_space<vmem>>, vector<16x18x8xbf16>
    %34 = tpu.concatenate %31, %32, %33 in 2 : vector<16x18x8xbf16>, vector<16x18x8xbf16>, vector<16x18x8xbf16> -> vector<16x18x24xbf16>
    %35 = vector.extract_strided_slice %34 {offsets = [0, 0, 0], sizes = [16, 16, 24], strides = [1, 1, 1]} : vector<16x18x24xbf16> to vector<16x16x24xbf16>
    %36 = vector.extract_strided_slice %34 {offsets = [0, 1, 0], sizes = [16, 16, 24], strides = [1, 1, 1]} : vector<16x18x24xbf16> to vector<16x16x24xbf16>
    %37 = vector.extract_strided_slice %34 {offsets = [0, 2, 0], sizes = [16, 16, 24], strides = [1, 1, 1]} : vector<16x18x24xbf16> to vector<16x16x24xbf16>
    %38 = tpu.concatenate %35, %36, %37 in 2 : vector<16x16x24xbf16>, vector<16x16x24xbf16>, vector<16x16x24xbf16> -> vector<16x16x72xbf16>
    %39 = vector.shape_cast %38 : vector<16x16x72xbf16> to vector<256x72xbf16>
    %c0_40 = arith.constant 0 : index
    %c0_41 = arith.constant 0 : index
    %40 = vector.load %arg5[%c0_40, %c0_41] : memref<72x8xbf16, #tpu.memory_space<vmem>>, vector<72x8xbf16>
    %cst_42 = arith.constant dense<0.000000e+00> : vector<256x8xf32>
    %41 = tpu.matmul %39, %40, %cst_42 {dimension_numbers = #tpu.dot_dimension_numbers<[1], [0], [0], [1], [0, 0, 1, 1], [], []>} : vector<256x72xbf16>, vector<72x8xbf16>, vector<256x8xf32> -> vector<256x8xf32>
    %42 = vector.shape_cast %41 : vector<256x8xf32> to vector<16x16x8xf32>
    %c0_43 = arith.constant 0 : index
    %c0_44 = arith.constant 0 : index
    %43 = vector.load %arg6[%c0_43, %c0_44] : memref<1x8xf32, #tpu.memory_space<vmem>>, vector<1x8xf32>
    %44 = vector.shape_cast %43 : vector<1x8xf32> to vector<1x1x8xf32>
    %45 = vector.broadcast %44 : vector<1x1x8xf32> to vector<16x16x8xf32>
    %46 = arith.mulf %42, %45 : vector<16x16x8xf32>
    %c0_45 = arith.constant 0 : index
    %c0_46 = arith.constant 0 : index
    %47 = vector.load %arg7[%c0_45, %c0_46] : memref<1x8xf32, #tpu.memory_space<vmem>>, vector<1x8xf32>
    %48 = vector.shape_cast %47 : vector<1x8xf32> to vector<1x1x8xf32>
    %49 = vector.broadcast %48 : vector<1x1x8xf32> to vector<16x16x8xf32>
    %50 = arith.addf %46, %49 : vector<16x16x8xf32>
    %cst_47 = arith.constant 0.000000e+00 : f32
    %51 = vector.broadcast %cst_47 : f32 to vector<16x16x8xf32>
    %52 = arith.maximumf %50, %51 : vector<16x16x8xf32>
    %c0_48 = arith.constant 0 : index
    %c0_49 = arith.constant 0 : index
    %c0_50 = arith.constant 0 : index
    %c0_51 = arith.constant 0 : index
    %53 = vector.load %arg8[%c0_48, %c0_49, %c0_50, %c0_51] : memref<1x16x16x8xf32, #tpu.memory_space<vmem>>, vector<1x16x16x8xf32>
    %54 = vector.shape_cast %53 : vector<1x16x16x8xf32> to vector<16x16x8xf32>
    %55 = vector.shape_cast %52 : vector<16x16x8xf32> to vector<1x16x16x8xf32>
    tpu.vector_store %arg8[%c0_48, %c0_49, %c0_50, %c0_51], %55 {strides = array<i32>} : memref<1x16x16x8xf32, #tpu.memory_space<vmem>>, vector<1x16x16x8xf32>,
    return
  }
  func.func @transform_0(%arg0: i32) -> (i32, i32, i32, i32) {
    %c0_i32 = arith.constant 0 : i32
    %c0_i32_0 = arith.constant 0 : i32
    %c0_i32_1 = arith.constant 0 : i32
    %c0_i32_2 = arith.constant 0 : i32
    return %arg0, %c0_i32, %c0_i32_0, %c0_i32_1 : i32, i32, i32, i32
  }
  func.func @transform_1(%arg0: i32) -> (i32, i32) {
    %c0_i32 = arith.constant 0 : i32
    %c0_i32_0 = arith.constant 0 : i32
    %c0_i32_1 = arith.constant 0 : i32
    return %c0_i32, %c0_i32_0 : i32, i32
  }
  func.func @transform_2(%arg0: i32) -> (i32, i32) {
    %c0_i32 = arith.constant 0 : i32
    %c0_i32_0 = arith.constant 0 : i32
    %c0_i32_1 = arith.constant 0 : i32
    return %c0_i32, %c0_i32_0 : i32, i32
  }
  func.func @transform_3(%arg0: i32) -> (i32, i32) {
    %c0_i32 = arith.constant 0 : i32
    %c0_i32_0 = arith.constant 0 : i32
    %c0_i32_1 = arith.constant 0 : i32
    return %c0_i32, %c0_i32_0 : i32, i32
  }
  func.func @transform_4(%arg0: i32) -> (i32, i32) {
    %c0_i32 = arith.constant 0 : i32
    %c0_i32_0 = arith.constant 0 : i32
    %c0_i32_1 = arith.constant 0 : i32
    return %c0_i32, %c0_i32_0 : i32, i32
  }
  func.func @transform_5(%arg0: i32) -> (i32, i32) {
    %c0_i32 = arith.constant 0 : i32
    %c0_i32_0 = arith.constant 0 : i32
    %c0_i32_1 = arith.constant 0 : i32
    return %c0_i32, %c0_i32_0 : i32, i32
  }
  func.func @transform_6(%arg0: i32) -> (i32, i32) {
    %c0_i32 = arith.constant 0 : i32
    %c0_i32_0 = arith.constant 0 : i32
    %c0_i32_1 = arith.constant 0 : i32
    return %c0_i32, %c0_i32_0 : i32, i32
  }
  func.func @transform_7(%arg0: i32) -> (i32, i32, i32, i32) {
    %c0_i32 = arith.constant 0 : i32
    %c0_i32_0 = arith.constant 0 : i32
    %c0_i32_1 = arith.constant 0 : i32
    %c0_i32_2 = arith.constant 0 : i32
    return %arg0, %c0_i32, %c0_i32_0, %c0_i32_1 : i32, i32, i32, i32
  }
}

</mosaic_0001>

<llo_original>
// kernel: tpu_custom_call.1
$region0: #{tpu_custom_call.1}
  #allocation0 [shape = 'u32[]', space=smem, size = 0x4, offset = 0x4, fixed_abs, tag = 'smem constant byte address 0x4 - core index']
  #allocation1 [shape = 'u32[144,128]{1,0:T(1,128)}', space=vmem, size = 0x12000, scoped, tag = 'internal scratch']
  #allocation2 [shape = 'bf16[18,18,4]{2,1,0:T(8,128)(2,1)}', space=vmem, size = 0x1b000, scoped, tag = 'scratch operand']
  #allocation3 [shape = 'bf16[18,18,8]{2,1,0:T(8,128)(2,1)}', space=vmem, size = 0x1b000, scoped, tag = 'scratch operand']
  %s0 = inlined_call_operand.vmem [shape: bf16[2,16,16,4], index: 0, kind: input, shape index: {}]
  %s1 = inlined_call_operand.vmem [shape: bf16[36,8], index: 1, kind: input, shape index: {}]
  %s2 = inlined_call_operand.vmem [shape: f32[1,8], index: 2, kind: input, shape index: {}]
  %s3 = inlined_call_operand.vmem [shape: f32[1,8], index: 3, kind: input, shape index: {}]
  %s4 = inlined_call_operand.vmem [shape: bf16[72,8], index: 4, kind: input, shape index: {}]
  %s5 = inlined_call_operand.vmem [shape: f32[1,8], index: 5, kind: input, shape index: {}]
  %s6 = inlined_call_operand.vmem [shape: f32[1,8], index: 6, kind: input, shape index: {}]
  %s7 = inlined_call_operand.vmem [shape: f32[2,16,16,8], index: 7, kind: output, shape index: {}]
  %s8 = sld [smem:[#allocation0]]
  $region61: #{tpu_custom_call.1} parent=0
    _
  %s10 = ssub.s32 1, %s8
  %s11 = scalar_select 0, %s10, %s8
  loop: start=0, step=1, limit=4
  $region2: #{tpu_custom_call.1} parent=0 // loop_pre_header
    _
  $region3: #{tpu_custom_call.1} parent=0 // loop_header
    %s13 = sphi 0, %s17
    %p14 = scmp.ge.s32.totalorder %s13, 4
    %s23 = sphi 0, %s25
    %s26 = sphi 0, %s23
    %s27 = sphi 0, %s26
    %s43 = sphi 0, %s27
    %s47 = sphi 0, %s47
    %s49 = sphi 0, %s47
    %s50 = sphi 0, %s49
    %s64 = sphi 0, %s50
    %s68 = sphi 0, %s68
    %s70 = sphi 0, %s68
    %s71 = sphi 0, %s70
    %s85 = sphi 0, %s71
    %s89 = sphi 0, %s89
    %s91 = sphi 0, %s89
    %s92 = sphi 0, %s91
    %s106 = sphi 0, %s92
    %s110 = sphi 0, %s110
    %s112 = sphi 0, %s110
    %s113 = sphi 0, %s112
    %s127 = sphi 0, %s113
    %s131 = sphi 0, %s131
    %s133 = sphi 0, %s131
    %s134 = sphi 0, %s133
    %s148 = sphi 0, %s134
    %s152 = sphi 0, %s152
    %s154 = sphi 0, %s152
    %s155 = sphi 0, %s154
    %s169 = sphi 0, %s155
    %s175 = sphi 0, %s177
    %s178 = sphi 0, %s175
    %s179 = sphi 0, %s178
    %s195 = sphi 0, %s179
  $region4: #{tpu_custom_call.1} parent=0 // loop_header_branch
    %16 = sbr.rel (%p14) target = $region8
  $region5: #{tpu_custom_call.1} parent=0 // loop_body
    %s18 = ssub.s32 %s13, 1
    %s19 = ssub.s32 %s13, 2
    %s20 = sadd.s32 %s13, 1
    %s21 = ssub.s32 %s13, %s20
    %p22 = scmp.eq.s32.totalorder %s21, 0
    %s24 = sadd.s32 %s23, 1
    %s25 = scalar_select %p22, %s23, %s24
    %p28 = pneg %p22
    %p29 = scmp.eq.s32.totalorder %s13, 1
    %p30 = por %p28, %p29
    %p31 = scmp.ne.s32.totalorder %s23, %s26
    %p32 = scmp.eq.s32.totalorder %s13, 0
    %p33 = por %p31, %p32
    %p34 = scmp.ne.s32.totalorder %s23, %s26
    %p35 = scmp.eq.s32.totalorder %s18, 1
    %p36 = por %p34, %p35
    %p37 = scmp.ne.s32.totalorder %s26, %s27
    %p38 = scmp.eq.s32.totalorder %s18, 0
    %p39 = por %p37, %p38
    %p40 = scmp.ne.s32.totalorder %s26, %s27
    %p41 = scmp.eq.s32.totalorder %s19, 1
    %p42 = por %p40, %p41
    %p44 = scmp.ne.s32.totalorder %s27, %s43
    %p45 = scmp.eq.s32.totalorder %s19, 0
    %p46 = por %p44, %p45
    %s48 = sadd.s32 %s47, 1
    %p51 = scmp.eq.s32.totalorder %s13, 1
    %p52 = scmp.ne.s32.totalorder %s47, %s49
    %p53 = scmp.eq.s32.totalorder %s13, 0
    %p54 = por %p52, %p53
    %p55 = scmp.ne.s32.totalorder %s47, %s49
    %p56 = scmp.eq.s32.totalorder %s18, 1
    %p57 = por %p55, %p56
    %p58 = scmp.ne.s32.totalorder %s49, %s50
    %p59 = scmp.eq.s32.totalorder %s18, 0
    %p60 = por %p58, %p59
    %p61 = scmp.ne.s32.totalorder %s49, %s50
    %p62 = scmp.eq.s32.totalorder %s19, 1
    %p63 = por %p61, %p62
    %p65 = scmp.ne.s32.totalorder %s50, %s64
    %p66 = scmp.eq.s32.totalorder %s19, 0
    %p67 = por %p65, %p66
    %s69 = sadd.s32 %s68, 1
    %p72 = scmp.eq.s32.totalorder %s13, 1
    %p73 = scmp.ne.s32.totalorder %s68, %s70
    %p74 = scmp.eq.s32.totalorder %s13, 0
    %p75 = por %p73, %p74
    %p76 = scmp.ne.s32.totalorder %s68, %s70
    %p77 = scmp.eq.s32.totalorder %s18, 1
    %p78 = por %p76, %p77
    %p79 = scmp.ne.s32.totalorder %s70, %s71
    %p80 = scmp.eq.s32.totalorder %s18, 0
    %p81 = por %p79, %p80
    %p82 = scmp.ne.s32.totalorder %s70, %s71
    %p83 = scmp.eq.s32.totalorder %s19, 1
    %p84 = por %p82, %p83
    %p86 = scmp.ne.s32.totalorder %s71, %s85
    %p87 = scmp.eq.s32.totalorder %s19, 0
    %p88 = por %p86, %p87
    %s90 = sadd.s32 %s89, 1
    %p93 = scmp.eq.s32.totalorder %s13, 1
    %p94 = scmp.ne.s32.totalorder %s89, %s91
    %p95 = scmp.eq.s32.totalorder %s13, 0
    %p96 = por %p94, %p95
    %p97 = scmp.ne.s32.totalorder %s89, %s91
    %p98 = scmp.eq.s32.totalorder %s18, 1
    %p99 = por %p97, %p98
    %p100 = scmp.ne.s32.totalorder %s91, %s92
    %p101 = scmp.eq.s32.totalorder %s18, 0
    %p102 = por %p100, %p101
    %p103 = scmp.ne.s32.totalorder %s91, %s92
    %p104 = scmp.eq.s32.totalorder %s19, 1
    %p105 = por %p103, %p104
    %p107 = scmp.ne.s32.totalorder %s92, %s106
    %p108 = scmp.eq.s32.totalorder %s19, 0
    %p109 = por %p107, %p108
    %s111 = sadd.s32 %s110, 1
    %p114 = scmp.eq.s32.totalorder %s13, 1
    %p115 = scmp.ne.s32.totalorder %s110, %s112
    %p116 = scmp.eq.s32.totalorder %s13, 0
    %p117 = por %p115, %p116
    %p118 = scmp.ne.s32.totalorder %s110, %s112
    %p119 = scmp.eq.s32.totalorder %s18, 1
    %p120 = por %p118, %p119
    %p121 = scmp.ne.s32.totalorder %s112, %s113
    %p122 = scmp.eq.s32.totalorder %s18, 0
    %p123 = por %p121, %p122
    %p124 = scmp.ne.s32.totalorder %s112, %s113
    %p125 = scmp.eq.s32.totalorder %s19, 1
    %p126 = por %p124, %p125
    %p128 = scmp.ne.s32.totalorder %s113, %s127
    %p129 = scmp.eq.s32.totalorder %s19, 0
    %p130 = por %p128, %p129
    %s132 = sadd.s32 %s131, 1
    %p135 = scmp.eq.s32.totalorder %s13, 1
    %p136 = scmp.ne.s32.totalorder %s131, %s133
    %p137 = scmp.eq.s32.totalorder %s13, 0
    %p138 = por %p136, %p137
    %p139 = scmp.ne.s32.totalorder %s131, %s133
    %p140 = scmp.eq.s32.totalorder %s18, 1
    %p141 = por %p139, %p140
    %p142 = scmp.ne.s32.totalorder %s133, %s134
    %p143 = scmp.eq.s32.totalorder %s18, 0
    %p144 = por %p142, %p143
    %p145 = scmp.ne.s32.totalorder %s133, %s134
    %p146 = scmp.eq.s32.totalorder %s19, 1
    %p147 = por %p145, %p146
    %p149 = scmp.ne.s32.totalorder %s134, %s148
    %p150 = scmp.eq.s32.totalorder %s19, 0
    %p151 = por %p149, %p150
    %s153 = sadd.s32 %s152, 1
    %p156 = scmp.eq.s32.totalorder %s13, 1
    %p157 = scmp.ne.s32.totalorder %s152, %s154
    %p158 = scmp.eq.s32.totalorder %s13, 0
    %p159 = por %p157, %p158
    %p160 = scmp.ne.s32.totalorder %s152, %s154
    %p161 = scmp.eq.s32.totalorder %s18, 1
    %p162 = por %p160, %p161
    %p163 = scmp.ne.s32.totalorder %s154, %s155
    %p164 = scmp.eq.s32.totalorder %s18, 0
    %p165 = por %p163, %p164
    %p166 = scmp.ne.s32.totalorder %s154, %s155
    %p167 = scmp.eq.s32.totalorder %s19, 1
    %p168 = por %p166, %p167
    %p170 = scmp.ne.s32.totalorder %s155, %s169
    %p171 = scmp.eq.s32.totalorder %s19, 0
    %p172 = por %p170, %p171
    %s173 = ssub.s32 %s13, %s20
    %p174 = scmp.eq.s32.totalorder %s173, 0
    %s176 = sadd.s32 %s175, 1
    %s177 = scalar_select %p174, %s175, %s176
    %p180 = pneg %p174
    %p181 = scmp.eq.s32.totalorder %s13, 1
    %p182 = por %p180, %p181
    %p183 = scmp.ne.s32.totalorder %s175, %s178
    %p184 = scmp.eq.s32.totalorder %s13, 0
    %p185 = por %p183, %p184
    %p186 = scmp.ne.s32.totalorder %s175, %s178
    %p187 = scmp.eq.s32.totalorder %s18, 1
    %p188 = por %p186, %p187
    %p189 = scmp.ne.s32.totalorder %s178, %s179
    %p190 = scmp.eq.s32.totalorder %s18, 0
    %p191 = por %p189, %p190
    %p192 = scmp.ne.s32.totalorder %s178, %s179
    %p193 = scmp.eq.s32.totalorder %s19, 1
    %p194 = por %p192, %p193
    %p196 = scmp.ne.s32.totalorder %s179, %s195
    %p197 = scmp.eq.s32.totalorder %s19, 0
    %p198 = por %p196, %p197
    %p199 = scmp.le.s32.totalorder 1, %s13
    %p200 = scmp.lt.s32.totalorder %s13, 3
    %p201 = pnand %p199, %p200
    %p202 = pneg %p201
    // Predicated region
    $region9: #{tpu_custom_call.1} parent=5 // pred_check
      _
    $region10: #{tpu_custom_call.1} parent=5 // pred_check_branch
      %204 = sbr.rel (%p201) target = $region12
    $region11: #{tpu_custom_call.1} parent=5 // pred_region
      %s205 = ssub.s32 %s13, 1
      // Predicated region
      $region13: #{tpu_custom_call.1} parent=11 // pred_check
        %p206 = pneg %p60
      $region14: #{tpu_custom_call.1} parent=11 // pred_check_branch
        %208 = sbr.rel (%p206) target = $region16
      $region15: #{tpu_custom_call.1} parent=11 // pred_region
        _
      $region16: #{tpu_custom_call.1} parent=11 // pred_fallthru
        _
      // Predicated region
      $region17: #{tpu_custom_call.1} parent=11 // pred_check
        %p209 = pneg %p81
      $region18: #{tpu_custom_call.1} parent=11 // pred_check_branch
        %211 = sbr.rel (%p209) target = $region20
      $region19: #{tpu_custom_call.1} parent=11 // pred_region
        _
      $region20: #{tpu_custom_call.1} parent=11 // pred_fallthru
        _
      // Predicated region
      $region21: #{tpu_custom_call.1} parent=11 // pred_check
        %p212 = pneg %p102
      $region22: #{tpu_custom_call.1} parent=11 // pred_check_branch
        %214 = sbr.rel (%p212) target = $region24
      $region23: #{tpu_custom_call.1} parent=11 // pred_region
        _
      $region24: #{tpu_custom_call.1} parent=11 // pred_fallthru
        _
      // Predicated region
      $region25: #{tpu_custom_call.1} parent=11 // pred_check
        %p215 = pneg %p123
      $region26: #{tpu_custom_call.1} parent=11 // pred_check_branch
        %217 = sbr.rel (%p215) target = $region28
      $region27: #{tpu_custom_call.1} parent=11 // pred_region
        _
      $region28: #{tpu_custom_call.1} parent=11 // pred_fallthru
        _
      // Predicated region
      $region29: #{tpu_custom_call.1} parent=11 // pred_check
        %p218 = pneg %p144
      $region30: #{tpu_custom_call.1} parent=11 // pred_check_branch
        %220 = sbr.rel (%p218) target = $region32
      $region31: #{tpu_custom_call.1} parent=11 // pred_region
        _
      $region32: #{tpu_custom_call.1} parent=11 // pred_fallthru
        _
      // Predicated region
      $region33: #{tpu_custom_call.1} parent=11 // pred_check
        %p221 = pneg %p165
      $region34: #{tpu_custom_call.1} parent=11 // pred_check_branch
        %223 = sbr.rel (%p221) target = $region36
      $region35: #{tpu_custom_call.1} parent=11 // pred_region
        _
      $region36: #{tpu_custom_call.1} parent=11 // pred_fallthru
        _
    $region12: #{tpu_custom_call.1} parent=5 // pred_fallthru
      _
    %p224 = scmp.lt.s32.totalorder %s13, 2
    // Predicated region
    $region37: #{tpu_custom_call.1} parent=5 // pred_check
      %p225 = pneg %p224
    $region38: #{tpu_custom_call.1} parent=5 // pred_check_branch
      %227 = sbr.rel (%p225) target = $region40
    $region39: #{tpu_custom_call.1} parent=5 // pred_region
      // Predicated region
      $region41: #{tpu_custom_call.1} parent=39 // pred_check
        %p228 = pneg %p33
      $region42: #{tpu_custom_call.1} parent=39 // pred_check_branch
        %230 = sbr.rel (%p228) target = $region44
      $region43: #{tpu_custom_call.1} parent=39 // pred_region
        %p231 = scmp.lt.s32.totalorder %s13, 1
        %s232 = scalar_select %p231, %s13, 1
        %s233 = smul.addr %s232, 32
        %s234 = smul.addr %s233, 4
        %s235 = scalar_lea.vmem %s0, %s234
      $region44: #{tpu_custom_call.1} parent=39 // pred_fallthru
        _
    $region40: #{tpu_custom_call.1} parent=5 // pred_fallthru
      _
    %p236 = scmp.le.s32.totalorder 1, %s13
    %p237 = scmp.lt.s32.totalorder %s13, 3
    %p238 = pnand %p236, %p237
    %p239 = pneg %p238
    // Predicated region
    $region45: #{tpu_custom_call.1} parent=5 // pred_check
      _
    $region46: #{tpu_custom_call.1} parent=5 // pred_check_branch
      %241 = sbr.rel (%p238) target = $region48
    $region47: #{tpu_custom_call.1} parent=5 // pred_region
      %s242 = ssub.s32 %s13, 1
      %p243 = scmp.lt.s32.totalorder %s18, 1
      %s244 = scalar_select %p243, %s18, 1
      %s245 = smul.addr %s244, 32
      %s246 = smul.addr %s245, 4
      %s247 = scalar_lea.vmem %s0, %s246
      %p248 = pneg %p39
      %p249 = pneg %p36
      %p250 = pneg %p60
      %p251 = pneg %p57
      %p252 = pneg %p81
      %p253 = pneg %p78
      %p254 = pneg %p102
      %p255 = pneg %p99
      %p256 = pneg %p123
      %p257 = pneg %p120
      %p258 = pneg %p144
      %p259 = pneg %p141
      %p260 = pneg %p165
      %p261 = pneg %p162
      %p262 = pneg %p191
      %p263 = pneg %p188
      %p264 = scmp.lt.s32.totalorder %s18, 1
      %s265 = scalar_select %p264, %s18, 1
      %s266 = smul.addr %s265, 32
      %s267 = smul.addr %s266, 8
      %s268 = scalar_lea.vmem %s7, %s267
      %p269 = scmp.lt.s32.totalorder %s18, 1
      %s270 = scalar_select %p269, %s18, 1
      %s271 = smul.addr %s270, 32
      %s272 = smul.addr %s271, 4
      %s273 = scalar_lea.vmem %s0, %s272
      %p274 = scmp.lt.s32.totalorder %s18, 1
      %s275 = scalar_select %p274, %s18, 1
      %s276 = smul.addr %s275, 32
      %s277 = smul.addr %s276, 8
      %s278 = scalar_lea.vmem %s7, %s277
      %vm280 = vcmask 27648
      %281 = vst.msk [vmem:[#allocation2] sm:$0xf] %vm280, 0
      %282 = vst.msk [vmem:[#allocation2 + $0x4] sm:$0xf] %vm280, 0
      %vm283 = vcmask 24576
      %284 = vst.msk [vmem:[#allocation2 + $0x8] sm:$0x1] %vm283, 0
      %285 = vst.msk [vmem:[#allocation2 + $0xc] sm:$0xf] %vm280, 0
      %286 = vst.msk [vmem:[#allocation2 + $0x10] sm:$0xf] %vm280, 0
      %287 = vst.msk [vmem:[#allocation2 + $0x14] sm:$0x1] %vm283, 0
      %288 = vst.msk [vmem:[#allocation2 + $0x18] sm:$0xf] %vm280, 0
      %289 = vst.msk [vmem:[#allocation2 + $0x1c] sm:$0xf] %vm280, 0
      %290 = vst.msk [vmem:[#allocation2 + $0x20] sm:$0x1] %vm283, 0
      %291 = vst.msk [vmem:[#allocation2 + $0x24] sm:$0xf] %vm280, 0
      %292 = vst.msk [vmem:[#allocation2 + $0x28] sm:$0xf] %vm280, 0
      %293 = vst.msk [vmem:[#allocation2 + $0x2c] sm:$0x1] %vm283, 0
      %294 = vst.msk [vmem:[#allocation2 + $0x30] sm:$0xf] %vm280, 0
      %295 = vst.msk [vmem:[#allocation2 + $0x34] sm:$0xf] %vm280, 0
      %296 = vst.msk [vmem:[#allocation2 + $0x38] sm:$0x1] %vm283, 0
      %297 = vst.msk [vmem:[#allocation2 + $0x3c] sm:$0xf] %vm280, 0
      %298 = vst.msk [vmem:[#allocation2 + $0x40] sm:$0xf] %vm280, 0
      %299 = vst.msk [vmem:[#allocation2 + $0x44] sm:$0x1] %vm283, 0
      %300 = vst.msk [vmem:[#allocation2 + $0x48] sm:$0xf] %vm280, 0
      %301 = vst.msk [vmem:[#allocation2 + $0x4c] sm:$0xf] %vm280, 0
      %302 = vst.msk [vmem:[#allocation2 + $0x50] sm:$0x1] %vm283, 0
      %303 = vst.msk [vmem:[#allocation2 + $0x54] sm:$0xf] %vm280, 0
      %304 = vst.msk [vmem:[#allocation2 + $0x58] sm:$0xf] %vm280, 0
      %305 = vst.msk [vmem:[#allocation2 + $0x5c] sm:$0x1] %vm283, 0
      %306 = vst.msk [vmem:[#allocation2 + $0x60] sm:$0xf] %vm280, 0
      %307 = vst.msk [vmem:[#allocation2 + $0x64] sm:$0xf] %vm280, 0
      %308 = vst.msk [vmem:[#allocation2 + $0x68] sm:$0x1] %vm283, 0
      %309 = vst.msk [vmem:[#allocation2 + $0x6c] sm:$0xf] %vm280, 0
      %310 = vst.msk [vmem:[#allocation2 + $0x70] sm:$0xf] %vm280, 0
      %311 = vst.msk [vmem:[#allocation2 + $0x74] sm:$0x1] %vm283, 0
      %312 = vst.msk [vmem:[#allocation2 + $0x78] sm:$0xf] %vm280, 0
      %313 = vst.msk [vmem:[#allocation2 + $0x7c] sm:$0xf] %vm280, 0
      %314 = vst.msk [vmem:[#allocation2 + $0x80] sm:$0x1] %vm283, 0
      %315 = vst.msk [vmem:[#allocation2 + $0x84] sm:$0xf] %vm280, 0
      %316 = vst.msk [vmem:[#allocation2 + $0x88] sm:$0xf] %vm280, 0
      %317 = vst.msk [vmem:[#allocation2 + $0x8c] sm:$0x1] %vm283, 0
      %318 = vst.msk [vmem:[#allocation2 + $0x90] sm:$0xf] %vm280, 0
      %319 = vst.msk [vmem:[#allocation2 + $0x94] sm:$0xf] %vm280, 0
      %320 = vst.msk [vmem:[#allocation2 + $0x98] sm:$0x1] %vm283, 0
      %321 = vst.msk [vmem:[#allocation2 + $0x9c] sm:$0xf] %vm280, 0
      %322 = vst.msk [vmem:[#allocation2 + $0xa0] sm:$0xf] %vm280, 0
      %323 = vst.msk [vmem:[#allocation2 + $0xa4] sm:$0x1] %vm283, 0
      %324 = vst.msk [vmem:[#allocation2 + $0xa8] sm:$0xf] %vm280, 0
      %325 = vst.msk [vmem:[#allocation2 + $0xac] sm:$0xf] %vm280, 0
      %326 = vst.msk [vmem:[#allocation2 + $0xb0] sm:$0x1] %vm283, 0
      %327 = vst.msk [vmem:[#allocation2 + $0xb4] sm:$0xf] %vm280, 0
      %328 = vst.msk [vmem:[#allocation2 + $0xb8] sm:$0xf] %vm280, 0
      %329 = vst.msk [vmem:[#allocation2 + $0xbc] sm:$0x1] %vm283, 0
      %330 = vst.msk [vmem:[#allocation2 + $0xc0] sm:$0xf] %vm280, 0
      %331 = vst.msk [vmem:[#allocation2 + $0xc4] sm:$0xf] %vm280, 0
      %332 = vst.msk [vmem:[#allocation2 + $0xc8] sm:$0x1] %vm283, 0
      %333 = vst.msk [vmem:[#allocation2 + $0xcc] sm:$0xf] %vm280, 0
      %334 = vst.msk [vmem:[#allocation2 + $0xd0] sm:$0xf] %vm280, 0
      %335 = vst.msk [vmem:[#allocation2 + $0xd4] sm:$0x1] %vm283, 0
      %vm336 = vcmask 60416
      %337 = vst.msk [vmem:[#allocation3] sm:$0xf] %vm336, 0
      %338 = vst.msk [vmem:[#allocation3 + $0x4] sm:$0xf] %vm336, 0
      %vm339 = vcmask 57344
      %340 = vst.msk [vmem:[#allocation3 + $0x8] sm:$0x1] %vm339, 0
      %341 = vst.msk [vmem:[#allocation3 + $0xc] sm:$0xf] %vm336, 0
      %342 = vst.msk [vmem:[#allocation3 + $0x10] sm:$0xf] %vm336, 0
      %343 = vst.msk [vmem:[#allocation3 + $0x14] sm:$0x1] %vm339, 0
      %344 = vst.msk [vmem:[#allocation3 + $0x18] sm:$0xf] %vm336, 0
      %345 = vst.msk [vmem:[#allocation3 + $0x1c] sm:$0xf] %vm336, 0
      %346 = vst.msk [vmem:[#allocation3 + $0x20] sm:$0x1] %vm339, 0
      %347 = vst.msk [vmem:[#allocation3 + $0x24] sm:$0xf] %vm336, 0
      %348 = vst.msk [vmem:[#allocation3 + $0x28] sm:$0xf] %vm336, 0
      %349 = vst.msk [vmem:[#allocation3 + $0x2c] sm:$0x1] %vm339, 0
      %350 = vst.msk [vmem:[#allocation3 + $0x30] sm:$0xf] %vm336, 0
      %351 = vst.msk [vmem:[#allocation3 + $0x34] sm:$0xf] %vm336, 0
      %352 = vst.msk [vmem:[#allocation3 + $0x38] sm:$0x1] %vm339, 0
      %353 = vst.msk [vmem:[#allocation3 + $0x3c] sm:$0xf] %vm336, 0
      %354 = vst.msk [vmem:[#allocation3 + $0x40] sm:$0xf] %vm336, 0
      %355 = vst.msk [vmem:[#allocation3 + $0x44] sm:$0x1] %vm339, 0
      %356 = vst.msk [vmem:[#allocation3 + $0x48] sm:$0xf] %vm336, 0
      %357 = vst.msk [vmem:[#allocation3 + $0x4c] sm:$0xf] %vm336, 0
      %358 = vst.msk [vmem:[#allocation3 + $0x50] sm:$0x1] %vm339, 0
      %359 = vst.msk [vmem:[#allocation3 + $0x54] sm:$0xf] %vm336, 0
      %360 = vst.msk [vmem:[#allocation3 + $0x58] sm:$0xf] %vm336, 0
      %361 = vst.msk [vmem:[#allocation3 + $0x5c] sm:$0x1] %vm339, 0
      %362 = vst.msk [vmem:[#allocation3 + $0x60] sm:$0xf] %vm336, 0
      %363 = vst.msk [vmem:[#allocation3 + $0x64] sm:$0xf] %vm336, 0
      %364 = vst.msk [vmem:[#allocation3 + $0x68] sm:$0x1] %vm339, 0
      %365 = vst.msk [vmem:[#allocation3 + $0x6c] sm:$0xf] %vm336, 0
      %366 = vst.msk [vmem:[#allocation3 + $0x70] sm:$0xf] %vm336, 0
      %367 = vst.msk [vmem:[#allocation3 + $0x74] sm:$0x1] %vm339, 0
      %368 = vst.msk [vmem:[#allocation3 + $0x78] sm:$0xf] %vm336, 0
      %369 = vst.msk [vmem:[#allocation3 + $0x7c] sm:$0xf] %vm336, 0
      %370 = vst.msk [vmem:[#allocation3 + $0x80] sm:$0x1] %vm339, 0
      %371 = vst.msk [vmem:[#allocation3 + $0x84] sm:$0xf] %vm336, 0
      %372 = vst.msk [vmem:[#allocation3 + $0x88] sm:$0xf] %vm336, 0
      %373 = vst.msk [vmem:[#allocation3 + $0x8c] sm:$0x1] %vm339, 0
      %374 = vst.msk [vmem:[#allocation3 + $0x90] sm:$0xf] %vm336, 0
      %375 = vst.msk [vmem:[#allocation3 + $0x94] sm:$0xf] %vm336, 0
      %376 = vst.msk [vmem:[#allocation3 + $0x98] sm:$0x1] %vm339, 0
      %377 = vst.msk [vmem:[#allocation3 + $0x9c] sm:$0xf] %vm336, 0
      %378 = vst.msk [vmem:[#allocation3 + $0xa0] sm:$0xf] %vm336, 0
      %379 = vst.msk [vmem:[#allocation3 + $0xa4] sm:$0x1] %vm339, 0
      %380 = vst.msk [vmem:[#allocation3 + $0xa8] sm:$0xf] %vm336, 0
      %381 = vst.msk [vmem:[#allocation3 + $0xac] sm:$0xf] %vm336, 0
      %382 = vst.msk [vmem:[#allocation3 + $0xb0] sm:$0x1] %vm339, 0
      %383 = vst.msk [vmem:[#allocation3 + $0xb4] sm:$0xf] %vm336, 0
      %384 = vst.msk [vmem:[#allocation3 + $0xb8] sm:$0xf] %vm336, 0
      %385 = vst.msk [vmem:[#allocation3 + $0xbc] sm:$0x1] %vm339, 0
      %386 = vst.msk [vmem:[#allocation3 + $0xc0] sm:$0xf] %vm336, 0
      %387 = vst.msk [vmem:[#allocation3 + $0xc4] sm:$0xf] %vm336, 0
      %388 = vst.msk [vmem:[#allocation3 + $0xc8] sm:$0x1] %vm339, 0
      %389 = vst.msk [vmem:[#allocation3 + $0xcc] sm:$0xf] %vm336, 0
      %390 = vst.msk [vmem:[#allocation3 + $0xd0] sm:$0xf] %vm336, 0
      %391 = vst.msk [vmem:[#allocation3 + $0xd4] sm:$0x1] %vm339, 0
      %v392 = vld [vmem:[%s273] sm:$0xf]
      %v393 = vld [vmem:[%s273 + $0x4] sm:$0xf]
      %v394 = vld [vmem:[%s273 + $0x8] sm:$0xf]
      %v395 = vld [vmem:[%s273 + $0xc] sm:$0xf]
      %v396 = vld [vmem:[%s273 + $0x10] sm:$0xf]
      %v397 = vld [vmem:[%s273 + $0x14] sm:$0xf]
      %v398 = vld [vmem:[%s273 + $0x18] sm:$0xf]
      %v399 = vld [vmem:[%s273 + $0x1c] sm:$0xf]
      %v400 = vld [vmem:[%s273 + $0x20] sm:$0xf]
      %v401 = vld [vmem:[%s273 + $0x24] sm:$0xf]
      %v402 = vld [vmem:[%s273 + $0x28] sm:$0xf]
      %v403 = vld [vmem:[%s273 + $0x2c] sm:$0xf]
      %v404 = vld [vmem:[%s273 + $0x30] sm:$0xf]
      %v405 = vld [vmem:[%s273 + $0x34] sm:$0xf]
      %v406 = vld [vmem:[%s273 + $0x38] sm:$0xf]
      %v407 = vld [vmem:[%s273 + $0x3c] sm:$0xf]
      %v408 = vld [vmem:[%s273 + $0x40] sm:$0xf]
      %v409 = vld [vmem:[%s273 + $0x44] sm:$0xf]
      %v410 = vld [vmem:[%s273 + $0x48] sm:$0xf]
      %v411 = vld [vmem:[%s273 + $0x4c] sm:$0xf]
      %v412 = vld [vmem:[%s273 + $0x50] sm:$0xf]
      %v413 = vld [vmem:[%s273 + $0x54] sm:$0xf]
      %v414 = vld [vmem:[%s273 + $0x58] sm:$0xf]
      %v415 = vld [vmem:[%s273 + $0x5c] sm:$0xf]
      %v416 = vld [vmem:[%s273 + $0x60] sm:$0xf]
      %v417 = vld [vmem:[%s273 + $0x64] sm:$0xf]
      %v418 = vld [vmem:[%s273 + $0x68] sm:$0xf]
      %v419 = vld [vmem:[%s273 + $0x6c] sm:$0xf]
      %v420 = vld [vmem:[%s273 + $0x70] sm:$0xf]
      %v421 = vld [vmem:[%s273 + $0x74] sm:$0xf]
      %v422 = vld [vmem:[%s273 + $0x78] sm:$0xf]
      %v423 = vld [vmem:[%s273 + $0x7c] sm:$0xf]
      %vm424 = vsmask.f32 256
      %vm425 = vsmask.f32 4368
      %vm426 = vmor %vm424, %vm425
      %v428 = vshrl.u32 %v392, 16
      %v430 = vrot.slane %v428, 7
      %v431 = vshll.u32 %v392, 16
      %v433 = vor.u32 %v430, %v431
      %v434 = vrot.slane %v430, 4
      %v436 = vshrl.u32 %v393, 16
      %v438 = vrot.slane %v436, 7
      %v439 = vshll.u32 %v393, 16
      %v441 = vor.u32 %v438, %v439
      %v442 = vsel %vm426, %v434, %v441
      %v443 = vrot.slane %v438, 4
      %v445 = vshrl.u32 %v394, 16
      %v447 = vrot.slane %v445, 7
      %v448 = vshll.u32 %v394, 16
      %v450 = vor.u32 %v447, %v448
      %v451 = vrot.slane %v447, 4
      %v453 = vshrl.u32 %v395, 16
      %v455 = vrot.slane %v453, 7
      %v456 = vshll.u32 %v395, 16
      %v458 = vor.u32 %v455, %v456
      %v459 = vsel %vm426, %v451, %v458
      %v460 = vrot.slane %v455, 4
      %v462 = vshrl.u32 %v396, 16
      %v464 = vrot.slane %v462, 7
      %v465 = vshll.u32 %v396, 16
      %v467 = vor.u32 %v464, %v465
      %v468 = vrot.slane %v464, 4
      %v470 = vshrl.u32 %v397, 16
      %v472 = vrot.slane %v470, 7
      %v473 = vshll.u32 %v397, 16
      %v475 = vor.u32 %v472, %v473
      %v476 = vsel %vm426, %v468, %v475
      %v477 = vrot.slane %v472, 4
      %v479 = vshrl.u32 %v398, 16
      %v481 = vrot.slane %v479, 7
      %v482 = vshll.u32 %v398, 16
      %v484 = vor.u32 %v481, %v482
      %v485 = vrot.slane %v481, 4
      %v487 = vshrl.u32 %v399, 16
      %v489 = vrot.slane %v487, 7
      %v490 = vshll.u32 %v399, 16
      %v492 = vor.u32 %v489, %v490
      %v493 = vsel %vm426, %v485, %v492
      %v494 = vrot.slane %v489, 4
      %v496 = vshrl.u32 %v400, 16
      %v498 = vrot.slane %v496, 7
      %v499 = vshll.u32 %v400, 16
      %v501 = vor.u32 %v498, %v499
      %v502 = vrot.slane %v498, 4
      %v504 = vshrl.u32 %v401, 16
      %v506 = vrot.slane %v504, 7
      %v507 = vshll.u32 %v401, 16
      %v509 = vor.u32 %v506, %v507
      %v510 = vsel %vm426, %v502, %v509
      %v511 = vrot.slane %v506, 4
      %v513 = vshrl.u32 %v402, 16
      %v515 = vrot.slane %v513, 7
      %v516 = vshll.u32 %v402, 16
      %v518 = vor.u32 %v515, %v516
      %v519 = vrot.slane %v515, 4
      %v521 = vshrl.u32 %v403, 16
      %v523 = vrot.slane %v521, 7
      %v524 = vshll.u32 %v403, 16
      %v526 = vor.u32 %v523, %v524
      %v527 = vsel %vm426, %v519, %v526
      %v528 = vrot.slane %v523, 4
      %v530 = vshrl.u32 %v404, 16
      %v532 = vrot.slane %v530, 7
      %v533 = vshll.u32 %v404, 16
      %v535 = vor.u32 %v532, %v533
      %v536 = vrot.slane %v532, 4
      %v538 = vshrl.u32 %v405, 16
      %v540 = vrot.slane %v538, 7
      %v541 = vshll.u32 %v405, 16
      %v543 = vor.u32 %v540, %v541
      %v544 = vsel %vm426, %v536, %v543
      %v545 = vrot.slane %v540, 4
      %v547 = vshrl.u32 %v406, 16
      %v549 = vrot.slane %v547, 7
      %v550 = vshll.u32 %v406, 16
      %v552 = vor.u32 %v549, %v550
      %v553 = vrot.slane %v549, 4
      %v555 = vshrl.u32 %v407, 16
      %v557 = vrot.slane %v555, 7
      %v558 = vshll.u32 %v407, 16
      %v560 = vor.u32 %v557, %v558
      %v561 = vsel %vm426, %v553, %v560
      %v562 = vrot.slane %v557, 4
      %v564 = vshrl.u32 %v408, 16
      %v566 = vrot.slane %v564, 7
      %v567 = vshll.u32 %v408, 16
      %v569 = vor.u32 %v566, %v567
      %v570 = vrot.slane %v566, 4
      %v572 = vshrl.u32 %v409, 16
      %v574 = vrot.slane %v572, 7
      %v575 = vshll.u32 %v409, 16
      %v577 = vor.u32 %v574, %v575
      %v578 = vsel %vm426, %v570, %v577
      %v579 = vrot.slane %v574, 4
      %v581 = vshrl.u32 %v410, 16
      %v583 = vrot.slane %v581, 7
      %v584 = vshll.u32 %v410, 16
      %v586 = vor.u32 %v583, %v584
      %v587 = vrot.slane %v583, 4
      %v589 = vshrl.u32 %v411, 16
      %v591 = vrot.slane %v589, 7
      %v592 = vshll.u32 %v411, 16
      %v594 = vor.u32 %v591, %v592
      %v595 = vsel %vm426, %v587, %v594
      %v596 = vrot.slane %v591, 4
      %v598 = vshrl.u32 %v412, 16
      %v600 = vrot.slane %v598, 7
      %v601 = vshll.u32 %v412, 16
      %v603 = vor.u32 %v600, %v601
      %v604 = vrot.slane %v600, 4
      %v606 = vshrl.u32 %v413, 16
      %v608 = vrot.slane %v606, 7
      %v609 = vshll.u32 %v413, 16
      %v611 = vor.u32 %v608, %v609
      %v612 = vsel %vm426, %v604, %v611
      %v613 = vrot.slane %v608, 4
      %v615 = vshrl.u32 %v414, 16
      %v617 = vrot.slane %v615, 7
      %v618 = vshll.u32 %v414, 16
      %v620 = vor.u32 %v617, %v618
      %v621 = vrot.slane %v617, 4
      %v623 = vshrl.u32 %v415, 16
      %v625 = vrot.slane %v623, 7
      %v626 = vshll.u32 %v415, 16
      %v628 = vor.u32 %v625, %v626
      %v629 = vsel %vm426, %v621, %v628
      %v630 = vrot.slane %v625, 4
      %v632 = vshrl.u32 %v416, 16
      %v634 = vrot.slane %v632, 7
      %v635 = vshll.u32 %v416, 16
      %v637 = vor.u32 %v634, %v635
      %v638 = vrot.slane %v634, 4
      %v640 = vshrl.u32 %v417, 16
      %v642 = vrot.slane %v640, 7
      %v643 = vshll.u32 %v417, 16
      %v645 = vor.u32 %v642, %v643
      %v646 = vsel %vm426, %v638, %v645
      %v647 = vrot.slane %v642, 4
      %v649 = vshrl.u32 %v418, 16
      %v651 = vrot.slane %v649, 7
      %v652 = vshll.u32 %v418, 16
      %v654 = vor.u32 %v651, %v652
      %v655 = vrot.slane %v651, 4
      %v657 = vshrl.u32 %v419, 16
      %v659 = vrot.slane %v657, 7
      %v660 = vshll.u32 %v419, 16
      %v662 = vor.u32 %v659, %v660
      %v663 = vsel %vm426, %v655, %v662
      %v664 = vrot.slane %v659, 4
      %v666 = vshrl.u32 %v420, 16
      %v668 = vrot.slane %v666, 7
      %v669 = vshll.u32 %v420, 16
      %v671 = vor.u32 %v668, %v669
      %v672 = vrot.slane %v668, 4
      %v674 = vshrl.u32 %v421, 16
      %v676 = vrot.slane %v674, 7
      %v677 = vshll.u32 %v421, 16
      %v679 = vor.u32 %v676, %v677
      %v680 = vsel %vm426, %v672, %v679
      %v681 = vrot.slane %v676, 4
      %v683 = vshrl.u32 %v422, 16
      %v685 = vrot.slane %v683, 7
      %v686 = vshll.u32 %v422, 16
      %v688 = vor.u32 %v685, %v686
      %v689 = vrot.slane %v685, 4
      %v691 = vshrl.u32 %v423, 16
      %v693 = vrot.slane %v691, 7
      %v694 = vshll.u32 %v423, 16
      %v696 = vor.u32 %v693, %v694
      %v697 = vsel %vm426, %v689, %v696
      %v698 = vrot.slane %v693, 4
      %s747 = scalar_lea.vmem [#allocation2], 12
      %vm748 = vcmask 27648
      %vm749 = vsmask.f32 7938
      %vm750 = vmand %vm748, %vm749
      %v751 = vld [vmem:[%s747] sm:$0xf]
      %v752 = vsel %vm750, %v433, %v751
      %753 = vst [vmem:[%s747] sm:$0xf] %v752
      %754 = vst.msk [vmem:[%s747 + $0x4] sm:$0xf] %vm280, %v442
      %vm755 = vcmask 24576
      %vm756 = vmand %vm755, %vm424
      %v757 = vld [vmem:[%s747 + $0x8] sm:$0x1]
      %v758 = vsel %vm756, %v443, %v757
      %759 = vst [vmem:[%s747 + $0x8] sm:$0x1] %v758
      %v760 = vld [vmem:[%s747 + $0xc] sm:$0xf]
      %v761 = vsel %vm750, %v450, %v760
      %762 = vst [vmem:[%s747 + $0xc] sm:$0xf] %v761
      %763 = vst.msk [vmem:[%s747 + $0x10] sm:$0xf] %vm280, %v459
      %v764 = vld [vmem:[%s747 + $0x14] sm:$0x1]
      %v765 = vsel %vm756, %v460, %v764
      %766 = vst [vmem:[%s747 + $0x14] sm:$0x1] %v765
      %v767 = vld [vmem:[%s747 + $0x18] sm:$0xf]
      %v768 = vsel %vm750, %v467, %v767
      %769 = vst [vmem:[%s747 + $0x18] sm:$0xf] %v768
      %770 = vst.msk [vmem:[%s747 + $0x1c] sm:$0xf] %vm280, %v476
      %v771 = vld [vmem:[%s747 + $0x20] sm:$0x1]
      %v772 = vsel %vm756, %v477, %v771
      %773 = vst [vmem:[%s747 + $0x20] sm:$0x1] %v772
      %v774 = vld [vmem:[%s747 + $0x24] sm:$0xf]
      %v775 = vsel %vm750, %v484, %v774
      %776 = vst [vmem:[%s747 + $0x24] sm:$0xf] %v775
      %777 = vst.msk [vmem:[%s747 + $0x28] sm:$0xf] %vm280, %v493
      %v778 = vld [vmem:[%s747 + $0x2c] sm:$0x1]
      %v779 = vsel %vm756, %v494, %v778
      %780 = vst [vmem:[%s747 + $0x2c] sm:$0x1] %v779
      %v781 = vld [vmem:[%s747 + $0x30] sm:$0xf]
      %v782 = vsel %vm750, %v501, %v781
      %783 = vst [vmem:[%s747 + $0x30] sm:$0xf] %v782
      %784 = vst.msk [vmem:[%s747 + $0x34] sm:$0xf] %vm280, %v510
      %v785 = vld [vmem:[%s747 + $0x38] sm:$0x1]
      %v786 = vsel %vm756, %v511, %v785
      %787 = vst [vmem:[%s747 + $0x38] sm:$0x1] %v786
      %v788 = vld [vmem:[%s747 + $0x3c] sm:$0xf]
      %v789 = vsel %vm750, %v518, %v788
      %790 = vst [vmem:[%s747 + $0x3c] sm:$0xf] %v789
      %791 = vst.msk [vmem:[%s747 + $0x40] sm:$0xf] %vm280, %v527
      %v792 = vld [vmem:[%s747 + $0x44] sm:$0x1]
      %v793 = vsel %vm756, %v528, %v792
      %794 = vst [vmem:[%s747 + $0x44] sm:$0x1] %v793
      %v795 = vld [vmem:[%s747 + $0x48] sm:$0xf]
      %v796 = vsel %vm750, %v535, %v795
      %797 = vst [vmem:[%s747 + $0x48] sm:$0xf] %v796
      %798 = vst.msk [vmem:[%s747 + $0x4c] sm:$0xf] %vm280, %v544
      %v799 = vld [vmem:[%s747 + $0x50] sm:$0x1]
      %v800 = vsel %vm756, %v545, %v799
      %801 = vst [vmem:[%s747 + $0x50] sm:$0x1] %v800
      %v802 = vld [vmem:[%s747 + $0x54] sm:$0xf]
      %v803 = vsel %vm750, %v552, %v802
      %804 = vst [vmem:[%s747 + $0x54] sm:$0xf] %v803
      %805 = vst.msk [vmem:[%s747 + $0x58] sm:$0xf] %vm280, %v561
      %v806 = vld [vmem:[%s747 + $0x5c] sm:$0x1]
      %v807 = vsel %vm756, %v562, %v806
      %808 = vst [vmem:[%s747 + $0x5c] sm:$0x1] %v807
      %v809 = vld [vmem:[%s747 + $0x60] sm:$0xf]
      %v810 = vsel %vm750, %v569, %v809
      %811 = vst [vmem:[%s747 + $0x60] sm:$0xf] %v810
      %812 = vst.msk [vmem:[%s747 + $0x64] sm:$0xf] %vm280, %v578
      %v813 = vld [vmem:[%s747 + $0x68] sm:$0x1]
      %v814 = vsel %vm756, %v579, %v813
      %815 = vst [vmem:[%s747 + $0x68] sm:$0x1] %v814
      %v816 = vld [vmem:[%s747 + $0x6c] sm:$0xf]
      %v817 = vsel %vm750, %v586, %v816
      %818 = vst [vmem:[%s747 + $0x6c] sm:$0xf] %v817
      %819 = vst.msk [vmem:[%s747 + $0x70] sm:$0xf] %vm280, %v595
      %v820 = vld [vmem:[%s747 + $0x74] sm:$0x1]
      %v821 = vsel %vm756, %v596, %v820
      %822 = vst [vmem:[%s747 + $0x74] sm:$0x1] %v821
      %v823 = vld [vmem:[%s747 + $0x78] sm:$0xf]
      %v824 = vsel %vm750, %v603, %v823
      %825 = vst [vmem:[%s747 + $0x78] sm:$0xf] %v824
      %826 = vst.msk [vmem:[%s747 + $0x7c] sm:$0xf] %vm280, %v612
      %v827 = vld [vmem:[%s747 + $0x80] sm:$0x1]
      %v828 = vsel %vm756, %v613, %v827
      %829 = vst [vmem:[%s747 + $0x80] sm:$0x1] %v828
      %v830 = vld [vmem:[%s747 + $0x84] sm:$0xf]
      %v831 = vsel %vm750, %v620, %v830
      %832 = vst [vmem:[%s747 + $0x84] sm:$0xf] %v831
      %833 = vst.msk [vmem:[%s747 + $0x88] sm:$0xf] %vm280, %v629
      %v834 = vld [vmem:[%s747 + $0x8c] sm:$0x1]
      %v835 = vsel %vm756, %v630, %v834
      %836 = vst [vmem:[%s747 + $0x8c] sm:$0x1] %v835
      %v837 = vld [vmem:[%s747 + $0x90] sm:$0xf]
      %v838 = vsel %vm750, %v637, %v837
      %839 = vst [vmem:[%s747 + $0x90] sm:$0xf] %v838
      %840 = vst.msk [vmem:[%s747 + $0x94] sm:$0xf] %vm280, %v646
      %v841 = vld [vmem:[%s747 + $0x98] sm:$0x1]
      %v842 = vsel %vm756, %v647, %v841
      %843 = vst [vmem:[%s747 + $0x98] sm:$0x1] %v842
      %v844 = vld [vmem:[%s747 + $0x9c] sm:$0xf]
      %v845 = vsel %vm750, %v654, %v844
      %846 = vst [vmem:[%s747 + $0x9c] sm:$0xf] %v845
      %847 = vst.msk [vmem:[%s747 + $0xa0] sm:$0xf] %vm280, %v663
      %v848 = vld [vmem:[%s747 + $0xa4] sm:$0x1]
      %v849 = vsel %vm756, %v664, %v848
      %850 = vst [vmem:[%s747 + $0xa4] sm:$0x1] %v849
      %v851 = vld [vmem:[%s747 + $0xa8] sm:$0xf]
      %v852 = vsel %vm750, %v671, %v851
      %853 = vst [vmem:[%s747 + $0xa8] sm:$0xf] %v852
      %854 = vst.msk [vmem:[%s747 + $0xac] sm:$0xf] %vm280, %v680
      %v855 = vld [vmem:[%s747 + $0xb0] sm:$0x1]
      %v856 = vsel %vm756, %v681, %v855
      %857 = vst [vmem:[%s747 + $0xb0] sm:$0x1] %v856
      %v858 = vld [vmem:[%s747 + $0xb4] sm:$0xf]
      %v859 = vsel %vm750, %v688, %v858
      %860 = vst [vmem:[%s747 + $0xb4] sm:$0xf] %v859
      %861 = vst.msk [vmem:[%s747 + $0xb8] sm:$0xf] %vm280, %v697
      %v862 = vld [vmem:[%s747 + $0xbc] sm:$0x1]
      %v863 = vsel %vm756, %v698, %v862
      %864 = vst [vmem:[%s747 + $0xbc] sm:$0x1] %v863
      %v865 = vld [vmem:[#allocation2] sm:$0xf]
      %v866 = vld [vmem:[#allocation2 + $0x4] sm:$0xf]
      %v867 = vld [vmem:[#allocation2 + $0x8] sm:$0x1]
      %v868 = vld [vmem:[#allocation2 + $0xc] sm:$0xf]
      %v869 = vld [vmem:[#allocation2 + $0x10] sm:$0xf]
      %v870 = vld [vmem:[#allocation2 + $0x14] sm:$0x1]
      %v871 = vld [vmem:[#allocation2 + $0x18] sm:$0xf]
      %v872 = vld [vmem:[#allocation2 + $0x1c] sm:$0xf]
      %v873 = vld [vmem:[#allocation2 + $0x20] sm:$0x1]
      %v874 = vld [vmem:[#allocation2 + $0x24] sm:$0xf]
      %v875 = vld [vmem:[#allocation2 + $0x28] sm:$0xf]
      %v876 = vld [vmem:[#allocation2 + $0x2c] sm:$0x1]
      %v877 = vld [vmem:[#allocation2 + $0x30] sm:$0xf]
      %v878 = vld [vmem:[#allocation2 + $0x34] sm:$0xf]
      %v879 = vld [vmem:[#allocation2 + $0x38] sm:$0x1]
      %v880 = vld [vmem:[#allocation2 + $0x3c] sm:$0xf]
      %v881 = vld [vmem:[#allocation2 + $0x40] sm:$0xf]
      %v882 = vld [vmem:[#allocation2 + $0x44] sm:$0x1]
      %v883 = vld [vmem:[#allocation2 + $0x48] sm:$0xf]
      %v884 = vld [vmem:[#allocation2 + $0x4c] sm:$0xf]
      %v885 = vld [vmem:[#allocation2 + $0x50] sm:$0x1]
      %v886 = vld [vmem:[#allocation2 + $0x54] sm:$0xf]
      %v887 = vld [vmem:[#allocation2 + $0x58] sm:$0xf]
      %v888 = vld [vmem:[#allocation2 + $0x5c] sm:$0x1]
      %v889 = vld [vmem:[#allocation2 + $0x60] sm:$0xf]
      %v890 = vld [vmem:[#allocation2 + $0x64] sm:$0xf]
      %v891 = vld [vmem:[#allocation2 + $0x68] sm:$0x1]
      %v892 = vld [vmem:[#allocation2 + $0x6c] sm:$0xf]
      %v893 = vld [vmem:[#allocation2 + $0x70] sm:$0xf]
      %v894 = vld [vmem:[#allocation2 + $0x74] sm:$0x1]
      %v895 = vld [vmem:[#allocation2 + $0x78] sm:$0xf]
      %v896 = vld [vmem:[#allocation2 + $0x7c] sm:$0xf]
      %v897 = vld [vmem:[#allocation2 + $0x80] sm:$0x1]
      %v898 = vld [vmem:[#allocation2 + $0x84] sm:$0xf]
      %v899 = vld [vmem:[#allocation2 + $0x88] sm:$0xf]
      %v900 = vld [vmem:[#allocation2 + $0x8c] sm:$0x1]
      %v901 = vld [vmem:[#allocation2 + $0x90] sm:$0xf]
      %v902 = vld [vmem:[#allocation2 + $0x94] sm:$0xf]
      %v903 = vld [vmem:[#allocation2 + $0x98] sm:$0x1]
      %v904 = vld [vmem:[#allocation2 + $0x9c] sm:$0xf]
      %v905 = vld [vmem:[#allocation2 + $0xa0] sm:$0xf]
      %v906 = vld [vmem:[#allocation2 + $0xa4] sm:$0x1]
      %v907 = vld [vmem:[#allocation2 + $0xa8] sm:$0xf]
      %v908 = vld [vmem:[#allocation2 + $0xac] sm:$0xf]
      %v909 = vld [vmem:[#allocation2 + $0xb0] sm:$0x1]
      %v910 = vld [vmem:[#allocation2 + $0xb4] sm:$0xf]
      %v911 = vld [vmem:[#allocation2 + $0xb8] sm:$0xf]
      %v912 = vld [vmem:[#allocation2 + $0xbc] sm:$0x1]
      %v913 = vld [vmem:[%s747] sm:$0xf]
      %v914 = vld [vmem:[%s747 + $0x4] sm:$0xf]
      %v915 = vld [vmem:[%s747 + $0x8] sm:$0x1]
      %v916 = vld [vmem:[%s747 + $0xc] sm:$0xf]
      %v917 = vld [vmem:[%s747 + $0x10] sm:$0xf]
      %v918 = vld [vmem:[%s747 + $0x14] sm:$0x1]
      %v919 = vld [vmem:[%s747 + $0x18] sm:$0xf]
      %v920 = vld [vmem:[%s747 + $0x1c] sm:$0xf]
      %v921 = vld [vmem:[%s747 + $0x20] sm:$0x1]
      %v922 = vld [vmem:[%s747 + $0x24] sm:$0xf]
      %v923 = vld [vmem:[%s747 + $0x28] sm:$0xf]
      %v924 = vld [vmem:[%s747 + $0x2c] sm:$0x1]
      %v925 = vld [vmem:[%s747 + $0x30] sm:$0xf]
      %v926 = vld [vmem:[%s747 + $0x34] sm:$0xf]
      %v927 = vld [vmem:[%s747 + $0x38] sm:$0x1]
      %v928 = vld [vmem:[%s747 + $0x3c] sm:$0xf]
      %v929 = vld [vmem:[%s747 + $0x40] sm:$0xf]
      %v930 = vld [vmem:[%s747 + $0x44] sm:$0x1]
      %v931 = vld [vmem:[%s747 + $0x48] sm:$0xf]
      %v932 = vld [vmem:[%s747 + $0x4c] sm:$0xf]
      %v933 = vld [vmem:[%s747 + $0x50] sm:$0x1]
      %v934 = vld [vmem:[%s747 + $0x54] sm:$0xf]
      %v935 = vld [vmem:[%s747 + $0x58] sm:$0xf]
      %v936 = vld [vmem:[%s747 + $0x5c] sm:$0x1]
      %v937 = vld [vmem:[%s747 + $0x60] sm:$0xf]
      %v938 = vld [vmem:[%s747 + $0x64] sm:$0xf]
      %v939 = vld [vmem:[%s747 + $0x68] sm:$0x1]
      %v940 = vld [vmem:[%s747 + $0x6c] sm:$0xf]
      %v941 = vld [vmem:[%s747 + $0x70] sm:$0xf]
      %v942 = vld [vmem:[%s747 + $0x74] sm:$0x1]
      %v943 = vld [vmem:[%s747 + $0x78] sm:$0xf]
      %v944 = vld [vmem:[%s747 + $0x7c] sm:$0xf]
      %v945 = vld [vmem:[%s747 + $0x80] sm:$0x1]
      %v946 = vld [vmem:[%s747 + $0x84] sm:$0xf]
      %v947 = vld [vmem:[%s747 + $0x88] sm:$0xf]
      %v948 = vld [vmem:[%s747 + $0x8c] sm:$0x1]
      %v949 = vld [vmem:[%s747 + $0x90] sm:$0xf]
      %v950 = vld [vmem:[%s747 + $0x94] sm:$0xf]
      %v951 = vld [vmem:[%s747 + $0x98] sm:$0x1]
      %v952 = vld [vmem:[%s747 + $0x9c] sm:$0xf]
      %v953 = vld [vmem:[%s747 + $0xa0] sm:$0xf]
      %v954 = vld [vmem:[%s747 + $0xa4] sm:$0x1]
      %v955 = vld [vmem:[%s747 + $0xa8] sm:$0xf]
      %v956 = vld [vmem:[%s747 + $0xac] sm:$0xf]
      %v957 = vld [vmem:[%s747 + $0xb0] sm:$0x1]
      %v958 = vld [vmem:[%s747 + $0xb4] sm:$0xf]
      %v959 = vld [vmem:[%s747 + $0xb8] sm:$0xf]
      %v960 = vld [vmem:[%s747 + $0xbc] sm:$0x1]
      %s961 = scalar_lea.vmem [#allocation2], 24
      %v962 = vld [vmem:[%s961] sm:$0xf]
      %v963 = vld [vmem:[%s961 + $0x4] sm:$0xf]
      %v964 = vld [vmem:[%s961 + $0x8] sm:$0x1]
      %v965 = vld [vmem:[%s961 + $0xc] sm:$0xf]
      %v966 = vld [vmem:[%s961 + $0x10] sm:$0xf]
      %v967 = vld [vmem:[%s961 + $0x14] sm:$0x1]
      %v968 = vld [vmem:[%s961 + $0x18] sm:$0xf]
      %v969 = vld [vmem:[%s961 + $0x1c] sm:$0xf]
      %v970 = vld [vmem:[%s961 + $0x20] sm:$0x1]
      %v971 = vld [vmem:[%s961 + $0x24] sm:$0xf]
      %v972 = vld [vmem:[%s961 + $0x28] sm:$0xf]
      %v973 = vld [vmem:[%s961 + $0x2c] sm:$0x1]
      %v974 = vld [vmem:[%s961 + $0x30] sm:$0xf]
      %v975 = vld [vmem:[%s961 + $0x34] sm:$0xf]
      %v976 = vld [vmem:[%s961 + $0x38] sm:$0x1]
      %v977 = vld [vmem:[%s961 + $0x3c] sm:$0xf]
      %v978 = vld [vmem:[%s961 + $0x40] sm:$0xf]
      %v979 = vld [vmem:[%s961 + $0x44] sm:$0x1]
      %v980 = vld [vmem:[%s961 + $0x48] sm:$0xf]
      %v981 = vld [vmem:[%s961 + $0x4c] sm:$0xf]
      %v982 = vld [vmem:[%s961 + $0x50] sm:$0x1]
      %v983 = vld [vmem:[%s961 + $0x54] sm:$0xf]
      %v984 = vld [vmem:[%s961 + $0x58] sm:$0xf]
      %v985 = vld [vmem:[%s961 + $0x5c] sm:$0x1]
      %v986 = vld [vmem:[%s961 + $0x60] sm:$0xf]
      %v987 = vld [vmem:[%s961 + $0x64] sm:$0xf]
      %v988 = vld [vmem:[%s961 + $0x68] sm:$0x1]
      %v989 = vld [vmem:[%s961 + $0x6c] sm:$0xf]
      %v990 = vld [vmem:[%s961 + $0x70] sm:$0xf]
      %v991 = vld [vmem:[%s961 + $0x74] sm:$0x1]
      %v992 = vld [vmem:[%s961 + $0x78] sm:$0xf]
      %v993 = vld [vmem:[%s961 + $0x7c] sm:$0xf]
      %v994 = vld [vmem:[%s961 + $0x80] sm:$0x1]
      %v995 = vld [vmem:[%s961 + $0x84] sm:$0xf]
      %v996 = vld [vmem:[%s961 + $0x88] sm:$0xf]
      %v997 = vld [vmem:[%s961 + $0x8c] sm:$0x1]
      %v998 = vld [vmem:[%s961 + $0x90] sm:$0xf]
      %v999 = vld [vmem:[%s961 + $0x94] sm:$0xf]
      %v1000 = vld [vmem:[%s961 + $0x98] sm:$0x1]
      %v1001 = vld [vmem:[%s961 + $0x9c] sm:$0xf]
      %v1002 = vld [vmem:[%s961 + $0xa0] sm:$0xf]
      %v1003 = vld [vmem:[%s961 + $0xa4] sm:$0x1]
      %v1004 = vld [vmem:[%s961 + $0xa8] sm:$0xf]
      %v1005 = vld [vmem:[%s961 + $0xac] sm:$0xf]
      %v1006 = vld [vmem:[%s961 + $0xb0] sm:$0x1]
      %v1007 = vld [vmem:[%s961 + $0xb4] sm:$0xf]
      %v1008 = vld [vmem:[%s961 + $0xb8] sm:$0xf]
      %v1009 = vld [vmem:[%s961 + $0xbc] sm:$0x1]
      %v1058 = vunpack.c.l.b16 %v865
      %v1059 = vunpack.c.l.b16 %v866
      %v1060 = vunpack.c.l.b16 %v867
      %v1061 = vunpack.c.l.b16 %v868
      %v1062 = vunpack.c.l.b16 %v869
      %v1063 = vunpack.c.l.b16 %v870
      %v1064 = vunpack.c.l.b16 %v871
      %v1065 = vunpack.c.l.b16 %v872
      %v1066 = vunpack.c.l.b16 %v873
      %v1067 = vunpack.c.l.b16 %v874
      %v1068 = vunpack.c.l.b16 %v875
      %v1069 = vunpack.c.l.b16 %v876
      %v1070 = vunpack.c.l.b16 %v877
      %v1071 = vunpack.c.l.b16 %v878
      %v1072 = vunpack.c.l.b16 %v879
      %v1073 = vunpack.c.l.b16 %v880
      %v1074 = vunpack.c.l.b16 %v881
      %v1075 = vunpack.c.l.b16 %v882
      %v1076 = vunpack.c.l.b16 %v883
      %v1077 = vunpack.c.l.b16 %v884
      %v1078 = vunpack.c.l.b16 %v885
      %v1079 = vunpack.c.l.b16 %v886
      %v1080 = vunpack.c.l.b16 %v887
      %v1081 = vunpack.c.l.b16 %v888
      %v1082 = vunpack.c.l.b16 %v889
      %v1083 = vunpack.c.l.b16 %v890
      %v1084 = vunpack.c.l.b16 %v891
      %v1085 = vunpack.c.l.b16 %v892
      %v1086 = vunpack.c.l.b16 %v893
      %v1087 = vunpack.c.l.b16 %v894
      %v1088 = vunpack.c.l.b16 %v895
      %v1089 = vunpack.c.l.b16 %v896
      %v1090 = vunpack.c.l.b16 %v897
      %v1091 = vunpack.c.l.b16 %v898
      %v1092 = vunpack.c.l.b16 %v899
      %v1093 = vunpack.c.l.b16 %v900
      %v1094 = vunpack.c.l.b16 %v901
      %v1095 = vunpack.c.l.b16 %v902
      %v1096 = vunpack.c.l.b16 %v903
      %v1097 = vunpack.c.l.b16 %v904
      %v1098 = vunpack.c.l.b16 %v905
      %v1099 = vunpack.c.l.b16 %v906
      %v1100 = vunpack.c.l.b16 %v907
      %v1101 = vunpack.c.l.b16 %v908
      %v1102 = vunpack.c.l.b16 %v909
      %v1103 = vunpack.c.l.b16 %v910
      %v1104 = vunpack.c.l.b16 %v911
      %v1105 = vunpack.c.l.b16 %v912
      %v1106 = vpack.c.b16 %v1059, %v1058
      %v1107 = vpack.c.b16 %v1060, %v1060
      %v1108 = vpack.c.b16 %v1062, %v1061
      %v1109 = vpack.c.b16 %v1063, %v1063
      %v1110 = vpack.c.b16 %v1065, %v1064
      %v1111 = vpack.c.b16 %v1066, %v1066
      %v1112 = vpack.c.b16 %v1068, %v1067
      %v1113 = vpack.c.b16 %v1069, %v1069
      %v1114 = vpack.c.b16 %v1071, %v1070
      %v1115 = vpack.c.b16 %v1072, %v1072
      %v1116 = vpack.c.b16 %v1074, %v1073
      %v1117 = vpack.c.b16 %v1075, %v1075
      %v1118 = vpack.c.b16 %v1077, %v1076
      %v1119 = vpack.c.b16 %v1078, %v1078
      %v1120 = vpack.c.b16 %v1080, %v1079
      %v1121 = vpack.c.b16 %v1081, %v1081
      %v1122 = vpack.c.b16 %v1083, %v1082
      %v1123 = vpack.c.b16 %v1084, %v1084
      %v1124 = vpack.c.b16 %v1086, %v1085
      %v1125 = vpack.c.b16 %v1087, %v1087
      %v1126 = vpack.c.b16 %v1089, %v1088
      %v1127 = vpack.c.b16 %v1090, %v1090
      %v1128 = vpack.c.b16 %v1092, %v1091
      %v1129 = vpack.c.b16 %v1093, %v1093
      %v1130 = vpack.c.b16 %v1095, %v1094
      %v1131 = vpack.c.b16 %v1096, %v1096
      %v1132 = vpack.c.b16 %v1098, %v1097
      %v1133 = vpack.c.b16 %v1099, %v1099
      %v1134 = vpack.c.b16 %v1101, %v1100
      %v1135 = vpack.c.b16 %v1102, %v1102
      %v1136 = vpack.c.b16 %v1104, %v1103
      %v1137 = vpack.c.b16 %v1105, %v1105
      %v1186 = vunpack.c.l.b16 %v913
      %v1187 = vunpack.c.l.b16 %v914
      %v1188 = vunpack.c.l.b16 %v915
      %v1189 = vunpack.c.l.b16 %v916
      %v1190 = vunpack.c.l.b16 %v917
      %v1191 = vunpack.c.l.b16 %v918
      %v1192 = vunpack.c.l.b16 %v919
      %v1193 = vunpack.c.l.b16 %v920
      %v1194 = vunpack.c.l.b16 %v921
      %v1195 = vunpack.c.l.b16 %v922
      %v1196 = vunpack.c.l.b16 %v923
      %v1197 = vunpack.c.l.b16 %v924
      %v1198 = vunpack.c.l.b16 %v925
      %v1199 = vunpack.c.l.b16 %v926
      %v1200 = vunpack.c.l.b16 %v927
      %v1201 = vunpack.c.l.b16 %v928
      %v1202 = vunpack.c.l.b16 %v929
      %v1203 = vunpack.c.l.b16 %v930
      %v1204 = vunpack.c.l.b16 %v931
      %v1205 = vunpack.c.l.b16 %v932
      %v1206 = vunpack.c.l.b16 %v933
      %v1207 = vunpack.c.l.b16 %v934
      %v1208 = vunpack.c.l.b16 %v935
      %v1209 = vunpack.c.l.b16 %v936
      %v1210 = vunpack.c.l.b16 %v937
      %v1211 = vunpack.c.l.b16 %v938
      %v1212 = vunpack.c.l.b16 %v939
      %v1213 = vunpack.c.l.b16 %v940
      %v1214 = vunpack.c.l.b16 %v941
      %v1215 = vunpack.c.l.b16 %v942
      %v1216 = vunpack.c.l.b16 %v943
      %v1217 = vunpack.c.l.b16 %v944
      %v1218 = vunpack.c.l.b16 %v945
      %v1219 = vunpack.c.l.b16 %v946
      %v1220 = vunpack.c.l.b16 %v947
      %v1221 = vunpack.c.l.b16 %v948
      %v1222 = vunpack.c.l.b16 %v949
      %v1223 = vunpack.c.l.b16 %v950
      %v1224 = vunpack.c.l.b16 %v951
      %v1225 = vunpack.c.l.b16 %v952
      %v1226 = vunpack.c.l.b16 %v953
      %v1227 = vunpack.c.l.b16 %v954
      %v1228 = vunpack.c.l.b16 %v955
      %v1229 = vunpack.c.l.b16 %v956
      %v1230 = vunpack.c.l.b16 %v957
      %v1231 = vunpack.c.l.b16 %v958
      %v1232 = vunpack.c.l.b16 %v959
      %v1233 = vunpack.c.l.b16 %v960
      %v1234 = vpack.c.b16 %v1187, %v1186
      %v1235 = vpack.c.b16 %v1188, %v1188
      %v1236 = vpack.c.b16 %v1190, %v1189
      %v1237 = vpack.c.b16 %v1191, %v1191
      %v1238 = vpack.c.b16 %v1193, %v1192
      %v1239 = vpack.c.b16 %v1194, %v1194
      %v1240 = vpack.c.b16 %v1196, %v1195
      %v1241 = vpack.c.b16 %v1197, %v1197
      %v1242 = vpack.c.b16 %v1199, %v1198
      %v1243 = vpack.c.b16 %v1200, %v1200
      %v1244 = vpack.c.b16 %v1202, %v1201
      %v1245 = vpack.c.b16 %v1203, %v1203
      %v1246 = vpack.c.b16 %v1205, %v1204
      %v1247 = vpack.c.b16 %v1206, %v1206
      %v1248 = vpack.c.b16 %v1208, %v1207
      %v1249 = vpack.c.b16 %v1209, %v1209
      %v1250 = vpack.c.b16 %v1211, %v1210
      %v1251 = vpack.c.b16 %v1212, %v1212
      %v1252 = vpack.c.b16 %v1214, %v1213
      %v1253 = vpack.c.b16 %v1215, %v1215
      %v1254 = vpack.c.b16 %v1217, %v1216
      %v1255 = vpack.c.b16 %v1218, %v1218
      %v1256 = vpack.c.b16 %v1220, %v1219
      %v1257 = vpack.c.b16 %v1221, %v1221
      %v1258 = vpack.c.b16 %v1223, %v1222
      %v1259 = vpack.c.b16 %v1224, %v1224
      %v1260 = vpack.c.b16 %v1226, %v1225
      %v1261 = vpack.c.b16 %v1227, %v1227
      %v1262 = vpack.c.b16 %v1229, %v1228
      %v1263 = vpack.c.b16 %v1230, %v1230
      %v1264 = vpack.c.b16 %v1232, %v1231
      %v1265 = vpack.c.b16 %v1233, %v1233
      %1266 = vrot.lane.b32.xlu0 %v1234, 4
      %v1267 = vpop.permute.xlu0 %1266
      %1268 = vrot.lane.b32.xlu0 %v1235, 4
      %v1269 = vpop.permute.xlu0 %1268
      %1270 = vrot.lane.b32.xlu0 %v1236, 4
      %v1271 = vpop.permute.xlu0 %1270
      %1272 = vrot.lane.b32.xlu0 %v1237, 4
      %v1273 = vpop.permute.xlu0 %1272
      %1274 = vrot.lane.b32.xlu0 %v1238, 4
      %v1275 = vpop.permute.xlu0 %1274
      %1276 = vrot.lane.b32.xlu0 %v1239, 4
      %v1277 = vpop.permute.xlu0 %1276
      %1278 = vrot.lane.b32.xlu0 %v1240, 4
      %v1279 = vpop.permute.xlu0 %1278
      %1280 = vrot.lane.b32.xlu0 %v1241, 4
      %v1281 = vpop.permute.xlu0 %1280
      %1282 = vrot.lane.b32.xlu0 %v1242, 4
      %v1283 = vpop.permute.xlu0 %1282
      %1284 = vrot.lane.b32.xlu0 %v1243, 4
      %v1285 = vpop.permute.xlu0 %1284
      %1286 = vrot.lane.b32.xlu0 %v1244, 4
      %v1287 = vpop.permute.xlu0 %1286
      %1288 = vrot.lane.b32.xlu0 %v1245, 4
      %v1289 = vpop.permute.xlu0 %1288
      %1290 = vrot.lane.b32.xlu0 %v1246, 4
      %v1291 = vpop.permute.xlu0 %1290
      %1292 = vrot.lane.b32.xlu0 %v1247, 4
      %v1293 = vpop.permute.xlu0 %1292
      %1294 = vrot.lane.b32.xlu0 %v1248, 4
      %v1295 = vpop.permute.xlu0 %1294
      %1296 = vrot.lane.b32.xlu0 %v1249, 4
      %v1297 = vpop.permute.xlu0 %1296
      %1298 = vrot.lane.b32.xlu0 %v1250, 4
      %v1299 = vpop.permute.xlu0 %1298
      %1300 = vrot.lane.b32.xlu0 %v1251, 4
      %v1301 = vpop.permute.xlu0 %1300
      %1302 = vrot.lane.b32.xlu0 %v1252, 4
      %v1303 = vpop.permute.xlu0 %1302
      %1304 = vrot.lane.b32.xlu0 %v1253, 4
      %v1305 = vpop.permute.xlu0 %1304
      %1306 = vrot.lane.b32.xlu0 %v1254, 4
      %v1307 = vpop.permute.xlu0 %1306
      %1308 = vrot.lane.b32.xlu0 %v1255, 4
      %v1309 = vpop.permute.xlu0 %1308
      %1310 = vrot.lane.b32.xlu0 %v1256, 4
      %v1311 = vpop.permute.xlu0 %1310
      %1312 = vrot.lane.b32.xlu0 %v1257, 4
      %v1313 = vpop.permute.xlu0 %1312
      %1314 = vrot.lane.b32.xlu0 %v1258, 4
      %v1315 = vpop.permute.xlu0 %1314
      %1316 = vrot.lane.b32.xlu0 %v1259, 4
      %v1317 = vpop.permute.xlu0 %1316
      %1318 = vrot.lane.b32.xlu0 %v1260, 4
      %v1319 = vpop.permute.xlu0 %1318
      %1320 = vrot.lane.b32.xlu0 %v1261, 4
      %v1321 = vpop.permute.xlu0 %1320
      %1322 = vrot.lane.b32.xlu0 %v1262, 4
      %v1323 = vpop.permute.xlu0 %1322
      %1324 = vrot.lane.b32.xlu0 %v1263, 4
      %v1325 = vpop.permute.xlu0 %1324
      %1326 = vrot.lane.b32.xlu0 %v1264, 4
      %v1327 = vpop.permute.xlu0 %1326
      %1328 = vrot.lane.b32.xlu0 %v1265, 4
      %v1329 = vpop.permute.xlu0 %1328
      %v1378 = vunpack.c.l.b16 %v962
      %v1379 = vunpack.c.l.b16 %v963
      %v1380 = vunpack.c.l.b16 %v964
      %v1381 = vunpack.c.l.b16 %v965
      %v1382 = vunpack.c.l.b16 %v966
      %v1383 = vunpack.c.l.b16 %v967
      %v1384 = vunpack.c.l.b16 %v968
      %v1385 = vunpack.c.l.b16 %v969
      %v1386 = vunpack.c.l.b16 %v970
      %v1387 = vunpack.c.l.b16 %v971
      %v1388 = vunpack.c.l.b16 %v972
      %v1389 = vunpack.c.l.b16 %v973
      %v1390 = vunpack.c.l.b16 %v974
      %v1391 = vunpack.c.l.b16 %v975
      %v1392 = vunpack.c.l.b16 %v976
      %v1393 = vunpack.c.l.b16 %v977
      %v1394 = vunpack.c.l.b16 %v978
      %v1395 = vunpack.c.l.b16 %v979
      %v1396 = vunpack.c.l.b16 %v980
      %v1397 = vunpack.c.l.b16 %v981
      %v1398 = vunpack.c.l.b16 %v982
      %v1399 = vunpack.c.l.b16 %v983
      %v1400 = vunpack.c.l.b16 %v984
      %v1401 = vunpack.c.l.b16 %v985
      %v1402 = vunpack.c.l.b16 %v986
      %v1403 = vunpack.c.l.b16 %v987
      %v1404 = vunpack.c.l.b16 %v988
      %v1405 = vunpack.c.l.b16 %v989
      %v1406 = vunpack.c.l.b16 %v990
      %v1407 = vunpack.c.l.b16 %v991
      %v1408 = vunpack.c.l.b16 %v992
      %v1409 = vunpack.c.l.b16 %v993
      %v1410 = vunpack.c.l.b16 %v994
      %v1411 = vunpack.c.l.b16 %v995
      %v1412 = vunpack.c.l.b16 %v996
      %v1413 = vunpack.c.l.b16 %v997
      %v1414 = vunpack.c.l.b16 %v998
      %v1415 = vunpack.c.l.b16 %v999
      %v1416 = vunpack.c.l.b16 %v1000
      %v1417 = vunpack.c.l.b16 %v1001
      %v1418 = vunpack.c.l.b16 %v1002
      %v1419 = vunpack.c.l.b16 %v1003
      %v1420 = vunpack.c.l.b16 %v1004
      %v1421 = vunpack.c.l.b16 %v1005
      %v1422 = vunpack.c.l.b16 %v1006
      %v1423 = vunpack.c.l.b16 %v1007
      %v1424 = vunpack.c.l.b16 %v1008
      %v1425 = vunpack.c.l.b16 %v1009
      %v1426 = vpack.c.b16 %v1379, %v1378
      %v1427 = vpack.c.b16 %v1380, %v1380
      %v1428 = vpack.c.b16 %v1382, %v1381
      %v1429 = vpack.c.b16 %v1383, %v1383
      %v1430 = vpack.c.b16 %v1385, %v1384
      %v1431 = vpack.c.b16 %v1386, %v1386
      %v1432 = vpack.c.b16 %v1388, %v1387
      %v1433 = vpack.c.b16 %v1389, %v1389
      %v1434 = vpack.c.b16 %v1391, %v1390
      %v1435 = vpack.c.b16 %v1392, %v1392
      %v1436 = vpack.c.b16 %v1394, %v1393
      %v1437 = vpack.c.b16 %v1395, %v1395
      %v1438 = vpack.c.b16 %v1397, %v1396
      %v1439 = vpack.c.b16 %v1398, %v1398
      %v1440 = vpack.c.b16 %v1400, %v1399
      %v1441 = vpack.c.b16 %v1401, %v1401
      %v1442 = vpack.c.b16 %v1403, %v1402
      %v1443 = vpack.c.b16 %v1404, %v1404
      %v1444 = vpack.c.b16 %v1406, %v1405
      %v1445 = vpack.c.b16 %v1407, %v1407
      %v1446 = vpack.c.b16 %v1409, %v1408
      %v1447 = vpack.c.b16 %v1410, %v1410
      %v1448 = vpack.c.b16 %v1412, %v1411
      %v1449 = vpack.c.b16 %v1413, %v1413
      %v1450 = vpack.c.b16 %v1415, %v1414
      %v1451 = vpack.c.b16 %v1416, %v1416
      %v1452 = vpack.c.b16 %v1418, %v1417
      %v1453 = vpack.c.b16 %v1419, %v1419
      %v1454 = vpack.c.b16 %v1421, %v1420
      %v1455 = vpack.c.b16 %v1422, %v1422
      %v1456 = vpack.c.b16 %v1424, %v1423
      %v1457 = vpack.c.b16 %v1425, %v1425
      %1458 = vrot.lane.b32.xlu0 %v1426, 8
      %v1459 = vpop.permute.xlu0 %1458
      %1460 = vrot.lane.b32.xlu0 %v1427, 8
      %v1461 = vpop.permute.xlu0 %1460
      %1462 = vrot.lane.b32.xlu0 %v1428, 8
      %v1463 = vpop.permute.xlu0 %1462
      %1464 = vrot.lane.b32.xlu0 %v1429, 8
      %v1465 = vpop.permute.xlu0 %1464
      %1466 = vrot.lane.b32.xlu0 %v1430, 8
      %v1467 = vpop.permute.xlu0 %1466
      %1468 = vrot.lane.b32.xlu0 %v1431, 8
      %v1469 = vpop.permute.xlu0 %1468
      %1470 = vrot.lane.b32.xlu0 %v1432, 8
      %v1471 = vpop.permute.xlu0 %1470
      %1472 = vrot.lane.b32.xlu0 %v1433, 8
      %v1473 = vpop.permute.xlu0 %1472
      %1474 = vrot.lane.b32.xlu0 %v1434, 8
      %v1475 = vpop.permute.xlu0 %1474
      %1476 = vrot.lane.b32.xlu0 %v1435, 8
      %v1477 = vpop.permute.xlu0 %1476
      %1478 = vrot.lane.b32.xlu0 %v1436, 8
      %v1479 = vpop.permute.xlu0 %1478
      %1480 = vrot.lane.b32.xlu0 %v1437, 8
      %v1481 = vpop.permute.xlu0 %1480
      %1482 = vrot.lane.b32.xlu0 %v1438, 8
      %v1483 = vpop.permute.xlu0 %1482
      %1484 = vrot.lane.b32.xlu0 %v1439, 8
      %v1485 = vpop.permute.xlu0 %1484
      %1486 = vrot.lane.b32.xlu0 %v1440, 8
      %v1487 = vpop.permute.xlu0 %1486
      %1488 = vrot.lane.b32.xlu0 %v1441, 8
      %v1489 = vpop.permute.xlu0 %1488
      %1490 = vrot.lane.b32.xlu0 %v1442, 8
      %v1491 = vpop.permute.xlu0 %1490
      %1492 = vrot.lane.b32.xlu0 %v1443, 8
      %v1493 = vpop.permute.xlu0 %1492
      %1494 = vrot.lane.b32.xlu0 %v1444, 8
      %v1495 = vpop.permute.xlu0 %1494
      %1496 = vrot.lane.b32.xlu0 %v1445, 8
      %v1497 = vpop.permute.xlu0 %1496
      %1498 = vrot.lane.b32.xlu0 %v1446, 8
      %v1499 = vpop.permute.xlu0 %1498
      %1500 = vrot.lane.b32.xlu0 %v1447, 8
      %v1501 = vpop.permute.xlu0 %1500
      %1502 = vrot.lane.b32.xlu0 %v1448, 8
      %v1503 = vpop.permute.xlu0 %1502
      %1504 = vrot.lane.b32.xlu0 %v1449, 8
      %v1505 = vpop.permute.xlu0 %1504
      %1506 = vrot.lane.b32.xlu0 %v1450, 8
      %v1507 = vpop.permute.xlu0 %1506
      %1508 = vrot.lane.b32.xlu0 %v1451, 8
      %v1509 = vpop.permute.xlu0 %1508
      %1510 = vrot.lane.b32.xlu0 %v1452, 8
      %v1511 = vpop.permute.xlu0 %1510
      %1512 = vrot.lane.b32.xlu0 %v1453, 8
      %v1513 = vpop.permute.xlu0 %1512
      %1514 = vrot.lane.b32.xlu0 %v1454, 8
      %v1515 = vpop.permute.xlu0 %1514
      %1516 = vrot.lane.b32.xlu0 %v1455, 8
      %v1517 = vpop.permute.xlu0 %1516
      %1518 = vrot.lane.b32.xlu0 %v1456, 8
      %v1519 = vpop.permute.xlu0 %1518
      %1520 = vrot.lane.b32.xlu0 %v1457, 8
      %v1521 = vpop.permute.xlu0 %1520
      %vm1522 = vcmask 31744
      %v1525 = vsel %vm1522, %v1106, %v1267
      %v1528 = vsel %vm1522, %v1107, %v1269
      %v1531 = vsel %vm1522, %v1108, %v1271
      %v1534 = vsel %vm1522, %v1109, %v1273
      %v1537 = vsel %vm1522, %v1110, %v1275
      %v1540 = vsel %vm1522, %v1111, %v1277
      %v1543 = vsel %vm1522, %v1112, %v1279
      %v1546 = vsel %vm1522, %v1113, %v1281
      %v1549 = vsel %vm1522, %v1114, %v1283
      %v1552 = vsel %vm1522, %v1115, %v1285
      %v1555 = vsel %vm1522, %v1116, %v1287
      %v1558 = vsel %vm1522, %v1117, %v1289
      %v1561 = vsel %vm1522, %v1118, %v1291
      %v1564 = vsel %vm1522, %v1119, %v1293
      %v1567 = vsel %vm1522, %v1120, %v1295
      %v1570 = vsel %vm1522, %v1121, %v1297
      %v1573 = vsel %vm1522, %v1122, %v1299
      %v1576 = vsel %vm1522, %v1123, %v1301
      %v1579 = vsel %vm1522, %v1124, %v1303
      %v1582 = vsel %vm1522, %v1125, %v1305
      %v1585 = vsel %vm1522, %v1126, %v1307
      %v1588 = vsel %vm1522, %v1127, %v1309
      %v1591 = vsel %vm1522, %v1128, %v1311
      %v1594 = vsel %vm1522, %v1129, %v1313
      %v1597 = vsel %vm1522, %v1130, %v1315
      %v1600 = vsel %vm1522, %v1131, %v1317
      %v1603 = vsel %vm1522, %v1132, %v1319
      %v1606 = vsel %vm1522, %v1133, %v1321
      %v1609 = vsel %vm1522, %v1134, %v1323
      %v1612 = vsel %vm1522, %v1135, %v1325
      %v1615 = vsel %vm1522, %v1136, %v1327
      %v1618 = vsel %vm1522, %v1137, %v1329
      %vm1619 = vcmask 64512
      %v1621 = vsel %vm1619, %v1525, %v1459
      %v1623 = vsel %vm1619, %v1528, %v1461
      %v1625 = vsel %vm1619, %v1531, %v1463
      %v1627 = vsel %vm1619, %v1534, %v1465
      %v1629 = vsel %vm1619, %v1537, %v1467
      %v1631 = vsel %vm1619, %v1540, %v1469
      %v1633 = vsel %vm1619, %v1543, %v1471
      %v1635 = vsel %vm1619, %v1546, %v1473
      %v1637 = vsel %vm1619, %v1549, %v1475
      %v1639 = vsel %vm1619, %v1552, %v1477
      %v1641 = vsel %vm1619, %v1555, %v1479
      %v1643 = vsel %vm1619, %v1558, %v1481
      %v1645 = vsel %vm1619, %v1561, %v1483
      %v1647 = vsel %vm1619, %v1564, %v1485
      %v1649 = vsel %vm1619, %v1567, %v1487
      %v1651 = vsel %vm1619, %v1570, %v1489
      %v1653 = vsel %vm1619, %v1573, %v1491
      %v1655 = vsel %vm1619, %v1576, %v1493
      %v1657 = vsel %vm1619, %v1579, %v1495
      %v1659 = vsel %vm1619, %v1582, %v1497
      %v1661 = vsel %vm1619, %v1585, %v1499
      %v1663 = vsel %vm1619, %v1588, %v1501
      %v1665 = vsel %vm1619, %v1591, %v1503
      %v1667 = vsel %vm1619, %v1594, %v1505
      %v1669 = vsel %vm1619, %v1597, %v1507
      %v1671 = vsel %vm1619, %v1600, %v1509
      %v1673 = vsel %vm1619, %v1603, %v1511
      %v1675 = vsel %vm1619, %v1606, %v1513
      %v1677 = vsel %vm1619, %v1609, %v1515
      %v1679 = vsel %vm1619, %v1612, %v1517
      %v1681 = vsel %vm1619, %v1615, %v1519
      %v1683 = vsel %vm1619, %v1618, %v1521
      %vm1684 = vsmask.f32 7424
      %v1685 = vshrl.u32 %v1621, 16
      %v1687 = vshll.u32 %v1621, 16
      %v1689 = vrot.slane %v1687, 1
      %v1690 = vor.u32 %v1685, %v1689
      %v1691 = vshll.u32 %v1623, 16
      %v1693 = vrot.slane %v1691, 1
      %v1694 = vsel %vm1684, %v1690, %v1693
      %v1695 = vshrl.u32 %v1625, 16
      %v1697 = vshll.u32 %v1625, 16
      %v1699 = vrot.slane %v1697, 1
      %v1700 = vor.u32 %v1695, %v1699
      %v1701 = vshll.u32 %v1627, 16
      %v1703 = vrot.slane %v1701, 1
      %v1704 = vsel %vm1684, %v1700, %v1703
      %v1705 = vshrl.u32 %v1629, 16
      %v1707 = vshll.u32 %v1629, 16
      %v1709 = vrot.slane %v1707, 1
      %v1710 = vor.u32 %v1705, %v1709
      %v1711 = vshll.u32 %v1631, 16
      %v1713 = vrot.slane %v1711, 1
      %v1714 = vsel %vm1684, %v1710, %v1713
      %v1715 = vshrl.u32 %v1633, 16
      %v1717 = vshll.u32 %v1633, 16
      %v1719 = vrot.slane %v1717, 1
      %v1720 = vor.u32 %v1715, %v1719
      %v1721 = vshll.u32 %v1635, 16
      %v1723 = vrot.slane %v1721, 1
      %v1724 = vsel %vm1684, %v1720, %v1723
      %v1725 = vshrl.u32 %v1637, 16
      %v1727 = vshll.u32 %v1637, 16
      %v1729 = vrot.slane %v1727, 1
      %v1730 = vor.u32 %v1725, %v1729
      %v1731 = vshll.u32 %v1639, 16
      %v1733 = vrot.slane %v1731, 1
      %v1734 = vsel %vm1684, %v1730, %v1733
      %v1735 = vshrl.u32 %v1641, 16
      %v1737 = vshll.u32 %v1641, 16
      %v1739 = vrot.slane %v1737, 1
      %v1740 = vor.u32 %v1735, %v1739
      %v1741 = vshll.u32 %v1643, 16
      %v1743 = vrot.slane %v1741, 1
      %v1744 = vsel %vm1684, %v1740, %v1743
      %v1745 = vshrl.u32 %v1645, 16
      %v1747 = vshll.u32 %v1645, 16
      %v1749 = vrot.slane %v1747, 1
      %v1750 = vor.u32 %v1745, %v1749
      %v1751 = vshll.u32 %v1647, 16
      %v1753 = vrot.slane %v1751, 1
      %v1754 = vsel %vm1684, %v1750, %v1753
      %v1755 = vshrl.u32 %v1649, 16
      %v1757 = vshll.u32 %v1649, 16
      %v1759 = vrot.slane %v1757, 1
      %v1760 = vor.u32 %v1755, %v1759
      %v1761 = vshll.u32 %v1651, 16
      %v1763 = vrot.slane %v1761, 1
      %v1764 = vsel %vm1684, %v1760, %v1763
      %v1765 = vshrl.u32 %v1653, 16
      %v1767 = vshll.u32 %v1653, 16
      %v1769 = vrot.slane %v1767, 1
      %v1770 = vor.u32 %v1765, %v1769
      %v1771 = vshll.u32 %v1655, 16
      %v1773 = vrot.slane %v1771, 1
      %v1774 = vsel %vm1684, %v1770, %v1773
      %v1775 = vshrl.u32 %v1657, 16
      %v1777 = vshll.u32 %v1657, 16
      %v1779 = vrot.slane %v1777, 1
      %v1780 = vor.u32 %v1775, %v1779
      %v1781 = vshll.u32 %v1659, 16
      %v1783 = vrot.slane %v1781, 1
      %v1784 = vsel %vm1684, %v1780, %v1783
      %v1785 = vshrl.u32 %v1661, 16
      %v1787 = vshll.u32 %v1661, 16
      %v1789 = vrot.slane %v1787, 1
      %v1790 = vor.u32 %v1785, %v1789
      %v1791 = vshll.u32 %v1663, 16
      %v1793 = vrot.slane %v1791, 1
      %v1794 = vsel %vm1684, %v1790, %v1793
      %v1795 = vshrl.u32 %v1665, 16
      %v1797 = vshll.u32 %v1665, 16
      %v1799 = vrot.slane %v1797, 1
      %v1800 = vor.u32 %v1795, %v1799
      %v1801 = vshll.u32 %v1667, 16
      %v1803 = vrot.slane %v1801, 1
      %v1804 = vsel %vm1684, %v1800, %v1803
      %v1805 = vshrl.u32 %v1669, 16
      %v1807 = vshll.u32 %v1669, 16
      %v1809 = vrot.slane %v1807, 1
      %v1810 = vor.u32 %v1805, %v1809
      %v1811 = vshll.u32 %v1671, 16
      %v1813 = vrot.slane %v1811, 1
      %v1814 = vsel %vm1684, %v1810, %v1813
      %v1815 = vshrl.u32 %v1673, 16
      %v1817 = vshll.u32 %v1673, 16
      %v1819 = vrot.slane %v1817, 1
      %v1820 = vor.u32 %v1815, %v1819
      %v1821 = vshll.u32 %v1675, 16
      %v1823 = vrot.slane %v1821, 1
      %v1824 = vsel %vm1684, %v1820, %v1823
      %v1825 = vshrl.u32 %v1677, 16
      %v1827 = vshll.u32 %v1677, 16
      %v1829 = vrot.slane %v1827, 1
      %v1830 = vor.u32 %v1825, %v1829
      %v1831 = vshll.u32 %v1679, 16
      %v1833 = vrot.slane %v1831, 1
      %v1834 = vsel %vm1684, %v1830, %v1833
      %v1835 = vshrl.u32 %v1681, 16
      %v1837 = vshll.u32 %v1681, 16
      %v1839 = vrot.slane %v1837, 1
      %v1840 = vor.u32 %v1835, %v1839
      %v1841 = vshll.u32 %v1683, 16
      %v1843 = vrot.slane %v1841, 1
      %v1844 = vsel %vm1684, %v1840, %v1843
      %1845 = vrot.lane.b32.xlu0 %v1694, 12
      %v1846 = vpop.permute.xlu0 %1845
      %1847 = vrot.lane.b32.xlu0 %v1704, 12
      %v1848 = vpop.permute.xlu0 %1847
      %1849 = vrot.lane.b32.xlu0 %v1714, 12
      %v1850 = vpop.permute.xlu0 %1849
      %1851 = vrot.lane.b32.xlu0 %v1724, 12
      %v1852 = vpop.permute.xlu0 %1851
      %1853 = vrot.lane.b32.xlu0 %v1734, 12
      %v1854 = vpop.permute.xlu0 %1853
      %1855 = vrot.lane.b32.xlu0 %v1744, 12
      %v1856 = vpop.permute.xlu0 %1855
      %1857 = vrot.lane.b32.xlu0 %v1754, 12
      %v1858 = vpop.permute.xlu0 %1857
      %1859 = vrot.lane.b32.xlu0 %v1764, 12
      %v1860 = vpop.permute.xlu0 %1859
      %1861 = vrot.lane.b32.xlu0 %v1774, 12
      %v1862 = vpop.permute.xlu0 %1861
      %1863 = vrot.lane.b32.xlu0 %v1784, 12
      %v1864 = vpop.permute.xlu0 %1863
      %1865 = vrot.lane.b32.xlu0 %v1794, 12
      %v1866 = vpop.permute.xlu0 %1865
      %1867 = vrot.lane.b32.xlu0 %v1804, 12
      %v1868 = vpop.permute.xlu0 %1867
      %1869 = vrot.lane.b32.xlu0 %v1814, 12
      %v1870 = vpop.permute.xlu0 %1869
      %1871 = vrot.lane.b32.xlu0 %v1824, 12
      %v1872 = vpop.permute.xlu0 %1871
      %1873 = vrot.lane.b32.xlu0 %v1834, 12
      %v1874 = vpop.permute.xlu0 %1873
      %1875 = vrot.lane.b32.xlu0 %v1844, 12
      %v1876 = vpop.permute.xlu0 %1875
      %vm1909 = vcmask 1046528
      %v1910 = vrot.slane %v1621, 1
      %v1911 = vrot.slane %v1623, 1
      %v1912 = vsel %vm1909, %v1910, %v1911
      %v1913 = vrot.slane %v1625, 1
      %v1914 = vrot.slane %v1627, 1
      %v1915 = vsel %vm1909, %v1913, %v1914
      %v1916 = vrot.slane %v1629, 1
      %v1917 = vrot.slane %v1631, 1
      %v1918 = vsel %vm1909, %v1916, %v1917
      %v1919 = vrot.slane %v1633, 1
      %v1920 = vrot.slane %v1635, 1
      %v1921 = vsel %vm1909, %v1919, %v1920
      %v1922 = vrot.slane %v1637, 1
      %v1923 = vrot.slane %v1639, 1
      %v1924 = vsel %vm1909, %v1922, %v1923
      %v1925 = vrot.slane %v1641, 1
      %v1926 = vrot.slane %v1643, 1
      %v1927 = vsel %vm1909, %v1925, %v1926
      %v1928 = vrot.slane %v1645, 1
      %v1929 = vrot.slane %v1647, 1
      %v1930 = vsel %vm1909, %v1928, %v1929
      %v1931 = vrot.slane %v1649, 1
      %v1932 = vrot.slane %v1651, 1
      %v1933 = vsel %vm1909, %v1931, %v1932
      %v1934 = vrot.slane %v1653, 1
      %v1935 = vrot.slane %v1655, 1
      %v1936 = vsel %vm1909, %v1934, %v1935
      %v1937 = vrot.slane %v1657, 1
      %v1938 = vrot.slane %v1659, 1
      %v1939 = vsel %vm1909, %v1937, %v1938
      %v1940 = vrot.slane %v1661, 1
      %v1941 = vrot.slane %v1663, 1
      %v1942 = vsel %vm1909, %v1940, %v1941
      %v1943 = vrot.slane %v1665, 1
      %v1944 = vrot.slane %v1667, 1
      %v1945 = vsel %vm1909, %v1943, %v1944
      %v1946 = vrot.slane %v1669, 1
      %v1947 = vrot.slane %v1671, 1
      %v1948 = vsel %vm1909, %v1946, %v1947
      %v1949 = vrot.slane %v1673, 1
      %v1950 = vrot.slane %v1675, 1
      %v1951 = vsel %vm1909, %v1949, %v1950
      %v1952 = vrot.slane %v1677, 1
      %v1953 = vrot.slane %v1679, 1
      %v1954 = vsel %vm1909, %v1952, %v1953
      %v1955 = vrot.slane %v1681, 1
      %v1956 = vrot.slane %v1683, 1
      %v1957 = vsel %vm1909, %v1955, %v1956
      %1958 = vrot.lane.b32.xlu0 %v1912, 24
      %v1959 = vpop.permute.xlu0 %1958
      %1960 = vrot.lane.b32.xlu0 %v1915, 24
      %v1961 = vpop.permute.xlu0 %1960
      %1962 = vrot.lane.b32.xlu0 %v1918, 24
      %v1963 = vpop.permute.xlu0 %1962
      %1964 = vrot.lane.b32.xlu0 %v1921, 24
      %v1965 = vpop.permute.xlu0 %1964
      %1966 = vrot.lane.b32.xlu0 %v1924, 24
      %v1967 = vpop.permute.xlu0 %1966
      %1968 = vrot.lane.b32.xlu0 %v1927, 24
      %v1969 = vpop.permute.xlu0 %1968
      %1970 = vrot.lane.b32.xlu0 %v1930, 24
      %v1971 = vpop.permute.xlu0 %1970
      %1972 = vrot.lane.b32.xlu0 %v1933, 24
      %v1973 = vpop.permute.xlu0 %1972
      %1974 = vrot.lane.b32.xlu0 %v1936, 24
      %v1975 = vpop.permute.xlu0 %1974
      %1976 = vrot.lane.b32.xlu0 %v1939, 24
      %v1977 = vpop.permute.xlu0 %1976
      %1978 = vrot.lane.b32.xlu0 %v1942, 24
      %v1979 = vpop.permute.xlu0 %1978
      %1980 = vrot.lane.b32.xlu0 %v1945, 24
      %v1981 = vpop.permute.xlu0 %1980
      %1982 = vrot.lane.b32.xlu0 %v1948, 24
      %v1983 = vpop.permute.xlu0 %1982
      %1984 = vrot.lane.b32.xlu0 %v1951, 24
      %v1985 = vpop.permute.xlu0 %1984
      %1986 = vrot.lane.b32.xlu0 %v1954, 24
      %v1987 = vpop.permute.xlu0 %1986
      %1988 = vrot.lane.b32.xlu0 %v1957, 24
      %v1989 = vpop.permute.xlu0 %1988
      %vm1990 = vcmask 97280
      %v1992 = vsel %vm1990, %v1621, %v1846
      %v1994 = vsel %vm1990, %v1625, %v1848
      %v1996 = vsel %vm1990, %v1629, %v1850
      %v1998 = vsel %vm1990, %v1633, %v1852
      %v2000 = vsel %vm1990, %v1637, %v1854
      %v2002 = vsel %vm1990, %v1641, %v1856
      %v2004 = vsel %vm1990, %v1645, %v1858
      %v2006 = vsel %vm1990, %v1649, %v1860
      %v2008 = vsel %vm1990, %v1653, %v1862
      %v2010 = vsel %vm1990, %v1657, %v1864
      %v2012 = vsel %vm1990, %v1661, %v1866
      %v2014 = vsel %vm1990, %v1665, %v1868
      %v2016 = vsel %vm1990, %v1669, %v1870
      %v2018 = vsel %vm1990, %v1673, %v1872
      %v2020 = vsel %vm1990, %v1677, %v1874
      %v2022 = vsel %vm1990, %v1681, %v1876
      %vm2023 = vcmask 195584
      %v2025 = vsel %vm2023, %v1992, %v1959
      %v2027 = vsel %vm2023, %v1994, %v1961
      %v2029 = vsel %vm2023, %v1996, %v1963
      %v2031 = vsel %vm2023, %v1998, %v1965
      %v2033 = vsel %vm2023, %v2000, %v1967
      %v2035 = vsel %vm2023, %v2002, %v1969
      %v2037 = vsel %vm2023, %v2004, %v1971
      %v2039 = vsel %vm2023, %v2006, %v1973
      %v2041 = vsel %vm2023, %v2008, %v1975
      %v2043 = vsel %vm2023, %v2010, %v1977
      %v2045 = vsel %vm2023, %v2012, %v1979
      %v2047 = vsel %vm2023, %v2014, %v1981
      %v2049 = vsel %vm2023, %v2016, %v1983
      %v2051 = vsel %vm2023, %v2018, %v1985
      %v2053 = vsel %vm2023, %v2020, %v1987
      %v2055 = vsel %vm2023, %v2022, %v1989
      %v2056 = vld [vmem:[%s1] sm:$0xf]
      %v2057 = vld [vmem:[%s1 + $0x4] sm:$0xf]
      %v2058 = vld [vmem:[%s1 + $0x8] sm:$0xf]
      %v2059 = vld [vmem:[%s1 + $0xc] sm:$0xf]
      %v2060 = vld [vmem:[%s1 + $0x10] sm:$0x3]
      %v2066 = vunpack.c.l.b16 %v2056
      %v2067 = vunpack.c.l.b16 %v2057
      %v2068 = vunpack.c.l.b16 %v2058
      %v2069 = vunpack.c.l.b16 %v2059
      %v2070 = vunpack.c.l.b16 %v2060
      %v2071 = vpack.c.b16 %v2067, %v2066
      %v2072 = vpack.c.b16 %v2069, %v2068
      %v2073 = vpack.c.b16 %v2070, %v2070
      %vm2076 = vcmask 293888
      %v2077 = vsel %vm2076, %v2025, 0
      %v2079 = vsel %vm2076, %v2027, 0
      %v2081 = vsel %vm2076, %v2029, 0
      %v2083 = vsel %vm2076, %v2031, 0
      %v2085 = vsel %vm2076, %v2033, 0
      %v2087 = vsel %vm2076, %v2035, 0
      %v2089 = vsel %vm2076, %v2037, 0
      %v2091 = vsel %vm2076, %v2039, 0
      %v2093 = vsel %vm2076, %v2041, 0
      %v2095 = vsel %vm2076, %v2043, 0
      %v2097 = vsel %vm2076, %v2045, 0
      %v2099 = vsel %vm2076, %v2047, 0
      %v2101 = vsel %vm2076, %v2049, 0
      %v2103 = vsel %vm2076, %v2051, 0
      %v2105 = vsel %vm2076, %v2053, 0
      %v2107 = vsel %vm2076, %v2055, 0
      %vm2109 = vcmask 1041408
      %v2111 = vsel %vm2109, %v2073, 0
      %2113 = vmatprep.subr.bf16.mxu0 0
      %2114 = vmatpush1.bf16.msra.mxu0 %v2071
      %2115 = vmatprep.subr.bf16.mxu0 0
      %2116 = vmatpush1.bf16.msra.mxu0 %v2072
      %2117 = vmatprep.subr.bf16.mxu0 0
      %2118 = vmatpush1.bf16.msra.mxu0 %v2111
      %2119 = vmatprep.subr.bf16.mxu0 0
      %2120 = vmatpush1.bf16.msra.mxu0 0
      %2121 = vmatprep.subr.bf16.mxu0 0
      %2122 = vmatpush1.bf16.msra.mxu0 0
      %2123 = vmatprep.subr.bf16.mxu0 0
      %2124 = vmatpush1.bf16.msra.mxu0 0
      %2125 = vmatprep.subr.bf16.mxu0 0
      %2126 = vmatpush1.bf16.msra.mxu0 0
      %2127 = vmatprep.subr.bf16.mxu0 0
      %2128 = vmatpush1.bf16.msra.mxu0 0
      %2129 = vmatprep.subr.bf16.mxu0 0
      %2130 = vmatpush1.bf16.msra.mxu0 0
      %2131 = vmatprep.subr.bf16.mxu0 0
      %2132 = vmatpush1.bf16.msra.mxu0 0
      %2133 = vmatprep.subr.bf16.mxu0 0
      %2134 = vmatpush1.bf16.msra.mxu0 0
      %2135 = vmatprep.subr.bf16.mxu0 0
      %2136 = vmatpush1.bf16.msra.mxu0 0
      %2137 = vmatprep.subr.bf16.mxu0 0
      %2138 = vmatpush1.bf16.msra.mxu0 0
      %2139 = vmatprep.subr.bf16.mxu0 0
      %2140 = vmatpush1.bf16.msra.mxu0 0
      %2141 = vmatprep.subr.bf16.mxu0 0
      %2142 = vmatpush1.bf16.msra.mxu0 0
      %2143 = vmatprep.subr.bf16.mxu0 0
      %2144 = vmatpush1.bf16.msra.mxu0 0
      %2145 = vmatprep.mubr.bf16.mxu0 0
      %2146 = vmatmul.mubr.bf16.gmra.mrb[0].mxu0 %v2077
      %v2147 = vpop.f32.mrb[0].mxu0
      %v2148 = vadd.f32 0.0, %v2147
      %v2149 = vpop.f32.mrb[0].mxu0
      %v2150 = vpop.f32.mrb[0].mxu0
      %v2151 = vadd.f32 0.0, %v2150
      %v2152 = vpop.f32.mrb[0].mxu0
      %2153 = vmatprep.mubr.bf16.mxu0 0
      %2154 = vmatmul.mubr.bf16.gmra.mrb[0].mxu0 %v2079
      %v2155 = vpop.f32.mrb[0].mxu0
      %v2156 = vadd.f32 0.0, %v2155
      %v2157 = vpop.f32.mrb[0].mxu0
      %v2158 = vpop.f32.mrb[0].mxu0
      %v2159 = vadd.f32 0.0, %v2158
      %v2160 = vpop.f32.mrb[0].mxu0
      %2161 = vmatprep.mubr.bf16.mxu0 0
      %2162 = vmatmul.mubr.bf16.gmra.mrb[0].mxu0 %v2081
      %v2163 = vpop.f32.mrb[0].mxu0
      %v2164 = vadd.f32 0.0, %v2163
      %v2165 = vpop.f32.mrb[0].mxu0
      %v2166 = vpop.f32.mrb[0].mxu0
      %v2167 = vadd.f32 0.0, %v2166
      %v2168 = vpop.f32.mrb[0].mxu0
      %2169 = vmatprep.mubr.bf16.mxu0 0
      %2170 = vmatmul.mubr.bf16.gmra.mrb[0].mxu0 %v2083
      %v2171 = vpop.f32.mrb[0].mxu0
      %v2172 = vadd.f32 0.0, %v2171
      %v2173 = vpop.f32.mrb[0].mxu0
      %v2174 = vpop.f32.mrb[0].mxu0
      %v2175 = vadd.f32 0.0, %v2174
      %v2176 = vpop.f32.mrb[0].mxu0
      %2177 = vmatprep.mubr.bf16.mxu0 0
      %2178 = vmatmul.mubr.bf16.gmra.mrb[0].mxu0 %v2085
      %v2179 = vpop.f32.mrb[0].mxu0
      %v2180 = vadd.f32 0.0, %v2179
      %v2181 = vpop.f32.mrb[0].mxu0
      %v2182 = vpop.f32.mrb[0].mxu0
      %v2183 = vadd.f32 0.0, %v2182
      %v2184 = vpop.f32.mrb[0].mxu0
      %2185 = vmatprep.mubr.bf16.mxu0 0
      %2186 = vmatmul.mubr.bf16.gmra.mrb[0].mxu0 %v2087
      %v2187 = vpop.f32.mrb[0].mxu0
      %v2188 = vadd.f32 0.0, %v2187
      %v2189 = vpop.f32.mrb[0].mxu0
      %v2190 = vpop.f32.mrb[0].mxu0
      %v2191 = vadd.f32 0.0, %v2190
      %v2192 = vpop.f32.mrb[0].mxu0
      %2193 = vmatprep.mubr.bf16.mxu0 0
      %2194 = vmatmul.mubr.bf16.gmra.mrb[0].mxu0 %v2089
      %v2195 = vpop.f32.mrb[0].mxu0
      %v2196 = vadd.f32 0.0, %v2195
      %v2197 = vpop.f32.mrb[0].mxu0
      %v2198 = vpop.f32.mrb[0].mxu0
      %v2199 = vadd.f32 0.0, %v2198
      %v2200 = vpop.f32.mrb[0].mxu0
      %2201 = vmatprep.mubr.bf16.mxu0 0
      %2202 = vmatmul.mubr.bf16.gmra.mrb[0].mxu0 %v2091
      %v2203 = vpop.f32.mrb[0].mxu0
      %v2204 = vadd.f32 0.0, %v2203
      %v2205 = vpop.f32.mrb[0].mxu0
      %v2206 = vpop.f32.mrb[0].mxu0
      %v2207 = vadd.f32 0.0, %v2206
      %v2208 = vpop.f32.mrb[0].mxu0
      %2209 = vmatprep.mubr.bf16.mxu0 0
      %2210 = vmatmul.mubr.bf16.gmra.mrb[0].mxu0 %v2093
      %v2211 = vpop.f32.mrb[0].mxu0
      %v2212 = vadd.f32 0.0, %v2211
      %v2213 = vpop.f32.mrb[0].mxu0
      %v2214 = vpop.f32.mrb[0].mxu0
      %v2215 = vadd.f32 0.0, %v2214
      %v2216 = vpop.f32.mrb[0].mxu0
      %2217 = vmatprep.mubr.bf16.mxu0 0
      %2218 = vmatmul.mubr.bf16.gmra.mrb[0].mxu0 %v2095
      %v2219 = vpop.f32.mrb[0].mxu0
      %v2220 = vadd.f32 0.0, %v2219
      %v2221 = vpop.f32.mrb[0].mxu0
      %v2222 = vpop.f32.mrb[0].mxu0
      %v2223 = vadd.f32 0.0, %v2222
      %v2224 = vpop.f32.mrb[0].mxu0
      %2225 = vmatprep.mubr.bf16.mxu0 0
      %2226 = vmatmul.mubr.bf16.gmra.mrb[0].mxu0 %v2097
      %v2227 = vpop.f32.mrb[0].mxu0
      %v2228 = vadd.f32 0.0, %v2227
      %v2229 = vpop.f32.mrb[0].mxu0
      %v2230 = vpop.f32.mrb[0].mxu0
      %v2231 = vadd.f32 0.0, %v2230
      %v2232 = vpop.f32.mrb[0].mxu0
      %2233 = vmatprep.mubr.bf16.mxu0 0
      %2234 = vmatmul.mubr.bf16.gmra.mrb[0].mxu0 %v2099
      %v2235 = vpop.f32.mrb[0].mxu0
      %v2236 = vadd.f32 0.0, %v2235
      %v2237 = vpop.f32.mrb[0].mxu0
      %v2238 = vpop.f32.mrb[0].mxu0
      %v2239 = vadd.f32 0.0, %v2238
      %v2240 = vpop.f32.mrb[0].mxu0
      %2241 = vmatprep.mubr.bf16.mxu0 0
      %2242 = vmatmul.mubr.bf16.gmra.mrb[0].mxu0 %v2101
      %v2243 = vpop.f32.mrb[0].mxu0
      %v2244 = vadd.f32 0.0, %v2243
      %v2245 = vpop.f32.mrb[0].mxu0
      %v2246 = vpop.f32.mrb[0].mxu0
      %v2247 = vadd.f32 0.0, %v2246
      %v2248 = vpop.f32.mrb[0].mxu0
      %2249 = vmatprep.mubr.bf16.mxu0 0
      %2250 = vmatmul.mubr.bf16.gmra.mrb[0].mxu0 %v2103
      %v2251 = vpop.f32.mrb[0].mxu0
      %v2252 = vadd.f32 0.0, %v2251
      %v2253 = vpop.f32.mrb[0].mxu0
      %v2254 = vpop.f32.mrb[0].mxu0
      %v2255 = vadd.f32 0.0, %v2254
      %v2256 = vpop.f32.mrb[0].mxu0
      %2257 = vmatprep.mubr.bf16.mxu0 0
      %2258 = vmatmul.mubr.bf16.gmra.mrb[0].mxu0 %v2105
      %v2259 = vpop.f32.mrb[0].mxu0
      %v2260 = vadd.f32 0.0, %v2259
      %v2261 = vpop.f32.mrb[0].mxu0
      %v2262 = vpop.f32.mrb[0].mxu0
      %v2263 = vadd.f32 0.0, %v2262
      %v2264 = vpop.f32.mrb[0].mxu0
      %2265 = vmatprep.mubr.bf16.mxu0 0
      %2266 = vmatmul.mubr.bf16.gmra.mrb[0].mxu0 %v2107
      %v2267 = vpop.f32.mrb[0].mxu0
      %v2268 = vadd.f32 0.0, %v2267
      %v2269 = vpop.f32.mrb[0].mxu0
      %v2270 = vpop.f32.mrb[0].mxu0
      %v2271 = vadd.f32 0.0, %v2270
      %v2272 = vpop.f32.mrb[0].mxu0
      %2273 = vdwg.mxu0
      %v2274 = vld [vmem:[%s2] sm:$0x1]
      %v2276 = vlaneseq
      %v2277 = vshrl.u32 %v2276, 7
      %v2278 = vsub.s32 0, %v2277
      %v2279 = vrot.slane %v2274, %v2278
      %v2281 = vmul.f32 %v2148, %v2279
      %v2282 = vmul.f32 %v2151, %v2279
      %v2283 = vmul.f32 %v2156, %v2279
      %v2284 = vmul.f32 %v2159, %v2279
      %v2285 = vmul.f32 %v2164, %v2279
      %v2286 = vmul.f32 %v2167, %v2279
      %v2287 = vmul.f32 %v2172, %v2279
      %v2288 = vmul.f32 %v2175, %v2279
      %v2289 = vmul.f32 %v2180, %v2279
      %v2290 = vmul.f32 %v2183, %v2279
      %v2291 = vmul.f32 %v2188, %v2279
      %v2292 = vmul.f32 %v2191, %v2279
      %v2293 = vmul.f32 %v2196, %v2279
      %v2294 = vmul.f32 %v2199, %v2279
      %v2295 = vmul.f32 %v2204, %v2279
      %v2296 = vmul.f32 %v2207, %v2279
      %v2297 = vmul.f32 %v2212, %v2279
      %v2298 = vmul.f32 %v2215, %v2279
      %v2299 = vmul.f32 %v2220, %v2279
      %v2300 = vmul.f32 %v2223, %v2279
      %v2301 = vmul.f32 %v2228, %v2279
      %v2302 = vmul.f32 %v2231, %v2279
      %v2303 = vmul.f32 %v2236, %v2279
      %v2304 = vmul.f32 %v2239, %v2279
      %v2305 = vmul.f32 %v2244, %v2279
      %v2306 = vmul.f32 %v2247, %v2279
      %v2307 = vmul.f32 %v2252, %v2279
      %v2308 = vmul.f32 %v2255, %v2279
      %v2309 = vmul.f32 %v2260, %v2279
      %v2310 = vmul.f32 %v2263, %v2279
      %v2311 = vmul.f32 %v2268, %v2279
      %v2312 = vmul.f32 %v2271, %v2279
      %v2313 = vld [vmem:[%s3] sm:$0x1]
      %v2315 = vlaneseq
      %v2316 = vshrl.u32 %v2315, 7
      %v2317 = vsub.s32 0, %v2316
      %v2318 = vrot.slane %v2313, %v2317
      %v2320 = vadd.f32 %v2281, %v2318
      %v2321 = vadd.f32 %v2282, %v2318
      %v2322 = vadd.f32 %v2283, %v2318
      %v2323 = vadd.f32 %v2284, %v2318
      %v2324 = vadd.f32 %v2285, %v2318
      %v2325 = vadd.f32 %v2286, %v2318
      %v2326 = vadd.f32 %v2287, %v2318
      %v2327 = vadd.f32 %v2288, %v2318
      %v2328 = vadd.f32 %v2289, %v2318
      %v2329 = vadd.f32 %v2290, %v2318
      %v2330 = vadd.f32 %v2291, %v2318
      %v2331 = vadd.f32 %v2292, %v2318
      %v2332 = vadd.f32 %v2293, %v2318
      %v2333 = vadd.f32 %v2294, %v2318
      %v2334 = vadd.f32 %v2295, %v2318
      %v2335 = vadd.f32 %v2296, %v2318
      %v2336 = vadd.f32 %v2297, %v2318
      %v2337 = vadd.f32 %v2298, %v2318
      %v2338 = vadd.f32 %v2299, %v2318
      %v2339 = vadd.f32 %v2300, %v2318
      %v2340 = vadd.f32 %v2301, %v2318
      %v2341 = vadd.f32 %v2302, %v2318
      %v2342 = vadd.f32 %v2303, %v2318
      %v2343 = vadd.f32 %v2304, %v2318
      %v2344 = vadd.f32 %v2305, %v2318
      %v2345 = vadd.f32 %v2306, %v2318
      %v2346 = vadd.f32 %v2307, %v2318
      %v2347 = vadd.f32 %v2308, %v2318
      %v2348 = vadd.f32 %v2309, %v2318
      %v2349 = vadd.f32 %v2310, %v2318
      %v2350 = vadd.f32 %v2311, %v2318
      %v2351 = vadd.f32 %v2312, %v2318
      %v2352 = vmax.f32 %v2320, 0.0
      %v2353 = vmax.f32 %v2321, 0.0
      %v2354 = vmax.f32 %v2322, 0.0
      %v2355 = vmax.f32 %v2323, 0.0
      %v2356 = vmax.f32 %v2324, 0.0
      %v2357 = vmax.f32 %v2325, 0.0
      %v2358 = vmax.f32 %v2326, 0.0
      %v2359 = vmax.f32 %v2327, 0.0
      %v2360 = vmax.f32 %v2328, 0.0
      %v2361 = vmax.f32 %v2329, 0.0
      %v2362 = vmax.f32 %v2330, 0.0
      %v2363 = vmax.f32 %v2331, 0.0
      %v2364 = vmax.f32 %v2332, 0.0
      %v2365 = vmax.f32 %v2333, 0.0
      %v2366 = vmax.f32 %v2334, 0.0
      %v2367 = vmax.f32 %v2335, 0.0
      %v2368 = vmax.f32 %v2336, 0.0
      %v2369 = vmax.f32 %v2337, 0.0
      %v2370 = vmax.f32 %v2338, 0.0
      %v2371 = vmax.f32 %v2339, 0.0
      %v2372 = vmax.f32 %v2340, 0.0
      %v2373 = vmax.f32 %v2341, 0.0
      %v2374 = vmax.f32 %v2342, 0.0
      %v2375 = vmax.f32 %v2343, 0.0
      %v2376 = vmax.f32 %v2344, 0.0
      %v2377 = vmax.f32 %v2345, 0.0
      %v2378 = vmax.f32 %v2346, 0.0
      %v2379 = vmax.f32 %v2347, 0.0
      %v2380 = vmax.f32 %v2348, 0.0
      %v2381 = vmax.f32 %v2349, 0.0
      %v2382 = vmax.f32 %v2350, 0.0
      %v2383 = vmax.f32 %v2351, 0.0
      %v2384 = vpack.c.bf16 %v2353, %v2352
      %v2385 = vpack.c.bf16 %v2355, %v2354
      %v2386 = vpack.c.bf16 %v2357, %v2356
      %v2387 = vpack.c.bf16 %v2359, %v2358
      %v2388 = vpack.c.bf16 %v2361, %v2360
      %v2389 = vpack.c.bf16 %v2363, %v2362
      %v2390 = vpack.c.bf16 %v2365, %v2364
      %v2391 = vpack.c.bf16 %v2367, %v2366
      %v2392 = vpack.c.bf16 %v2369, %v2368
      %v2393 = vpack.c.bf16 %v2371, %v2370
      %v2394 = vpack.c.bf16 %v2373, %v2372
      %v2395 = vpack.c.bf16 %v2375, %v2374
      %v2396 = vpack.c.bf16 %v2377, %v2376
      %v2397 = vpack.c.bf16 %v2379, %v2378
      %v2398 = vpack.c.bf16 %v2381, %v2380
      %v2399 = vpack.c.bf16 %v2383, %v2382
      %v2416 = vunpack.c.l.b16 %v2384
      %v2417 = vunpack.c.h.b16 %v2384
      %v2418 = vunpack.c.l.b16 %v2385
      %v2419 = vunpack.c.h.b16 %v2385
      %v2420 = vunpack.c.l.b16 %v2386
      %v2421 = vunpack.c.h.b16 %v2386
      %v2422 = vunpack.c.l.b16 %v2387
      %v2423 = vunpack.c.h.b16 %v2387
      %v2424 = vunpack.c.l.b16 %v2388
      %v2425 = vunpack.c.h.b16 %v2388
      %v2426 = vunpack.c.l.b16 %v2389
      %v2427 = vunpack.c.h.b16 %v2389
      %v2428 = vunpack.c.l.b16 %v2390
      %v2429 = vunpack.c.h.b16 %v2390
      %v2430 = vunpack.c.l.b16 %v2391
      %v2431 = vunpack.c.h.b16 %v2391
      %v2432 = vunpack.c.l.b16 %v2392
      %v2433 = vunpack.c.h.b16 %v2392
      %v2434 = vunpack.c.l.b16 %v2393
      %v2435 = vunpack.c.h.b16 %v2393
      %v2436 = vunpack.c.l.b16 %v2394
      %v2437 = vunpack.c.h.b16 %v2394
      %v2438 = vunpack.c.l.b16 %v2395
      %v2439 = vunpack.c.h.b16 %v2395
      %v2440 = vunpack.c.l.b16 %v2396
      %v2441 = vunpack.c.h.b16 %v2396
      %v2442 = vunpack.c.l.b16 %v2397
      %v2443 = vunpack.c.h.b16 %v2397
      %v2444 = vunpack.c.l.b16 %v2398
      %v2445 = vunpack.c.h.b16 %v2398
      %v2446 = vunpack.c.l.b16 %v2399
      %v2447 = vunpack.c.h.b16 %v2399
      %v2448 = vpack.c.b16 %v2416, %v2416
      %v2449 = vpack.c.b16 %v2417, %v2417
      %v2450 = vpack.c.b16 %v2418, %v2418
      %v2451 = vpack.c.b16 %v2419, %v2419
      %v2452 = vpack.c.b16 %v2420, %v2420
      %v2453 = vpack.c.b16 %v2421, %v2421
      %v2454 = vpack.c.b16 %v2422, %v2422
      %v2455 = vpack.c.b16 %v2423, %v2423
      %v2456 = vpack.c.b16 %v2424, %v2424
      %v2457 = vpack.c.b16 %v2425, %v2425
      %v2458 = vpack.c.b16 %v2426, %v2426
      %v2459 = vpack.c.b16 %v2427, %v2427
      %v2460 = vpack.c.b16 %v2428, %v2428
      %v2461 = vpack.c.b16 %v2429, %v2429
      %v2462 = vpack.c.b16 %v2430, %v2430
      %v2463 = vpack.c.b16 %v2431, %v2431
      %v2464 = vpack.c.b16 %v2432, %v2432
      %v2465 = vpack.c.b16 %v2433, %v2433
      %v2466 = vpack.c.b16 %v2434, %v2434
      %v2467 = vpack.c.b16 %v2435, %v2435
      %v2468 = vpack.c.b16 %v2436, %v2436
      %v2469 = vpack.c.b16 %v2437, %v2437
      %v2470 = vpack.c.b16 %v2438, %v2438
      %v2471 = vpack.c.b16 %v2439, %v2439
      %v2472 = vpack.c.b16 %v2440, %v2440
      %v2473 = vpack.c.b16 %v2441, %v2441
      %v2474 = vpack.c.b16 %v2442, %v2442
      %v2475 = vpack.c.b16 %v2443, %v2443
      %v2476 = vpack.c.b16 %v2444, %v2444
      %v2477 = vpack.c.b16 %v2445, %v2445
      %v2478 = vpack.c.b16 %v2446, %v2446
      %v2479 = vpack.c.b16 %v2447, %v2447
      %v2481 = vshrl.u32 %v2448, 16
      %v2483 = vrot.slane %v2481, 7
      %v2484 = vshll.u32 %v2448, 16
      %v2486 = vor.u32 %v2483, %v2484
      %v2487 = vrot.slane %v2483, 4
      %v2489 = vshrl.u32 %v2449, 16
      %v2491 = vrot.slane %v2489, 7
      %v2492 = vshll.u32 %v2449, 16
      %v2494 = vor.u32 %v2491, %v2492
      %v2495 = vsel %vm426, %v2487, %v2494
      %v2496 = vrot.slane %v2491, 4
      %v2498 = vshrl.u32 %v2450, 16
      %v2500 = vrot.slane %v2498, 7
      %v2501 = vshll.u32 %v2450, 16
      %v2503 = vor.u32 %v2500, %v2501
      %v2504 = vrot.slane %v2500, 4
      %v2506 = vshrl.u32 %v2451, 16
      %v2508 = vrot.slane %v2506, 7
      %v2509 = vshll.u32 %v2451, 16
      %v2511 = vor.u32 %v2508, %v2509
      %v2512 = vsel %vm426, %v2504, %v2511
      %v2513 = vrot.slane %v2508, 4
      %v2515 = vshrl.u32 %v2452, 16
      %v2517 = vrot.slane %v2515, 7
      %v2518 = vshll.u32 %v2452, 16
      %v2520 = vor.u32 %v2517, %v2518
      %v2521 = vrot.slane %v2517, 4
      %v2523 = vshrl.u32 %v2453, 16
      %v2525 = vrot.slane %v2523, 7
      %v2526 = vshll.u32 %v2453, 16
      %v2528 = vor.u32 %v2525, %v2526
      %v2529 = vsel %vm426, %v2521, %v2528
      %v2530 = vrot.slane %v2525, 4
      %v2532 = vshrl.u32 %v2454, 16
      %v2534 = vrot.slane %v2532, 7
      %v2535 = vshll.u32 %v2454, 16
      %v2537 = vor.u32 %v2534, %v2535
      %v2538 = vrot.slane %v2534, 4
      %v2540 = vshrl.u32 %v2455, 16
      %v2542 = vrot.slane %v2540, 7
      %v2543 = vshll.u32 %v2455, 16
      %v2545 = vor.u32 %v2542, %v2543
      %v2546 = vsel %vm426, %v2538, %v2545
      %v2547 = vrot.slane %v2542, 4
      %v2549 = vshrl.u32 %v2456, 16
      %v2551 = vrot.slane %v2549, 7
      %v2552 = vshll.u32 %v2456, 16
      %v2554 = vor.u32 %v2551, %v2552
      %v2555 = vrot.slane %v2551, 4
      %v2557 = vshrl.u32 %v2457, 16
      %v2559 = vrot.slane %v2557, 7
      %v2560 = vshll.u32 %v2457, 16
      %v2562 = vor.u32 %v2559, %v2560
      %v2563 = vsel %vm426, %v2555, %v2562
      %v2564 = vrot.slane %v2559, 4
      %v2566 = vshrl.u32 %v2458, 16
      %v2568 = vrot.slane %v2566, 7
      %v2569 = vshll.u32 %v2458, 16
      %v2571 = vor.u32 %v2568, %v2569
      %v2572 = vrot.slane %v2568, 4
      %v2574 = vshrl.u32 %v2459, 16
      %v2576 = vrot.slane %v2574, 7
      %v2577 = vshll.u32 %v2459, 16
      %v2579 = vor.u32 %v2576, %v2577
      %v2580 = vsel %vm426, %v2572, %v2579
      %v2581 = vrot.slane %v2576, 4
      %v2583 = vshrl.u32 %v2460, 16
      %v2585 = vrot.slane %v2583, 7
      %v2586 = vshll.u32 %v2460, 16
      %v2588 = vor.u32 %v2585, %v2586
      %v2589 = vrot.slane %v2585, 4
      %v2591 = vshrl.u32 %v2461, 16
      %v2593 = vrot.slane %v2591, 7
      %v2594 = vshll.u32 %v2461, 16
      %v2596 = vor.u32 %v2593, %v2594
      %v2597 = vsel %vm426, %v2589, %v2596
      %v2598 = vrot.slane %v2593, 4
      %v2600 = vshrl.u32 %v2462, 16
      %v2602 = vrot.slane %v2600, 7
      %v2603 = vshll.u32 %v2462, 16
      %v2605 = vor.u32 %v2602, %v2603
      %v2606 = vrot.slane %v2602, 4
      %v2608 = vshrl.u32 %v2463, 16
      %v2610 = vrot.slane %v2608, 7
      %v2611 = vshll.u32 %v2463, 16
      %v2613 = vor.u32 %v2610, %v2611
      %v2614 = vsel %vm426, %v2606, %v2613
      %v2615 = vrot.slane %v2610, 4
      %v2617 = vshrl.u32 %v2464, 16
      %v2619 = vrot.slane %v2617, 7
      %v2620 = vshll.u32 %v2464, 16
      %v2622 = vor.u32 %v2619, %v2620
      %v2623 = vrot.slane %v2619, 4
      %v2625 = vshrl.u32 %v2465, 16
      %v2627 = vrot.slane %v2625, 7
      %v2628 = vshll.u32 %v2465, 16
      %v2630 = vor.u32 %v2627, %v2628
      %v2631 = vsel %vm426, %v2623, %v2630
      %v2632 = vrot.slane %v2627, 4
      %v2634 = vshrl.u32 %v2466, 16
      %v2636 = vrot.slane %v2634, 7
      %v2637 = vshll.u32 %v2466, 16
      %v2639 = vor.u32 %v2636, %v2637
      %v2640 = vrot.slane %v2636, 4
      %v2642 = vshrl.u32 %v2467, 16
      %v2644 = vrot.slane %v2642, 7
      %v2645 = vshll.u32 %v2467, 16
      %v2647 = vor.u32 %v2644, %v2645
      %v2648 = vsel %vm426, %v2640, %v2647
      %v2649 = vrot.slane %v2644, 4
      %v2651 = vshrl.u32 %v2468, 16
      %v2653 = vrot.slane %v2651, 7
      %v2654 = vshll.u32 %v2468, 16
      %v2656 = vor.u32 %v2653, %v2654
      %v2657 = vrot.slane %v2653, 4
      %v2659 = vshrl.u32 %v2469, 16
      %v2661 = vrot.slane %v2659, 7
      %v2662 = vshll.u32 %v2469, 16
      %v2664 = vor.u32 %v2661, %v2662
      %v2665 = vsel %vm426, %v2657, %v2664
      %v2666 = vrot.slane %v2661, 4
      %v2668 = vshrl.u32 %v2470, 16
      %v2670 = vrot.slane %v2668, 7
      %v2671 = vshll.u32 %v2470, 16
      %v2673 = vor.u32 %v2670, %v2671
      %v2674 = vrot.slane %v2670, 4
      %v2676 = vshrl.u32 %v2471, 16
      %v2678 = vrot.slane %v2676, 7
      %v2679 = vshll.u32 %v2471, 16
      %v2681 = vor.u32 %v2678, %v2679
      %v2682 = vsel %vm426, %v2674, %v2681
      %v2683 = vrot.slane %v2678, 4
      %v2685 = vshrl.u32 %v2472, 16
      %v2687 = vrot.slane %v2685, 7
      %v2688 = vshll.u32 %v2472, 16
      %v2690 = vor.u32 %v2687, %v2688
      %v2691 = vrot.slane %v2687, 4
      %v2693 = vshrl.u32 %v2473, 16
      %v2695 = vrot.slane %v2693, 7
      %v2696 = vshll.u32 %v2473, 16
      %v2698 = vor.u32 %v2695, %v2696
      %v2699 = vsel %vm426, %v2691, %v2698
      %v2700 = vrot.slane %v2695, 4
      %v2702 = vshrl.u32 %v2474, 16
      %v2704 = vrot.slane %v2702, 7
      %v2705 = vshll.u32 %v2474, 16
      %v2707 = vor.u32 %v2704, %v2705
      %v2708 = vrot.slane %v2704, 4
      %v2710 = vshrl.u32 %v2475, 16
      %v2712 = vrot.slane %v2710, 7
      %v2713 = vshll.u32 %v2475, 16
      %v2715 = vor.u32 %v2712, %v2713
      %v2716 = vsel %vm426, %v2708, %v2715
      %v2717 = vrot.slane %v2712, 4
      %v2719 = vshrl.u32 %v2476, 16
      %v2721 = vrot.slane %v2719, 7
      %v2722 = vshll.u32 %v2476, 16
      %v2724 = vor.u32 %v2721, %v2722
      %v2725 = vrot.slane %v2721, 4
      %v2727 = vshrl.u32 %v2477, 16
      %v2729 = vrot.slane %v2727, 7
      %v2730 = vshll.u32 %v2477, 16
      %v2732 = vor.u32 %v2729, %v2730
      %v2733 = vsel %vm426, %v2725, %v2732
      %v2734 = vrot.slane %v2729, 4
      %v2736 = vshrl.u32 %v2478, 16
      %v2738 = vrot.slane %v2736, 7
      %v2739 = vshll.u32 %v2478, 16
      %v2741 = vor.u32 %v2738, %v2739
      %v2742 = vrot.slane %v2738, 4
      %v2744 = vshrl.u32 %v2479, 16
      %v2746 = vrot.slane %v2744, 7
      %v2747 = vshll.u32 %v2479, 16
      %v2749 = vor.u32 %v2746, %v2747
      %v2750 = vsel %vm426, %v2742, %v2749
      %v2751 = vrot.slane %v2746, 4
      %s2800 = scalar_lea.vmem [#allocation3], 12
      %vm2801 = vcmask 60416
      %vm2802 = vmand %vm2801, %vm749
      %v2803 = vld [vmem:[%s2800] sm:$0xf]
      %v2804 = vsel %vm2802, %v2486, %v2803
      %2805 = vst [vmem:[%s2800] sm:$0xf] %v2804
      %2806 = vst.msk [vmem:[%s2800 + $0x4] sm:$0xf] %vm336, %v2495
      %vm2807 = vcmask 57344
      %vm2808 = vmand %vm2807, %vm424
      %v2809 = vld [vmem:[%s2800 + $0x8] sm:$0x1]
      %v2810 = vsel %vm2808, %v2496, %v2809
      %2811 = vst [vmem:[%s2800 + $0x8] sm:$0x1] %v2810
      %v2812 = vld [vmem:[%s2800 + $0xc] sm:$0xf]
      %v2813 = vsel %vm2802, %v2503, %v2812
      %2814 = vst [vmem:[%s2800 + $0xc] sm:$0xf] %v2813
      %2815 = vst.msk [vmem:[%s2800 + $0x10] sm:$0xf] %vm336, %v2512
      %v2816 = vld [vmem:[%s2800 + $0x14] sm:$0x1]
      %v2817 = vsel %vm2808, %v2513, %v2816
      %2818 = vst [vmem:[%s2800 + $0x14] sm:$0x1] %v2817
      %v2819 = vld [vmem:[%s2800 + $0x18] sm:$0xf]
      %v2820 = vsel %vm2802, %v2520, %v2819
      %2821 = vst [vmem:[%s2800 + $0x18] sm:$0xf] %v2820
      %2822 = vst.msk [vmem:[%s2800 + $0x1c] sm:$0xf] %vm336, %v2529
      %v2823 = vld [vmem:[%s2800 + $0x20] sm:$0x1]
      %v2824 = vsel %vm2808, %v2530, %v2823
      %2825 = vst [vmem:[%s2800 + $0x20] sm:$0x1] %v2824
      %v2826 = vld [vmem:[%s2800 + $0x24] sm:$0xf]
      %v2827 = vsel %vm2802, %v2537, %v2826
      %2828 = vst [vmem:[%s2800 + $0x24] sm:$0xf] %v2827
      %2829 = vst.msk [vmem:[%s2800 + $0x28] sm:$0xf] %vm336, %v2546
      %v2830 = vld [vmem:[%s2800 + $0x2c] sm:$0x1]
      %v2831 = vsel %vm2808, %v2547, %v2830
      %2832 = vst [vmem:[%s2800 + $0x2c] sm:$0x1] %v2831
      %v2833 = vld [vmem:[%s2800 + $0x30] sm:$0xf]
      %v2834 = vsel %vm2802, %v2554, %v2833
      %2835 = vst [vmem:[%s2800 + $0x30] sm:$0xf] %v2834
      %2836 = vst.msk [vmem:[%s2800 + $0x34] sm:$0xf] %vm336, %v2563
      %v2837 = vld [vmem:[%s2800 + $0x38] sm:$0x1]
      %v2838 = vsel %vm2808, %v2564, %v2837
      %2839 = vst [vmem:[%s2800 + $0x38] sm:$0x1] %v2838
      %v2840 = vld [vmem:[%s2800 + $0x3c] sm:$0xf]
      %v2841 = vsel %vm2802, %v2571, %v2840
      %2842 = vst [vmem:[%s2800 + $0x3c] sm:$0xf] %v2841
      %2843 = vst.msk [vmem:[%s2800 + $0x40] sm:$0xf] %vm336, %v2580
      %v2844 = vld [vmem:[%s2800 + $0x44] sm:$0x1]
      %v2845 = vsel %vm2808, %v2581, %v2844
      %2846 = vst [vmem:[%s2800 + $0x44] sm:$0x1] %v2845
      %v2847 = vld [vmem:[%s2800 + $0x48] sm:$0xf]
      %v2848 = vsel %vm2802, %v2588, %v2847
      %2849 = vst [vmem:[%s2800 + $0x48] sm:$0xf] %v2848
      %2850 = vst.msk [vmem:[%s2800 + $0x4c] sm:$0xf] %vm336, %v2597
      %v2851 = vld [vmem:[%s2800 + $0x50] sm:$0x1]
      %v2852 = vsel %vm2808, %v2598, %v2851
      %2853 = vst [vmem:[%s2800 + $0x50] sm:$0x1] %v2852
      %v2854 = vld [vmem:[%s2800 + $0x54] sm:$0xf]
      %v2855 = vsel %vm2802, %v2605, %v2854
      %2856 = vst [vmem:[%s2800 + $0x54] sm:$0xf] %v2855
      %2857 = vst.msk [vmem:[%s2800 + $0x58] sm:$0xf] %vm336, %v2614
      %v2858 = vld [vmem:[%s2800 + $0x5c] sm:$0x1]
      %v2859 = vsel %vm2808, %v2615, %v2858
      %2860 = vst [vmem:[%s2800 + $0x5c] sm:$0x1] %v2859
      %v2861 = vld [vmem:[%s2800 + $0x60] sm:$0xf]
      %v2862 = vsel %vm2802, %v2622, %v2861
      %2863 = vst [vmem:[%s2800 + $0x60] sm:$0xf] %v2862
      %2864 = vst.msk [vmem:[%s2800 + $0x64] sm:$0xf] %vm336, %v2631
      %v2865 = vld [vmem:[%s2800 + $0x68] sm:$0x1]
      %v2866 = vsel %vm2808, %v2632, %v2865
      %2867 = vst [vmem:[%s2800 + $0x68] sm:$0x1] %v2866
      %v2868 = vld [vmem:[%s2800 + $0x6c] sm:$0xf]
      %v2869 = vsel %vm2802, %v2639, %v2868
      %2870 = vst [vmem:[%s2800 + $0x6c] sm:$0xf] %v2869
      %2871 = vst.msk [vmem:[%s2800 + $0x70] sm:$0xf] %vm336, %v2648
      %v2872 = vld [vmem:[%s2800 + $0x74] sm:$0x1]
      %v2873 = vsel %vm2808, %v2649, %v2872
      %2874 = vst [vmem:[%s2800 + $0x74] sm:$0x1] %v2873
      %v2875 = vld [vmem:[%s2800 + $0x78] sm:$0xf]
      %v2876 = vsel %vm2802, %v2656, %v2875
      %2877 = vst [vmem:[%s2800 + $0x78] sm:$0xf] %v2876
      %2878 = vst.msk [vmem:[%s2800 + $0x7c] sm:$0xf] %vm336, %v2665
      %v2879 = vld [vmem:[%s2800 + $0x80] sm:$0x1]
      %v2880 = vsel %vm2808, %v2666, %v2879
      %2881 = vst [vmem:[%s2800 + $0x80] sm:$0x1] %v2880
      %v2882 = vld [vmem:[%s2800 + $0x84] sm:$0xf]
      %v2883 = vsel %vm2802, %v2673, %v2882
      %2884 = vst [vmem:[%s2800 + $0x84] sm:$0xf] %v2883
      %2885 = vst.msk [vmem:[%s2800 + $0x88] sm:$0xf] %vm336, %v2682
      %v2886 = vld [vmem:[%s2800 + $0x8c] sm:$0x1]
      %v2887 = vsel %vm2808, %v2683, %v2886
      %2888 = vst [vmem:[%s2800 + $0x8c] sm:$0x1] %v2887
      %v2889 = vld [vmem:[%s2800 + $0x90] sm:$0xf]
      %v2890 = vsel %vm2802, %v2690, %v2889
      %2891 = vst [vmem:[%s2800 + $0x90] sm:$0xf] %v2890
      %2892 = vst.msk [vmem:[%s2800 + $0x94] sm:$0xf] %vm336, %v2699
      %v2893 = vld [vmem:[%s2800 + $0x98] sm:$0x1]
      %v2894 = vsel %vm2808, %v2700, %v2893
      %2895 = vst [vmem:[%s2800 + $0x98] sm:$0x1] %v2894
      %v2896 = vld [vmem:[%s2800 + $0x9c] sm:$0xf]
      %v2897 = vsel %vm2802, %v2707, %v2896
      %2898 = vst [vmem:[%s2800 + $0x9c] sm:$0xf] %v2897
      %2899 = vst.msk [vmem:[%s2800 + $0xa0] sm:$0xf] %vm336, %v2716
      %v2900 = vld [vmem:[%s2800 + $0xa4] sm:$0x1]
      %v2901 = vsel %vm2808, %v2717, %v2900
      %2902 = vst [vmem:[%s2800 + $0xa4] sm:$0x1] %v2901
      %v2903 = vld [vmem:[%s2800 + $0xa8] sm:$0xf]
      %v2904 = vsel %vm2802, %v2724, %v2903
      %2905 = vst [vmem:[%s2800 + $0xa8] sm:$0xf] %v2904
      %2906 = vst.msk [vmem:[%s2800 + $0xac] sm:$0xf] %vm336, %v2733
      %v2907 = vld [vmem:[%s2800 + $0xb0] sm:$0x1]
      %v2908 = vsel %vm2808, %v2734, %v2907
      %2909 = vst [vmem:[%s2800 + $0xb0] sm:$0x1] %v2908
      %v2910 = vld [vmem:[%s2800 + $0xb4] sm:$0xf]
      %v2911 = vsel %vm2802, %v2741, %v2910
      %2912 = vst [vmem:[%s2800 + $0xb4] sm:$0xf] %v2911
      %2913 = vst.msk [vmem:[%s2800 + $0xb8] sm:$0xf] %vm336, %v2750
      %v2914 = vld [vmem:[%s2800 + $0xbc] sm:$0x1]
      %v2915 = vsel %vm2808, %v2751, %v2914
      %2916 = vst [vmem:[%s2800 + $0xbc] sm:$0x1] %v2915
      %v2917 = vld [vmem:[#allocation3] sm:$0xf]
      %v2918 = vld [vmem:[#allocation3 + $0x4] sm:$0xf]
      %v2919 = vld [vmem:[#allocation3 + $0x8] sm:$0x1]
      %v2920 = vld [vmem:[#allocation3 + $0xc] sm:$0xf]
      %v2921 = vld [vmem:[#allocation3 + $0x10] sm:$0xf]
      %v2922 = vld [vmem:[#allocation3 + $0x14] sm:$0x1]
      %v2923 = vld [vmem:[#allocation3 + $0x18] sm:$0xf]
      %v2924 = vld [vmem:[#allocation3 + $0x1c] sm:$0xf]
      %v2925 = vld [vmem:[#allocation3 + $0x20] sm:$0x1]
      %v2926 = vld [vmem:[#allocation3 + $0x24] sm:$0xf]
      %v2927 = vld [vmem:[#allocation3 + $0x28] sm:$0xf]
      %v2928 = vld [vmem:[#allocation3 + $0x2c] sm:$0x1]
      %v2929 = vld [vmem:[#allocation3 + $0x30] sm:$0xf]
      %v2930 = vld [vmem:[#allocation3 + $0x34] sm:$0xf]
      %v2931 = vld [vmem:[#allocation3 + $0x38] sm:$0x1]
      %v2932 = vld [vmem:[#allocation3 + $0x3c] sm:$0xf]
      %v2933 = vld [vmem:[#allocation3 + $0x40] sm:$0xf]
      %v2934 = vld [vmem:[#allocation3 + $0x44] sm:$0x1]
      %v2935 = vld [vmem:[#allocation3 + $0x48] sm:$0xf]
      %v2936 = vld [vmem:[#allocation3 + $0x4c] sm:$0xf]
      %v2937 = vld [vmem:[#allocation3 + $0x50] sm:$0x1]
      %v2938 = vld [vmem:[#allocation3 + $0x54] sm:$0xf]
      %v2939 = vld [vmem:[#allocation3 + $0x58] sm:$0xf]
      %v2940 = vld [vmem:[#allocation3 + $0x5c] sm:$0x1]
      %v2941 = vld [vmem:[#allocation3 + $0x60] sm:$0xf]
      %v2942 = vld [vmem:[#allocation3 + $0x64] sm:$0xf]
      %v2943 = vld [vmem:[#allocation3 + $0x68] sm:$0x1]
      %v2944 = vld [vmem:[#allocation3 + $0x6c] sm:$0xf]
      %v2945 = vld [vmem:[#allocation3 + $0x70] sm:$0xf]
      %v2946 = vld [vmem:[#allocation3 + $0x74] sm:$0x1]
      %v2947 = vld [vmem:[#allocation3 + $0x78] sm:$0xf]
      %v2948 = vld [vmem:[#allocation3 + $0x7c] sm:$0xf]
      %v2949 = vld [vmem:[#allocation3 + $0x80] sm:$0x1]
      %v2950 = vld [vmem:[#allocation3 + $0x84] sm:$0xf]
      %v2951 = vld [vmem:[#allocation3 + $0x88] sm:$0xf]
      %v2952 = vld [vmem:[#allocation3 + $0x8c] sm:$0x1]
      %v2953 = vld [vmem:[#allocation3 + $0x90] sm:$0xf]
      %v2954 = vld [vmem:[#allocation3 + $0x94] sm:$0xf]
      %v2955 = vld [vmem:[#allocation3 + $0x98] sm:$0x1]
      %v2956 = vld [vmem:[#allocation3 + $0x9c] sm:$0xf]
      %v2957 = vld [vmem:[#allocation3 + $0xa0] sm:$0xf]
      %v2958 = vld [vmem:[#allocation3 + $0xa4] sm:$0x1]
      %v2959 = vld [vmem:[#allocation3 + $0xa8] sm:$0xf]
      %v2960 = vld [vmem:[#allocation3 + $0xac] sm:$0xf]
      %v2961 = vld [vmem:[#allocation3 + $0xb0] sm:$0x1]
      %v2962 = vld [vmem:[#allocation3 + $0xb4] sm:$0xf]
      %v2963 = vld [vmem:[#allocation3 + $0xb8] sm:$0xf]
      %v2964 = vld [vmem:[#allocation3 + $0xbc] sm:$0x1]
      %v2965 = vld [vmem:[%s2800] sm:$0xf]
      %v2966 = vld [vmem:[%s2800 + $0x4] sm:$0xf]
      %v2967 = vld [vmem:[%s2800 + $0x8] sm:$0x1]
      %v2968 = vld [vmem:[%s2800 + $0xc] sm:$0xf]
      %v2969 = vld [vmem:[%s2800 + $0x10] sm:$0xf]
      %v2970 = vld [vmem:[%s2800 + $0x14] sm:$0x1]
      %v2971 = vld [vmem:[%s2800 + $0x18] sm:$0xf]
      %v2972 = vld [vmem:[%s2800 + $0x1c] sm:$0xf]
      %v2973 = vld [vmem:[%s2800 + $0x20] sm:$0x1]
      %v2974 = vld [vmem:[%s2800 + $0x24] sm:$0xf]
      %v2975 = vld [vmem:[%s2800 + $0x28] sm:$0xf]
      %v2976 = vld [vmem:[%s2800 + $0x2c] sm:$0x1]
      %v2977 = vld [vmem:[%s2800 + $0x30] sm:$0xf]
      %v2978 = vld [vmem:[%s2800 + $0x34] sm:$0xf]
      %v2979 = vld [vmem:[%s2800 + $0x38] sm:$0x1]
      %v2980 = vld [vmem:[%s2800 + $0x3c] sm:$0xf]
      %v2981 = vld [vmem:[%s2800 + $0x40] sm:$0xf]
      %v2982 = vld [vmem:[%s2800 + $0x44] sm:$0x1]
      %v2983 = vld [vmem:[%s2800 + $0x48] sm:$0xf]
      %v2984 = vld [vmem:[%s2800 + $0x4c] sm:$0xf]
      %v2985 = vld [vmem:[%s2800 + $0x50] sm:$0x1]
      %v2986 = vld [vmem:[%s2800 + $0x54] sm:$0xf]
      %v2987 = vld [vmem:[%s2800 + $0x58] sm:$0xf]
      %v2988 = vld [vmem:[%s2800 + $0x5c] sm:$0x1]
      %v2989 = vld [vmem:[%s2800 + $0x60] sm:$0xf]
      %v2990 = vld [vmem:[%s2800 + $0x64] sm:$0xf]
      %v2991 = vld [vmem:[%s2800 + $0x68] sm:$0x1]
      %v2992 = vld [vmem:[%s2800 + $0x6c] sm:$0xf]
      %v2993 = vld [vmem:[%s2800 + $0x70] sm:$0xf]
      %v2994 = vld [vmem:[%s2800 + $0x74] sm:$0x1]
      %v2995 = vld [vmem:[%s2800 + $0x78] sm:$0xf]
      %v2996 = vld [vmem:[%s2800 + $0x7c] sm:$0xf]
      %v2997 = vld [vmem:[%s2800 + $0x80] sm:$0x1]
      %v2998 = vld [vmem:[%s2800 + $0x84] sm:$0xf]
      %v2999 = vld [vmem:[%s2800 + $0x88] sm:$0xf]
      %v3000 = vld [vmem:[%s2800 + $0x8c] sm:$0x1]
      %v3001 = vld [vmem:[%s2800 + $0x90] sm:$0xf]
      %v3002 = vld [vmem:[%s2800 + $0x94] sm:$0xf]
      %v3003 = vld [vmem:[%s2800 + $0x98] sm:$0x1]
      %v3004 = vld [vmem:[%s2800 + $0x9c] sm:$0xf]
      %v3005 = vld [vmem:[%s2800 + $0xa0] sm:$0xf]
      %v3006 = vld [vmem:[%s2800 + $0xa4] sm:$0x1]
      %v3007 = vld [vmem:[%s2800 + $0xa8] sm:$0xf]
      %v3008 = vld [vmem:[%s2800 + $0xac] sm:$0xf]
      %v3009 = vld [vmem:[%s2800 + $0xb0] sm:$0x1]
      %v3010 = vld [vmem:[%s2800 + $0xb4] sm:$0xf]
      %v3011 = vld [vmem:[%s2800 + $0xb8] sm:$0xf]
      %v3012 = vld [vmem:[%s2800 + $0xbc] sm:$0x1]
      %s3013 = scalar_lea.vmem [#allocation3], 24
      %v3014 = vld [vmem:[%s3013] sm:$0xf]
      %v3015 = vld [vmem:[%s3013 + $0x4] sm:$0xf]
      %v3016 = vld [vmem:[%s3013 + $0x8] sm:$0x1]
      %v3017 = vld [vmem:[%s3013 + $0xc] sm:$0xf]
      %v3018 = vld [vmem:[%s3013 + $0x10] sm:$0xf]
      %v3019 = vld [vmem:[%s3013 + $0x14] sm:$0x1]
      %v3020 = vld [vmem:[%s3013 + $0x18] sm:$0xf]
      %v3021 = vld [vmem:[%s3013 + $0x1c] sm:$0xf]
      %v3022 = vld [vmem:[%s3013 + $0x20] sm:$0x1]
      %v3023 = vld [vmem:[%s3013 + $0x24] sm:$0xf]
      %v3024 = vld [vmem:[%s3013 + $0x28] sm:$0xf]
      %v3025 = vld [vmem:[%s3013 + $0x2c] sm:$0x1]
      %v3026 = vld [vmem:[%s3013 + $0x30] sm:$0xf]
      %v3027 = vld [vmem:[%s3013 + $0x34] sm:$0xf]
      %v3028 = vld [vmem:[%s3013 + $0x38] sm:$0x1]
      %v3029 = vld [vmem:[%s3013 + $0x3c] sm:$0xf]
      %v3030 = vld [vmem:[%s3013 + $0x40] sm:$0xf]
      %v3031 = vld [vmem:[%s3013 + $0x44] sm:$0x1]
      %v3032 = vld [vmem:[%s3013 + $0x48] sm:$0xf]
      %v3033 = vld [vmem:[%s3013 + $0x4c] sm:$0xf]
      %v3034 = vld [vmem:[%s3013 + $0x50] sm:$0x1]
      %v3035 = vld [vmem:[%s3013 + $0x54] sm:$0xf]
      %v3036 = vld [vmem:[%s3013 + $0x58] sm:$0xf]
      %v3037 = vld [vmem:[%s3013 + $0x5c] sm:$0x1]
      %v3038 = vld [vmem:[%s3013 + $0x60] sm:$0xf]
      %v3039 = vld [vmem:[%s3013 + $0x64] sm:$0xf]
      %v3040 = vld [vmem:[%s3013 + $0x68] sm:$0x1]
      %v3041 = vld [vmem:[%s3013 + $0x6c] sm:$0xf]
      %v3042 = vld [vmem:[%s3013 + $0x70] sm:$0xf]
      %v3043 = vld [vmem:[%s3013 + $0x74] sm:$0x1]
      %v3044 = vld [vmem:[%s3013 + $0x78] sm:$0xf]
      %v3045 = vld [vmem:[%s3013 + $0x7c] sm:$0xf]
      %v3046 = vld [vmem:[%s3013 + $0x80] sm:$0x1]
      %v3047 = vld [vmem:[%s3013 + $0x84] sm:$0xf]
      %v3048 = vld [vmem:[%s3013 + $0x88] sm:$0xf]
      %v3049 = vld [vmem:[%s3013 + $0x8c] sm:$0x1]
      %v3050 = vld [vmem:[%s3013 + $0x90] sm:$0xf]
      %v3051 = vld [vmem:[%s3013 + $0x94] sm:$0xf]
      %v3052 = vld [vmem:[%s3013 + $0x98] sm:$0x1]
      %v3053 = vld [vmem:[%s3013 + $0x9c] sm:$0xf]
      %v3054 = vld [vmem:[%s3013 + $0xa0] sm:$0xf]
      %v3055 = vld [vmem:[%s3013 + $0xa4] sm:$0x1]
      %v3056 = vld [vmem:[%s3013 + $0xa8] sm:$0xf]
      %v3057 = vld [vmem:[%s3013 + $0xac] sm:$0xf]
      %v3058 = vld [vmem:[%s3013 + $0xb0] sm:$0x1]
      %v3059 = vld [vmem:[%s3013 + $0xb4] sm:$0xf]
      %v3060 = vld [vmem:[%s3013 + $0xb8] sm:$0xf]
      %v3061 = vld [vmem:[%s3013 + $0xbc] sm:$0x1]
      %v3110 = vunpack.c.l.b16 %v2917
      %v3111 = vunpack.c.l.b16 %v2918
      %v3112 = vunpack.c.l.b16 %v2919
      %v3113 = vunpack.c.l.b16 %v2920
      %v3114 = vunpack.c.l.b16 %v2921
      %v3115 = vunpack.c.l.b16 %v2922
      %v3116 = vunpack.c.l.b16 %v2923
      %v3117 = vunpack.c.l.b16 %v2924
      %v3118 = vunpack.c.l.b16 %v2925
      %v3119 = vunpack.c.l.b16 %v2926
      %v3120 = vunpack.c.l.b16 %v2927
      %v3121 = vunpack.c.l.b16 %v2928
      %v3122 = vunpack.c.l.b16 %v2929
      %v3123 = vunpack.c.l.b16 %v2930
      %v3124 = vunpack.c.l.b16 %v2931
      %v3125 = vunpack.c.l.b16 %v2932
      %v3126 = vunpack.c.l.b16 %v2933
      %v3127 = vunpack.c.l.b16 %v2934
      %v3128 = vunpack.c.l.b16 %v2935
      %v3129 = vunpack.c.l.b16 %v2936
      %v3130 = vunpack.c.l.b16 %v2937
      %v3131 = vunpack.c.l.b16 %v2938
      %v3132 = vunpack.c.l.b16 %v2939
      %v3133 = vunpack.c.l.b16 %v2940
      %v3134 = vunpack.c.l.b16 %v2941
      %v3135 = vunpack.c.l.b16 %v2942
      %v3136 = vunpack.c.l.b16 %v2943
      %v3137 = vunpack.c.l.b16 %v2944
      %v3138 = vunpack.c.l.b16 %v2945
      %v3139 = vunpack.c.l.b16 %v2946
      %v3140 = vunpack.c.l.b16 %v2947
      %v3141 = vunpack.c.l.b16 %v2948
      %v3142 = vunpack.c.l.b16 %v2949
      %v3143 = vunpack.c.l.b16 %v2950
      %v3144 = vunpack.c.l.b16 %v2951
      %v3145 = vunpack.c.l.b16 %v2952
      %v3146 = vunpack.c.l.b16 %v2953
      %v3147 = vunpack.c.l.b16 %v2954
      %v3148 = vunpack.c.l.b16 %v2955
      %v3149 = vunpack.c.l.b16 %v2956
      %v3150 = vunpack.c.l.b16 %v2957
      %v3151 = vunpack.c.l.b16 %v2958
      %v3152 = vunpack.c.l.b16 %v2959
      %v3153 = vunpack.c.l.b16 %v2960
      %v3154 = vunpack.c.l.b16 %v2961
      %v3155 = vunpack.c.l.b16 %v2962
      %v3156 = vunpack.c.l.b16 %v2963
      %v3157 = vunpack.c.l.b16 %v2964
      %v3158 = vpack.c.b16 %v3111, %v3110
      %v3159 = vpack.c.b16 %v3112, %v3112
      %v3160 = vpack.c.b16 %v3114, %v3113
      %v3161 = vpack.c.b16 %v3115, %v3115
      %v3162 = vpack.c.b16 %v3117, %v3116
      %v3163 = vpack.c.b16 %v3118, %v3118
      %v3164 = vpack.c.b16 %v3120, %v3119
      %v3165 = vpack.c.b16 %v3121, %v3121
      %v3166 = vpack.c.b16 %v3123, %v3122
      %v3167 = vpack.c.b16 %v3124, %v3124
      %v3168 = vpack.c.b16 %v3126, %v3125
      %v3169 = vpack.c.b16 %v3127, %v3127
      %v3170 = vpack.c.b16 %v3129, %v3128
      %v3171 = vpack.c.b16 %v3130, %v3130
      %v3172 = vpack.c.b16 %v3132, %v3131
      %v3173 = vpack.c.b16 %v3133, %v3133
      %v3174 = vpack.c.b16 %v3135, %v3134
      %v3175 = vpack.c.b16 %v3136, %v3136
      %v3176 = vpack.c.b16 %v3138, %v3137
      %v3177 = vpack.c.b16 %v3139, %v3139
      %v3178 = vpack.c.b16 %v3141, %v3140
      %v3179 = vpack.c.b16 %v3142, %v3142
      %v3180 = vpack.c.b16 %v3144, %v3143
      %v3181 = vpack.c.b16 %v3145, %v3145
      %v3182 = vpack.c.b16 %v3147, %v3146
      %v3183 = vpack.c.b16 %v3148, %v3148
      %v3184 = vpack.c.b16 %v3150, %v3149
      %v3185 = vpack.c.b16 %v3151, %v3151
      %v3186 = vpack.c.b16 %v3153, %v3152
      %v3187 = vpack.c.b16 %v3154, %v3154
      %v3188 = vpack.c.b16 %v3156, %v3155
      %v3189 = vpack.c.b16 %v3157, %v3157
      %v3238 = vunpack.c.l.b16 %v2965
      %v3239 = vunpack.c.l.b16 %v2966
      %v3240 = vunpack.c.l.b16 %v2967
      %v3241 = vunpack.c.l.b16 %v2968
      %v3242 = vunpack.c.l.b16 %v2969
      %v3243 = vunpack.c.l.b16 %v2970
      %v3244 = vunpack.c.l.b16 %v2971
      %v3245 = vunpack.c.l.b16 %v2972
      %v3246 = vunpack.c.l.b16 %v2973
      %v3247 = vunpack.c.l.b16 %v2974
      %v3248 = vunpack.c.l.b16 %v2975
      %v3249 = vunpack.c.l.b16 %v2976
      %v3250 = vunpack.c.l.b16 %v2977
      %v3251 = vunpack.c.l.b16 %v2978
      %v3252 = vunpack.c.l.b16 %v2979
      %v3253 = vunpack.c.l.b16 %v2980
      %v3254 = vunpack.c.l.b16 %v2981
      %v3255 = vunpack.c.l.b16 %v2982
      %v3256 = vunpack.c.l.b16 %v2983
      %v3257 = vunpack.c.l.b16 %v2984
      %v3258 = vunpack.c.l.b16 %v2985
      %v3259 = vunpack.c.l.b16 %v2986
      %v3260 = vunpack.c.l.b16 %v2987
      %v3261 = vunpack.c.l.b16 %v2988
      %v3262 = vunpack.c.l.b16 %v2989
      %v3263 = vunpack.c.l.b16 %v2990
      %v3264 = vunpack.c.l.b16 %v2991
      %v3265 = vunpack.c.l.b16 %v2992
      %v3266 = vunpack.c.l.b16 %v2993
      %v3267 = vunpack.c.l.b16 %v2994
      %v3268 = vunpack.c.l.b16 %v2995
      %v3269 = vunpack.c.l.b16 %v2996
      %v3270 = vunpack.c.l.b16 %v2997
      %v3271 = vunpack.c.l.b16 %v2998
      %v3272 = vunpack.c.l.b16 %v2999
      %v3273 = vunpack.c.l.b16 %v3000
      %v3274 = vunpack.c.l.b16 %v3001
      %v3275 = vunpack.c.l.b16 %v3002
      %v3276 = vunpack.c.l.b16 %v3003
      %v3277 = vunpack.c.l.b16 %v3004
      %v3278 = vunpack.c.l.b16 %v3005
      %v3279 = vunpack.c.l.b16 %v3006
      %v3280 = vunpack.c.l.b16 %v3007
      %v3281 = vunpack.c.l.b16 %v3008
      %v3282 = vunpack.c.l.b16 %v3009
      %v3283 = vunpack.c.l.b16 %v3010
      %v3284 = vunpack.c.l.b16 %v3011
      %v3285 = vunpack.c.l.b16 %v3012
      %v3286 = vpack.c.b16 %v3239, %v3238
      %v3287 = vpack.c.b16 %v3240, %v3240
      %v3288 = vpack.c.b16 %v3242, %v3241
      %v3289 = vpack.c.b16 %v3243, %v3243
      %v3290 = vpack.c.b16 %v3245, %v3244
      %v3291 = vpack.c.b16 %v3246, %v3246
      %v3292 = vpack.c.b16 %v3248, %v3247
      %v3293 = vpack.c.b16 %v3249, %v3249
      %v3294 = vpack.c.b16 %v3251, %v3250
      %v3295 = vpack.c.b16 %v3252, %v3252
      %v3296 = vpack.c.b16 %v3254, %v3253
      %v3297 = vpack.c.b16 %v3255, %v3255
      %v3298 = vpack.c.b16 %v3257, %v3256
      %v3299 = vpack.c.b16 %v3258, %v3258
      %v3300 = vpack.c.b16 %v3260, %v3259
      %v3301 = vpack.c.b16 %v3261, %v3261
      %v3302 = vpack.c.b16 %v3263, %v3262
      %v3303 = vpack.c.b16 %v3264, %v3264
      %v3304 = vpack.c.b16 %v3266, %v3265
      %v3305 = vpack.c.b16 %v3267, %v3267
      %v3306 = vpack.c.b16 %v3269, %v3268
      %v3307 = vpack.c.b16 %v3270, %v3270
      %v3308 = vpack.c.b16 %v3272, %v3271
      %v3309 = vpack.c.b16 %v3273, %v3273
      %v3310 = vpack.c.b16 %v3275, %v3274
      %v3311 = vpack.c.b16 %v3276, %v3276
      %v3312 = vpack.c.b16 %v3278, %v3277
      %v3313 = vpack.c.b16 %v3279, %v3279
      %v3314 = vpack.c.b16 %v3281, %v3280
      %v3315 = vpack.c.b16 %v3282, %v3282
      %v3316 = vpack.c.b16 %v3284, %v3283
      %v3317 = vpack.c.b16 %v3285, %v3285
      %3318 = vrot.lane.b32.xlu0 %v3286, 8
      %v3319 = vpop.permute.xlu0 %3318
      %3320 = vrot.lane.b32.xlu0 %v3287, 8
      %v3321 = vpop.permute.xlu0 %3320
      %3322 = vrot.lane.b32.xlu0 %v3288, 8
      %v3323 = vpop.permute.xlu0 %3322
      %3324 = vrot.lane.b32.xlu0 %v3289, 8
      %v3325 = vpop.permute.xlu0 %3324
      %3326 = vrot.lane.b32.xlu0 %v3290, 8
      %v3327 = vpop.permute.xlu0 %3326
      %3328 = vrot.lane.b32.xlu0 %v3291, 8
      %v3329 = vpop.permute.xlu0 %3328
      %3330 = vrot.lane.b32.xlu0 %v3292, 8
      %v3331 = vpop.permute.xlu0 %3330
      %3332 = vrot.lane.b32.xlu0 %v3293, 8
      %v3333 = vpop.permute.xlu0 %3332
      %3334 = vrot.lane.b32.xlu0 %v3294, 8
      %v3335 = vpop.permute.xlu0 %3334
      %3336 = vrot.lane.b32.xlu0 %v3295, 8
      %v3337 = vpop.permute.xlu0 %3336
      %3338 = vrot.lane.b32.xlu0 %v3296, 8
      %v3339 = vpop.permute.xlu0 %3338
      %3340 = vrot.lane.b32.xlu0 %v3297, 8
      %v3341 = vpop.permute.xlu0 %3340
      %3342 = vrot.lane.b32.xlu0 %v3298, 8
      %v3343 = vpop.permute.xlu0 %3342
      %3344 = vrot.lane.b32.xlu0 %v3299, 8
      %v3345 = vpop.permute.xlu0 %3344
      %3346 = vrot.lane.b32.xlu0 %v3300, 8
      %v3347 = vpop.permute.xlu0 %3346
      %3348 = vrot.lane.b32.xlu0 %v3301, 8
      %v3349 = vpop.permute.xlu0 %3348
      %3350 = vrot.lane.b32.xlu0 %v3302, 8
      %v3351 = vpop.permute.xlu0 %3350
      %3352 = vrot.lane.b32.xlu0 %v3303, 8
      %v3353 = vpop.permute.xlu0 %3352
      %3354 = vrot.lane.b32.xlu0 %v3304, 8
      %v3355 = vpop.permute.xlu0 %3354
      %3356 = vrot.lane.b32.xlu0 %v3305, 8
      %v3357 = vpop.permute.xlu0 %3356
      %3358 = vrot.lane.b32.xlu0 %v3306, 8
      %v3359 = vpop.permute.xlu0 %3358
      %3360 = vrot.lane.b32.xlu0 %v3307, 8
      %v3361 = vpop.permute.xlu0 %3360
      %3362 = vrot.lane.b32.xlu0 %v3308, 8
      %v3363 = vpop.permute.xlu0 %3362
      %3364 = vrot.lane.b32.xlu0 %v3309, 8
      %v3365 = vpop.permute.xlu0 %3364
      %3366 = vrot.lane.b32.xlu0 %v3310, 8
      %v3367 = vpop.permute.xlu0 %3366
      %3368 = vrot.lane.b32.xlu0 %v3311, 8
      %v3369 = vpop.permute.xlu0 %3368
      %3370 = vrot.lane.b32.xlu0 %v3312, 8
      %v3371 = vpop.permute.xlu0 %3370
      %3372 = vrot.lane.b32.xlu0 %v3313, 8
      %v3373 = vpop.permute.xlu0 %3372
      %3374 = vrot.lane.b32.xlu0 %v3314, 8
      %v3375 = vpop.permute.xlu0 %3374
      %3376 = vrot.lane.b32.xlu0 %v3315, 8
      %v3377 = vpop.permute.xlu0 %3376
      %3378 = vrot.lane.b32.xlu0 %v3316, 8
      %v3379 = vpop.permute.xlu0 %3378
      %3380 = vrot.lane.b32.xlu0 %v3317, 8
      %v3381 = vpop.permute.xlu0 %3380
      %v3430 = vunpack.c.l.b16 %v3014
      %v3431 = vunpack.c.l.b16 %v3015
      %v3432 = vunpack.c.l.b16 %v3016
      %v3433 = vunpack.c.l.b16 %v3017
      %v3434 = vunpack.c.l.b16 %v3018
      %v3435 = vunpack.c.l.b16 %v3019
      %v3436 = vunpack.c.l.b16 %v3020
      %v3437 = vunpack.c.l.b16 %v3021
      %v3438 = vunpack.c.l.b16 %v3022
      %v3439 = vunpack.c.l.b16 %v3023
      %v3440 = vunpack.c.l.b16 %v3024
      %v3441 = vunpack.c.l.b16 %v3025
      %v3442 = vunpack.c.l.b16 %v3026
      %v3443 = vunpack.c.l.b16 %v3027
      %v3444 = vunpack.c.l.b16 %v3028
      %v3445 = vunpack.c.l.b16 %v3029
      %v3446 = vunpack.c.l.b16 %v3030
      %v3447 = vunpack.c.l.b16 %v3031
      %v3448 = vunpack.c.l.b16 %v3032
      %v3449 = vunpack.c.l.b16 %v3033
      %v3450 = vunpack.c.l.b16 %v3034
      %v3451 = vunpack.c.l.b16 %v3035
      %v3452 = vunpack.c.l.b16 %v3036
      %v3453 = vunpack.c.l.b16 %v3037
      %v3454 = vunpack.c.l.b16 %v3038
      %v3455 = vunpack.c.l.b16 %v3039
      %v3456 = vunpack.c.l.b16 %v3040
      %v3457 = vunpack.c.l.b16 %v3041
      %v3458 = vunpack.c.l.b16 %v3042
      %v3459 = vunpack.c.l.b16 %v3043
      %v3460 = vunpack.c.l.b16 %v3044
      %v3461 = vunpack.c.l.b16 %v3045
      %v3462 = vunpack.c.l.b16 %v3046
      %v3463 = vunpack.c.l.b16 %v3047
      %v3464 = vunpack.c.l.b16 %v3048
      %v3465 = vunpack.c.l.b16 %v3049
      %v3466 = vunpack.c.l.b16 %v3050
      %v3467 = vunpack.c.l.b16 %v3051
      %v3468 = vunpack.c.l.b16 %v3052
      %v3469 = vunpack.c.l.b16 %v3053
      %v3470 = vunpack.c.l.b16 %v3054
      %v3471 = vunpack.c.l.b16 %v3055
      %v3472 = vunpack.c.l.b16 %v3056
      %v3473 = vunpack.c.l.b16 %v3057
      %v3474 = vunpack.c.l.b16 %v3058
      %v3475 = vunpack.c.l.b16 %v3059
      %v3476 = vunpack.c.l.b16 %v3060
      %v3477 = vunpack.c.l.b16 %v3061
      %v3478 = vpack.c.b16 %v3431, %v3430
      %v3479 = vpack.c.b16 %v3432, %v3432
      %v3480 = vpack.c.b16 %v3434, %v3433
      %v3481 = vpack.c.b16 %v3435, %v3435
      %v3482 = vpack.c.b16 %v3437, %v3436
      %v3483 = vpack.c.b16 %v3438, %v3438
      %v3484 = vpack.c.b16 %v3440, %v3439
      %v3485 = vpack.c.b16 %v3441, %v3441
      %v3486 = vpack.c.b16 %v3443, %v3442
      %v3487 = vpack.c.b16 %v3444, %v3444
      %v3488 = vpack.c.b16 %v3446, %v3445
      %v3489 = vpack.c.b16 %v3447, %v3447
      %v3490 = vpack.c.b16 %v3449, %v3448
      %v3491 = vpack.c.b16 %v3450, %v3450
      %v3492 = vpack.c.b16 %v3452, %v3451
      %v3493 = vpack.c.b16 %v3453, %v3453
      %v3494 = vpack.c.b16 %v3455, %v3454
      %v3495 = vpack.c.b16 %v3456, %v3456
      %v3496 = vpack.c.b16 %v3458, %v3457
      %v3497 = vpack.c.b16 %v3459, %v3459
      %v3498 = vpack.c.b16 %v3461, %v3460
      %v3499 = vpack.c.b16 %v3462, %v3462
      %v3500 = vpack.c.b16 %v3464, %v3463
      %v3501 = vpack.c.b16 %v3465, %v3465
      %v3502 = vpack.c.b16 %v3467, %v3466
      %v3503 = vpack.c.b16 %v3468, %v3468
      %v3504 = vpack.c.b16 %v3470, %v3469
      %v3505 = vpack.c.b16 %v3471, %v3471
      %v3506 = vpack.c.b16 %v3473, %v3472
      %v3507 = vpack.c.b16 %v3474, %v3474
      %v3508 = vpack.c.b16 %v3476, %v3475
      %v3509 = vpack.c.b16 %v3477, %v3477
      %3510 = vrot.lane.b32.xlu0 %v3478, 16
      %v3511 = vpop.permute.xlu0 %3510
      %3512 = vrot.lane.b32.xlu0 %v3479, 16
      %v3513 = vpop.permute.xlu0 %3512
      %3514 = vrot.lane.b32.xlu0 %v3480, 16
      %v3515 = vpop.permute.xlu0 %3514
      %3516 = vrot.lane.b32.xlu0 %v3481, 16
      %v3517 = vpop.permute.xlu0 %3516
      %3518 = vrot.lane.b32.xlu0 %v3482, 16
      %v3519 = vpop.permute.xlu0 %3518
      %3520 = vrot.lane.b32.xlu0 %v3483, 16
      %v3521 = vpop.permute.xlu0 %3520
      %3522 = vrot.lane.b32.xlu0 %v3484, 16
      %v3523 = vpop.permute.xlu0 %3522
      %3524 = vrot.lane.b32.xlu0 %v3485, 16
      %v3525 = vpop.permute.xlu0 %3524
      %3526 = vrot.lane.b32.xlu0 %v3486, 16
      %v3527 = vpop.permute.xlu0 %3526
      %3528 = vrot.lane.b32.xlu0 %v3487, 16
      %v3529 = vpop.permute.xlu0 %3528
      %3530 = vrot.lane.b32.xlu0 %v3488, 16
      %v3531 = vpop.permute.xlu0 %3530
      %3532 = vrot.lane.b32.xlu0 %v3489, 16
      %v3533 = vpop.permute.xlu0 %3532
      %3534 = vrot.lane.b32.xlu0 %v3490, 16
      %v3535 = vpop.permute.xlu0 %3534
      %3536 = vrot.lane.b32.xlu0 %v3491, 16
      %v3537 = vpop.permute.xlu0 %3536
      %3538 = vrot.lane.b32.xlu0 %v3492, 16
      %v3539 = vpop.permute.xlu0 %3538
      %3540 = vrot.lane.b32.xlu0 %v3493, 16
      %v3541 = vpop.permute.xlu0 %3540
      %3542 = vrot.lane.b32.xlu0 %v3494, 16
      %v3543 = vpop.permute.xlu0 %3542
      %3544 = vrot.lane.b32.xlu0 %v3495, 16
      %v3545 = vpop.permute.xlu0 %3544
      %3546 = vrot.lane.b32.xlu0 %v3496, 16
      %v3547 = vpop.permute.xlu0 %3546
      %3548 = vrot.lane.b32.xlu0 %v3497, 16
      %v3549 = vpop.permute.xlu0 %3548
      %3550 = vrot.lane.b32.xlu0 %v3498, 16
      %v3551 = vpop.permute.xlu0 %3550
      %3552 = vrot.lane.b32.xlu0 %v3499, 16
      %v3553 = vpop.permute.xlu0 %3552
      %3554 = vrot.lane.b32.xlu0 %v3500, 16
      %v3555 = vpop.permute.xlu0 %3554
      %3556 = vrot.lane.b32.xlu0 %v3501, 16
      %v3557 = vpop.permute.xlu0 %3556
      %3558 = vrot.lane.b32.xlu0 %v3502, 16
      %v3559 = vpop.permute.xlu0 %3558
      %3560 = vrot.lane.b32.xlu0 %v3503, 16
      %v3561 = vpop.permute.xlu0 %3560
      %3562 = vrot.lane.b32.xlu0 %v3504, 16
      %v3563 = vpop.permute.xlu0 %3562
      %3564 = vrot.lane.b32.xlu0 %v3505, 16
      %v3565 = vpop.permute.xlu0 %3564
      %3566 = vrot.lane.b32.xlu0 %v3506, 16
      %v3567 = vpop.permute.xlu0 %3566
      %3568 = vrot.lane.b32.xlu0 %v3507, 16
      %v3569 = vpop.permute.xlu0 %3568
      %3570 = vrot.lane.b32.xlu0 %v3508, 16
      %v3571 = vpop.permute.xlu0 %3570
      %3572 = vrot.lane.b32.xlu0 %v3509, 16
      %v3573 = vpop.permute.xlu0 %3572
      %v3576 = vsel %vm1619, %v3158, %v3319
      %v3579 = vsel %vm1619, %v3159, %v3321
      %v3582 = vsel %vm1619, %v3160, %v3323
      %v3585 = vsel %vm1619, %v3161, %v3325
      %v3588 = vsel %vm1619, %v3162, %v3327
      %v3591 = vsel %vm1619, %v3163, %v3329
      %v3594 = vsel %vm1619, %v3164, %v3331
      %v3597 = vsel %vm1619, %v3165, %v3333
      %v3600 = vsel %vm1619, %v3166, %v3335
      %v3603 = vsel %vm1619, %v3167, %v3337
      %v3606 = vsel %vm1619, %v3168, %v3339
      %v3609 = vsel %vm1619, %v3169, %v3341
      %v3612 = vsel %vm1619, %v3170, %v3343
      %v3615 = vsel %vm1619, %v3171, %v3345
      %v3618 = vsel %vm1619, %v3172, %v3347
      %v3621 = vsel %vm1619, %v3173, %v3349
      %v3624 = vsel %vm1619, %v3174, %v3351
      %v3627 = vsel %vm1619, %v3175, %v3353
      %v3630 = vsel %vm1619, %v3176, %v3355
      %v3633 = vsel %vm1619, %v3177, %v3357
      %v3636 = vsel %vm1619, %v3178, %v3359
      %v3639 = vsel %vm1619, %v3179, %v3361
      %v3642 = vsel %vm1619, %v3180, %v3363
      %v3645 = vsel %vm1619, %v3181, %v3365
      %v3648 = vsel %vm1619, %v3182, %v3367
      %v3651 = vsel %vm1619, %v3183, %v3369
      %v3654 = vsel %vm1619, %v3184, %v3371
      %v3657 = vsel %vm1619, %v3185, %v3373
      %v3660 = vsel %vm1619, %v3186, %v3375
      %v3663 = vsel %vm1619, %v3187, %v3377
      %v3666 = vsel %vm1619, %v3188, %v3379
      %v3669 = vsel %vm1619, %v3189, %v3381
      %vm3670 = vcmask 130048
      %v3672 = vsel %vm3670, %v3576, %v3511
      %v3674 = vsel %vm3670, %v3579, %v3513
      %v3676 = vsel %vm3670, %v3582, %v3515
      %v3678 = vsel %vm3670, %v3585, %v3517
      %v3680 = vsel %vm3670, %v3588, %v3519
      %v3682 = vsel %vm3670, %v3591, %v3521
      %v3684 = vsel %vm3670, %v3594, %v3523
      %v3686 = vsel %vm3670, %v3597, %v3525
      %v3688 = vsel %vm3670, %v3600, %v3527
      %v3690 = vsel %vm3670, %v3603, %v3529
      %v3692 = vsel %vm3670, %v3606, %v3531
      %v3694 = vsel %vm3670, %v3609, %v3533
      %v3696 = vsel %vm3670, %v3612, %v3535
      %v3698 = vsel %vm3670, %v3615, %v3537
      %v3700 = vsel %vm3670, %v3618, %v3539
      %v3702 = vsel %vm3670, %v3621, %v3541
      %v3704 = vsel %vm3670, %v3624, %v3543
      %v3706 = vsel %vm3670, %v3627, %v3545
      %v3708 = vsel %vm3670, %v3630, %v3547
      %v3710 = vsel %vm3670, %v3633, %v3549
      %v3712 = vsel %vm3670, %v3636, %v3551
      %v3714 = vsel %vm3670, %v3639, %v3553
      %v3716 = vsel %vm3670, %v3642, %v3555
      %v3718 = vsel %vm3670, %v3645, %v3557
      %v3720 = vsel %vm3670, %v3648, %v3559
      %v3722 = vsel %vm3670, %v3651, %v3561
      %v3724 = vsel %vm3670, %v3654, %v3563
      %v3726 = vsel %vm3670, %v3657, %v3565
      %v3728 = vsel %vm3670, %v3660, %v3567
      %v3730 = vsel %vm3670, %v3663, %v3569
      %v3732 = vsel %vm3670, %v3666, %v3571
      %v3734 = vsel %vm3670, %v3669, %v3573
      %v3735 = vshrl.u32 %v3672, 16
      %v3737 = vshll.u32 %v3672, 16
      %v3739 = vrot.slane %v3737, 1
      %v3740 = vor.u32 %v3735, %v3739
      %v3741 = vshll.u32 %v3674, 16
      %v3743 = vrot.slane %v3741, 1
      %v3744 = vsel %vm1684, %v3740, %v3743
      %v3745 = vshrl.u32 %v3676, 16
      %v3747 = vshll.u32 %v3676, 16
      %v3749 = vrot.slane %v3747, 1
      %v3750 = vor.u32 %v3745, %v3749
      %v3751 = vshll.u32 %v3678, 16
      %v3753 = vrot.slane %v3751, 1
      %v3754 = vsel %vm1684, %v3750, %v3753
      %v3755 = vshrl.u32 %v3680, 16
      %v3757 = vshll.u32 %v3680, 16
      %v3759 = vrot.slane %v3757, 1
      %v3760 = vor.u32 %v3755, %v3759
      %v3761 = vshll.u32 %v3682, 16
      %v3763 = vrot.slane %v3761, 1
      %v3764 = vsel %vm1684, %v3760, %v3763
      %v3765 = vshrl.u32 %v3684, 16
      %v3767 = vshll.u32 %v3684, 16
      %v3769 = vrot.slane %v3767, 1
      %v3770 = vor.u32 %v3765, %v3769
      %v3771 = vshll.u32 %v3686, 16
      %v3773 = vrot.slane %v3771, 1
      %v3774 = vsel %vm1684, %v3770, %v3773
      %v3775 = vshrl.u32 %v3688, 16
      %v3777 = vshll.u32 %v3688, 16
      %v3779 = vrot.slane %v3777, 1
      %v3780 = vor.u32 %v3775, %v3779
      %v3781 = vshll.u32 %v3690, 16
      %v3783 = vrot.slane %v3781, 1
      %v3784 = vsel %vm1684, %v3780, %v3783
      %v3785 = vshrl.u32 %v3692, 16
      %v3787 = vshll.u32 %v3692, 16
      %v3789 = vrot.slane %v3787, 1
      %v3790 = vor.u32 %v3785, %v3789
      %v3791 = vshll.u32 %v3694, 16
      %v3793 = vrot.slane %v3791, 1
      %v3794 = vsel %vm1684, %v3790, %v3793
      %v3795 = vshrl.u32 %v3696, 16
      %v3797 = vshll.u32 %v3696, 16
      %v3799 = vrot.slane %v3797, 1
      %v3800 = vor.u32 %v3795, %v3799
      %v3801 = vshll.u32 %v3698, 16
      %v3803 = vrot.slane %v3801, 1
      %v3804 = vsel %vm1684, %v3800, %v3803
      %v3805 = vshrl.u32 %v3700, 16
      %v3807 = vshll.u32 %v3700, 16
      %v3809 = vrot.slane %v3807, 1
      %v3810 = vor.u32 %v3805, %v3809
      %v3811 = vshll.u32 %v3702, 16
      %v3813 = vrot.slane %v3811, 1
      %v3814 = vsel %vm1684, %v3810, %v3813
      %v3815 = vshrl.u32 %v3704, 16
      %v3817 = vshll.u32 %v3704, 16
      %v3819 = vrot.slane %v3817, 1
      %v3820 = vor.u32 %v3815, %v3819
      %v3821 = vshll.u32 %v3706, 16
      %v3823 = vrot.slane %v3821, 1
      %v3824 = vsel %vm1684, %v3820, %v3823
      %v3825 = vshrl.u32 %v3708, 16
      %v3827 = vshll.u32 %v3708, 16
      %v3829 = vrot.slane %v3827, 1
      %v3830 = vor.u32 %v3825, %v3829
      %v3831 = vshll.u32 %v3710, 16
      %v3833 = vrot.slane %v3831, 1
      %v3834 = vsel %vm1684, %v3830, %v3833
      %v3835 = vshrl.u32 %v3712, 16
      %v3837 = vshll.u32 %v3712, 16
      %v3839 = vrot.slane %v3837, 1
      %v3840 = vor.u32 %v3835, %v3839
      %v3841 = vshll.u32 %v3714, 16
      %v3843 = vrot.slane %v3841, 1
      %v3844 = vsel %vm1684, %v3840, %v3843
      %v3845 = vshrl.u32 %v3716, 16
      %v3847 = vshll.u32 %v3716, 16
      %v3849 = vrot.slane %v3847, 1
      %v3850 = vor.u32 %v3845, %v3849
      %v3851 = vshll.u32 %v3718, 16
      %v3853 = vrot.slane %v3851, 1
      %v3854 = vsel %vm1684, %v3850, %v3853
      %v3855 = vshrl.u32 %v3720, 16
      %v3857 = vshll.u32 %v3720, 16
      %v3859 = vrot.slane %v3857, 1
      %v3860 = vor.u32 %v3855, %v3859
      %v3861 = vshll.u32 %v3722, 16
      %v3863 = vrot.slane %v3861, 1
      %v3864 = vsel %vm1684, %v3860, %v3863
      %v3865 = vshrl.u32 %v3724, 16
      %v3867 = vshll.u32 %v3724, 16
      %v3869 = vrot.slane %v3867, 1
      %v3870 = vor.u32 %v3865, %v3869
      %v3871 = vshll.u32 %v3726, 16
      %v3873 = vrot.slane %v3871, 1
      %v3874 = vsel %vm1684, %v3870, %v3873
      %v3875 = vshrl.u32 %v3728, 16
      %v3877 = vshll.u32 %v3728, 16
      %v3879 = vrot.slane %v3877, 1
      %v3880 = vor.u32 %v3875, %v3879
      %v3881 = vshll.u32 %v3730, 16
      %v3883 = vrot.slane %v3881, 1
      %v3884 = vsel %vm1684, %v3880, %v3883
      %v3885 = vshrl.u32 %v3732, 16
      %v3887 = vshll.u32 %v3732, 16
      %v3889 = vrot.slane %v3887, 1
      %v3890 = vor.u32 %v3885, %v3889
      %v3891 = vshll.u32 %v3734, 16
      %v3893 = vrot.slane %v3891, 1
      %v3894 = vsel %vm1684, %v3890, %v3893
      %3895 = vrot.lane.b32.xlu0 %v3744, 24
      %v3896 = vpop.permute.xlu0 %3895
      %3897 = vrot.lane.b32.xlu0 %v3754, 24
      %v3898 = vpop.permute.xlu0 %3897
      %3899 = vrot.lane.b32.xlu0 %v3764, 24
      %v3900 = vpop.permute.xlu0 %3899
      %3901 = vrot.lane.b32.xlu0 %v3774, 24
      %v3902 = vpop.permute.xlu0 %3901
      %3903 = vrot.lane.b32.xlu0 %v3784, 24
      %v3904 = vpop.permute.xlu0 %3903
      %3905 = vrot.lane.b32.xlu0 %v3794, 24
      %v3906 = vpop.permute.xlu0 %3905
      %3907 = vrot.lane.b32.xlu0 %v3804, 24
      %v3908 = vpop.permute.xlu0 %3907
      %3909 = vrot.lane.b32.xlu0 %v3814, 24
      %v3910 = vpop.permute.xlu0 %3909
      %3911 = vrot.lane.b32.xlu0 %v3824, 24
      %v3912 = vpop.permute.xlu0 %3911
      %3913 = vrot.lane.b32.xlu0 %v3834, 24
      %v3914 = vpop.permute.xlu0 %3913
      %3915 = vrot.lane.b32.xlu0 %v3844, 24
      %v3916 = vpop.permute.xlu0 %3915
      %3917 = vrot.lane.b32.xlu0 %v3854, 24
      %v3918 = vpop.permute.xlu0 %3917
      %3919 = vrot.lane.b32.xlu0 %v3864, 24
      %v3920 = vpop.permute.xlu0 %3919
      %3921 = vrot.lane.b32.xlu0 %v3874, 24
      %v3922 = vpop.permute.xlu0 %3921
      %3923 = vrot.lane.b32.xlu0 %v3884, 24
      %v3924 = vpop.permute.xlu0 %3923
      %3925 = vrot.lane.b32.xlu0 %v3894, 24
      %v3926 = vpop.permute.xlu0 %3925
      %v3959 = vrot.slane %v3672, 1
      %v3960 = vrot.slane %v3674, 1
      %v3961 = vsel %vm1909, %v3959, %v3960
      %v3962 = vrot.slane %v3676, 1
      %v3963 = vrot.slane %v3678, 1
      %v3964 = vsel %vm1909, %v3962, %v3963
      %v3965 = vrot.slane %v3680, 1
      %v3966 = vrot.slane %v3682, 1
      %v3967 = vsel %vm1909, %v3965, %v3966
      %v3968 = vrot.slane %v3684, 1
      %v3969 = vrot.slane %v3686, 1
      %v3970 = vsel %vm1909, %v3968, %v3969
      %v3971 = vrot.slane %v3688, 1
      %v3972 = vrot.slane %v3690, 1
      %v3973 = vsel %vm1909, %v3971, %v3972
      %v3974 = vrot.slane %v3692, 1
      %v3975 = vrot.slane %v3694, 1
      %v3976 = vsel %vm1909, %v3974, %v3975
      %v3977 = vrot.slane %v3696, 1
      %v3978 = vrot.slane %v3698, 1
      %v3979 = vsel %vm1909, %v3977, %v3978
      %v3980 = vrot.slane %v3700, 1
      %v3981 = vrot.slane %v3702, 1
      %v3982 = vsel %vm1909, %v3980, %v3981
      %v3983 = vrot.slane %v3704, 1
      %v3984 = vrot.slane %v3706, 1
      %v3985 = vsel %vm1909, %v3983, %v3984
      %v3986 = vrot.slane %v3708, 1
      %v3987 = vrot.slane %v3710, 1
      %v3988 = vsel %vm1909, %v3986, %v3987
      %v3989 = vrot.slane %v3712, 1
      %v3990 = vrot.slane %v3714, 1
      %v3991 = vsel %vm1909, %v3989, %v3990
      %v3992 = vrot.slane %v3716, 1
      %v3993 = vrot.slane %v3718, 1
      %v3994 = vsel %vm1909, %v3992, %v3993
      %v3995 = vrot.slane %v3720, 1
      %v3996 = vrot.slane %v3722, 1
      %v3997 = vsel %vm1909, %v3995, %v3996
      %v3998 = vrot.slane %v3724, 1
      %v3999 = vrot.slane %v3726, 1
      %v4000 = vsel %vm1909, %v3998, %v3999
      %v4001 = vrot.slane %v3728, 1
      %v4002 = vrot.slane %v3730, 1
      %v4003 = vsel %vm1909, %v4001, %v4002
      %v4004 = vrot.slane %v3732, 1
      %v4005 = vrot.slane %v3734, 1
      %v4006 = vsel %vm1909, %v4004, %v4005
      %4007 = vrot.lane.b32.xlu0 %v3961, 48
      %v4008 = vpop.permute.xlu0 %4007
      %4009 = vrot.lane.b32.xlu0 %v3964, 48
      %v4010 = vpop.permute.xlu0 %4009
      %4011 = vrot.lane.b32.xlu0 %v3967, 48
      %v4012 = vpop.permute.xlu0 %4011
      %4013 = vrot.lane.b32.xlu0 %v3970, 48
      %v4014 = vpop.permute.xlu0 %4013
      %4015 = vrot.lane.b32.xlu0 %v3973, 48
      %v4016 = vpop.permute.xlu0 %4015
      %4017 = vrot.lane.b32.xlu0 %v3976, 48
      %v4018 = vpop.permute.xlu0 %4017
      %4019 = vrot.lane.b32.xlu0 %v3979, 48
      %v4020 = vpop.permute.xlu0 %4019
      %4021 = vrot.lane.b32.xlu0 %v3982, 48
      %v4022 = vpop.permute.xlu0 %4021
      %4023 = vrot.lane.b32.xlu0 %v3985, 48
      %v4024 = vpop.permute.xlu0 %4023
      %4025 = vrot.lane.b32.xlu0 %v3988, 48
      %v4026 = vpop.permute.xlu0 %4025
      %4027 = vrot.lane.b32.xlu0 %v3991, 48
      %v4028 = vpop.permute.xlu0 %4027
      %4029 = vrot.lane.b32.xlu0 %v3994, 48
      %v4030 = vpop.permute.xlu0 %4029
      %4031 = vrot.lane.b32.xlu0 %v3997, 48
      %v4032 = vpop.permute.xlu0 %4031
      %4033 = vrot.lane.b32.xlu0 %v4000, 48
      %v4034 = vpop.permute.xlu0 %4033
      %4035 = vrot.lane.b32.xlu0 %v4003, 48
      %v4036 = vpop.permute.xlu0 %4035
      %4037 = vrot.lane.b32.xlu0 %v4006, 48
      %v4038 = vpop.permute.xlu0 %4037
      %v4040 = vsel %vm2023, %v3672, %v3896
      %v4042 = vsel %vm2023, %v3676, %v3898
      %v4044 = vsel %vm2023, %v3680, %v3900
      %v4046 = vsel %vm2023, %v3684, %v3902
      %v4048 = vsel %vm2023, %v3688, %v3904
      %v4050 = vsel %vm2023, %v3692, %v3906
      %v4052 = vsel %vm2023, %v3696, %v3908
      %v4054 = vsel %vm2023, %v3700, %v3910
      %v4056 = vsel %vm2023, %v3704, %v3912
      %v4058 = vsel %vm2023, %v3708, %v3914
      %v4060 = vsel %vm2023, %v3712, %v3916
      %v4062 = vsel %vm2023, %v3716, %v3918
      %v4064 = vsel %vm2023, %v3720, %v3920
      %v4066 = vsel %vm2023, %v3724, %v3922
      %v4068 = vsel %vm2023, %v3728, %v3924
      %v4070 = vsel %vm2023, %v3732, %v3926
      %vm4071 = vcmask 392192
      %v4073 = vsel %vm4071, %v4040, %v4008
      %v4075 = vsel %vm4071, %v4042, %v4010
      %v4077 = vsel %vm4071, %v4044, %v4012
      %v4079 = vsel %vm4071, %v4046, %v4014
      %v4081 = vsel %vm4071, %v4048, %v4016
      %v4083 = vsel %vm4071, %v4050, %v4018
      %v4085 = vsel %vm4071, %v4052, %v4020
      %v4087 = vsel %vm4071, %v4054, %v4022
      %v4089 = vsel %vm4071, %v4056, %v4024
      %v4091 = vsel %vm4071, %v4058, %v4026
      %v4093 = vsel %vm4071, %v4060, %v4028
      %v4095 = vsel %vm4071, %v4062, %v4030
      %v4097 = vsel %vm4071, %v4064, %v4032
      %v4099 = vsel %vm4071, %v4066, %v4034
      %v4101 = vsel %vm4071, %v4068, %v4036
      %v4103 = vsel %vm4071, %v4070, %v4038
      %v4104 = vld [vmem:[%s4] sm:$0xf]
      %v4105 = vld [vmem:[%s4 + $0x4] sm:$0xf]
      %v4106 = vld [vmem:[%s4 + $0x8] sm:$0xf]
      %v4107 = vld [vmem:[%s4 + $0xc] sm:$0xf]
      %v4108 = vld [vmem:[%s4 + $0x10] sm:$0xf]
      %v4109 = vld [vmem:[%s4 + $0x14] sm:$0xf]
      %v4110 = vld [vmem:[%s4 + $0x18] sm:$0xf]
      %v4111 = vld [vmem:[%s4 + $0x1c] sm:$0xf]
      %v4112 = vld [vmem:[%s4 + $0x20] sm:$0xf]
      %v4122 = vunpack.c.l.b16 %v4104
      %v4123 = vunpack.c.l.b16 %v4105
      %v4124 = vunpack.c.l.b16 %v4106
      %v4125 = vunpack.c.l.b16 %v4107
      %v4126 = vunpack.c.l.b16 %v4108
      %v4127 = vunpack.c.l.b16 %v4109
      %v4128 = vunpack.c.l.b16 %v4110
      %v4129 = vunpack.c.l.b16 %v4111
      %v4130 = vunpack.c.l.b16 %v4112
      %v4131 = vpack.c.b16 %v4123, %v4122
      %v4132 = vpack.c.b16 %v4125, %v4124
      %v4133 = vpack.c.b16 %v4127, %v4126
      %v4134 = vpack.c.b16 %v4129, %v4128
      %v4135 = vpack.c.b16 %v4130, %v4130
      %vm4140 = vcmask 588800
      %v4141 = vsel %vm4140, %v4073, 0
      %v4143 = vsel %vm4140, %v4075, 0
      %v4145 = vsel %vm4140, %v4077, 0
      %v4147 = vsel %vm4140, %v4079, 0
      %v4149 = vsel %vm4140, %v4081, 0
      %v4151 = vsel %vm4140, %v4083, 0
      %v4153 = vsel %vm4140, %v4085, 0
      %v4155 = vsel %vm4140, %v4087, 0
      %v4157 = vsel %vm4140, %v4089, 0
      %v4159 = vsel %vm4140, %v4091, 0
      %v4161 = vsel %vm4140, %v4093, 0
      %v4163 = vsel %vm4140, %v4095, 0
      %v4165 = vsel %vm4140, %v4097, 0
      %v4167 = vsel %vm4140, %v4099, 0
      %v4169 = vsel %vm4140, %v4101, 0
      %v4171 = vsel %vm4140, %v4103, 0
      %vm4173 = vcmask 1043456
      %v4175 = vsel %vm4173, %v4135, 0
      %4177 = vmatprep.subr.bf16.mxu0 0
      %4178 = vmatpush1.bf16.msra.mxu0 %v4131
      %4179 = vmatprep.subr.bf16.mxu0 0
      %4180 = vmatpush1.bf16.msra.mxu0 %v4132
      %4181 = vmatprep.subr.bf16.mxu0 0
      %4182 = vmatpush1.bf16.msra.mxu0 %v4133
      %4183 = vmatprep.subr.bf16.mxu0 0
      %4184 = vmatpush1.bf16.msra.mxu0 %v4134
      %4185 = vmatprep.subr.bf16.mxu0 0
      %4186 = vmatpush1.bf16.msra.mxu0 %v4175
      %4187 = vmatprep.subr.bf16.mxu0 0
      %4188 = vmatpush1.bf16.msra.mxu0 0
      %4189 = vmatprep.subr.bf16.mxu0 0
      %4190 = vmatpush1.bf16.msra.mxu0 0
      %4191 = vmatprep.subr.bf16.mxu0 0
      %4192 = vmatpush1.bf16.msra.mxu0 0
      %4193 = vmatprep.subr.bf16.mxu0 0
      %4194 = vmatpush1.bf16.msra.mxu0 0
      %4195 = vmatprep.subr.bf16.mxu0 0
      %4196 = vmatpush1.bf16.msra.mxu0 0
      %4197 = vmatprep.subr.bf16.mxu0 0
      %4198 = vmatpush1.bf16.msra.mxu0 0
      %4199 = vmatprep.subr.bf16.mxu0 0
      %4200 = vmatpush1.bf16.msra.mxu0 0
      %4201 = vmatprep.subr.bf16.mxu0 0
      %4202 = vmatpush1.bf16.msra.mxu0 0
      %4203 = vmatprep.subr.bf16.mxu0 0
      %4204 = vmatpush1.bf16.msra.mxu0 0
      %4205 = vmatprep.subr.bf16.mxu0 0
      %4206 = vmatpush1.bf16.msra.mxu0 0
      %4207 = vmatprep.subr.bf16.mxu0 0
      %4208 = vmatpush1.bf16.msra.mxu0 0
      %4209 = vmatprep.mubr.bf16.mxu0 0
      %4210 = vmatmul.mubr.bf16.gmra.mrb[0].mxu0 %v4141
      %v4211 = vpop.f32.mrb[0].mxu0
      %v4212 = vadd.f32 0.0, %v4211
      %v4213 = vpop.f32.mrb[0].mxu0
      %v4214 = vpop.f32.mrb[0].mxu0
      %v4215 = vadd.f32 0.0, %v4214
      %v4216 = vpop.f32.mrb[0].mxu0
      %4217 = vmatprep.mubr.bf16.mxu0 0
      %4218 = vmatmul.mubr.bf16.gmra.mrb[0].mxu0 %v4143
      %v4219 = vpop.f32.mrb[0].mxu0
      %v4220 = vadd.f32 0.0, %v4219
      %v4221 = vpop.f32.mrb[0].mxu0
      %v4222 = vpop.f32.mrb[0].mxu0
      %v4223 = vadd.f32 0.0, %v4222
      %v4224 = vpop.f32.mrb[0].mxu0
      %4225 = vmatprep.mubr.bf16.mxu0 0
      %4226 = vmatmul.mubr.bf16.gmra.mrb[0].mxu0 %v4145
      %v4227 = vpop.f32.mrb[0].mxu0
      %v4228 = vadd.f32 0.0, %v4227
      %v4229 = vpop.f32.mrb[0].mxu0
      %v4230 = vpop.f32.mrb[0].mxu0
      %v4231 = vadd.f32 0.0, %v4230
      %v4232 = vpop.f32.mrb[0].mxu0
      %4233 = vmatprep.mubr.bf16.mxu0 0
      %4234 = vmatmul.mubr.bf16.gmra.mrb[0].mxu0 %v4147
      %v4235 = vpop.f32.mrb[0].mxu0
      %v4236 = vadd.f32 0.0, %v4235
      %v4237 = vpop.f32.mrb[0].mxu0
      %v4238 = vpop.f32.mrb[0].mxu0
      %v4239 = vadd.f32 0.0, %v4238
      %v4240 = vpop.f32.mrb[0].mxu0
      %4241 = vmatprep.mubr.bf16.mxu0 0
      %4242 = vmatmul.mubr.bf16.gmra.mrb[0].mxu0 %v4149
      %v4243 = vpop.f32.mrb[0].mxu0
      %v4244 = vadd.f32 0.0, %v4243
      %v4245 = vpop.f32.mrb[0].mxu0
      %v4246 = vpop.f32.mrb[0].mxu0
      %v4247 = vadd.f32 0.0, %v4246
      %v4248 = vpop.f32.mrb[0].mxu0
      %4249 = vmatprep.mubr.bf16.mxu0 0
      %4250 = vmatmul.mubr.bf16.gmra.mrb[0].mxu0 %v4151
      %v4251 = vpop.f32.mrb[0].mxu0
      %v4252 = vadd.f32 0.0, %v4251
      %v4253 = vpop.f32.mrb[0].mxu0
      %v4254 = vpop.f32.mrb[0].mxu0
      %v4255 = vadd.f32 0.0, %v4254
      %v4256 = vpop.f32.mrb[0].mxu0
      %4257 = vmatprep.mubr.bf16.mxu0 0
      %4258 = vmatmul.mubr.bf16.gmra.mrb[0].mxu0 %v4153
      %v4259 = vpop.f32.mrb[0].mxu0
      %v4260 = vadd.f32 0.0, %v4259
      %v4261 = vpop.f32.mrb[0].mxu0
      %v4262 = vpop.f32.mrb[0].mxu0
      %v4263 = vadd.f32 0.0, %v4262
      %v4264 = vpop.f32.mrb[0].mxu0
      %4265 = vmatprep.mubr.bf16.mxu0 0
      %4266 = vmatmul.mubr.bf16.gmra.mrb[0].mxu0 %v4155
      %v4267 = vpop.f32.mrb[0].mxu0
      %v4268 = vadd.f32 0.0, %v4267
      %v4269 = vpop.f32.mrb[0].mxu0
      %v4270 = vpop.f32.mrb[0].mxu0
      %v4271 = vadd.f32 0.0, %v4270
      %v4272 = vpop.f32.mrb[0].mxu0
      %4273 = vmatprep.mubr.bf16.mxu0 0
      %4274 = vmatmul.mubr.bf16.gmra.mrb[0].mxu0 %v4157
      %v4275 = vpop.f32.mrb[0].mxu0
      %v4276 = vadd.f32 0.0, %v4275
      %v4277 = vpop.f32.mrb[0].mxu0
      %v4278 = vpop.f32.mrb[0].mxu0
      %v4279 = vadd.f32 0.0, %v4278
      %v4280 = vpop.f32.mrb[0].mxu0
      %4281 = vmatprep.mubr.bf16.mxu0 0
      %4282 = vmatmul.mubr.bf16.gmra.mrb[0].mxu0 %v4159
      %v4283 = vpop.f32.mrb[0].mxu0
      %v4284 = vadd.f32 0.0, %v4283
      %v4285 = vpop.f32.mrb[0].mxu0
      %v4286 = vpop.f32.mrb[0].mxu0
      %v4287 = vadd.f32 0.0, %v4286
      %v4288 = vpop.f32.mrb[0].mxu0
      %4289 = vmatprep.mubr.bf16.mxu0 0
      %4290 = vmatmul.mubr.bf16.gmra.mrb[0].mxu0 %v4161
      %v4291 = vpop.f32.mrb[0].mxu0
      %v4292 = vadd.f32 0.0, %v4291
      %v4293 = vpop.f32.mrb[0].mxu0
      %v4294 = vpop.f32.mrb[0].mxu0
      %v4295 = vadd.f32 0.0, %v4294
      %v4296 = vpop.f32.mrb[0].mxu0
      %4297 = vmatprep.mubr.bf16.mxu0 0
      %4298 = vmatmul.mubr.bf16.gmra.mrb[0].mxu0 %v4163
      %v4299 = vpop.f32.mrb[0].mxu0
      %v4300 = vadd.f32 0.0, %v4299
      %v4301 = vpop.f32.mrb[0].mxu0
      %v4302 = vpop.f32.mrb[0].mxu0
      %v4303 = vadd.f32 0.0, %v4302
      %v4304 = vpop.f32.mrb[0].mxu0
      %4305 = vmatprep.mubr.bf16.mxu0 0
      %4306 = vmatmul.mubr.bf16.gmra.mrb[0].mxu0 %v4165
      %v4307 = vpop.f32.mrb[0].mxu0
      %v4308 = vadd.f32 0.0, %v4307
      %v4309 = vpop.f32.mrb[0].mxu0
      %v4310 = vpop.f32.mrb[0].mxu0
      %v4311 = vadd.f32 0.0, %v4310
      %v4312 = vpop.f32.mrb[0].mxu0
      %4313 = vmatprep.mubr.bf16.mxu0 0
      %4314 = vmatmul.mubr.bf16.gmra.mrb[0].mxu0 %v4167
      %v4315 = vpop.f32.mrb[0].mxu0
      %v4316 = vadd.f32 0.0, %v4315
      %v4317 = vpop.f32.mrb[0].mxu0
      %v4318 = vpop.f32.mrb[0].mxu0
      %v4319 = vadd.f32 0.0, %v4318
      %v4320 = vpop.f32.mrb[0].mxu0
      %4321 = vmatprep.mubr.bf16.mxu0 0
      %4322 = vmatmul.mubr.bf16.gmra.mrb[0].mxu0 %v4169
      %v4323 = vpop.f32.mrb[0].mxu0
      %v4324 = vadd.f32 0.0, %v4323
      %v4325 = vpop.f32.mrb[0].mxu0
      %v4326 = vpop.f32.mrb[0].mxu0
      %v4327 = vadd.f32 0.0, %v4326
      %v4328 = vpop.f32.mrb[0].mxu0
      %4329 = vmatprep.mubr.bf16.mxu0 0
      %4330 = vmatmul.mubr.bf16.gmra.mrb[0].mxu0 %v4171
      %v4331 = vpop.f32.mrb[0].mxu0
      %v4332 = vadd.f32 0.0, %v4331
      %v4333 = vpop.f32.mrb[0].mxu0
      %v4334 = vpop.f32.mrb[0].mxu0
      %v4335 = vadd.f32 0.0, %v4334
      %v4336 = vpop.f32.mrb[0].mxu0
      %4337 = vdwg.mxu0
      %v4338 = vld [vmem:[%s5] sm:$0x1]
      %v4340 = vlaneseq
      %v4341 = vshrl.u32 %v4340, 7
      %v4342 = vsub.s32 0, %v4341
      %v4343 = vrot.slane %v4338, %v4342
      %v4345 = vmul.f32 %v4212, %v4343
      %v4346 = vmul.f32 %v4215, %v4343
      %v4347 = vmul.f32 %v4220, %v4343
      %v4348 = vmul.f32 %v4223, %v4343
      %v4349 = vmul.f32 %v4228, %v4343
      %v4350 = vmul.f32 %v4231, %v4343
      %v4351 = vmul.f32 %v4236, %v4343
      %v4352 = vmul.f32 %v4239, %v4343
      %v4353 = vmul.f32 %v4244, %v4343
      %v4354 = vmul.f32 %v4247, %v4343
      %v4355 = vmul.f32 %v4252, %v4343
      %v4356 = vmul.f32 %v4255, %v4343
      %v4357 = vmul.f32 %v4260, %v4343
      %v4358 = vmul.f32 %v4263, %v4343
      %v4359 = vmul.f32 %v4268, %v4343
      %v4360 = vmul.f32 %v4271, %v4343
      %v4361 = vmul.f32 %v4276, %v4343
      %v4362 = vmul.f32 %v4279, %v4343
      %v4363 = vmul.f32 %v4284, %v4343
      %v4364 = vmul.f32 %v4287, %v4343
      %v4365 = vmul.f32 %v4292, %v4343
      %v4366 = vmul.f32 %v4295, %v4343
      %v4367 = vmul.f32 %v4300, %v4343
      %v4368 = vmul.f32 %v4303, %v4343
      %v4369 = vmul.f32 %v4308, %v4343
      %v4370 = vmul.f32 %v4311, %v4343
      %v4371 = vmul.f32 %v4316, %v4343
      %v4372 = vmul.f32 %v4319, %v4343
      %v4373 = vmul.f32 %v4324, %v4343
      %v4374 = vmul.f32 %v4327, %v4343
      %v4375 = vmul.f32 %v4332, %v4343
      %v4376 = vmul.f32 %v4335, %v4343
      %v4377 = vld [vmem:[%s6] sm:$0x1]
      %v4379 = vlaneseq
      %v4380 = vshrl.u32 %v4379, 7
      %v4381 = vsub.s32 0, %v4380
      %v4382 = vrot.slane %v4377, %v4381
      %v4384 = vadd.f32 %v4345, %v4382
      %v4385 = vadd.f32 %v4346, %v4382
      %v4386 = vadd.f32 %v4347, %v4382
      %v4387 = vadd.f32 %v4348, %v4382
      %v4388 = vadd.f32 %v4349, %v4382
      %v4389 = vadd.f32 %v4350, %v4382
      %v4390 = vadd.f32 %v4351, %v4382
      %v4391 = vadd.f32 %v4352, %v4382
      %v4392 = vadd.f32 %v4353, %v4382
      %v4393 = vadd.f32 %v4354, %v4382
      %v4394 = vadd.f32 %v4355, %v4382
      %v4395 = vadd.f32 %v4356, %v4382
      %v4396 = vadd.f32 %v4357, %v4382
      %v4397 = vadd.f32 %v4358, %v4382
      %v4398 = vadd.f32 %v4359, %v4382
      %v4399 = vadd.f32 %v4360, %v4382
      %v4400 = vadd.f32 %v4361, %v4382
      %v4401 = vadd.f32 %v4362, %v4382
      %v4402 = vadd.f32 %v4363, %v4382
      %v4403 = vadd.f32 %v4364, %v4382
      %v4404 = vadd.f32 %v4365, %v4382
      %v4405 = vadd.f32 %v4366, %v4382
      %v4406 = vadd.f32 %v4367, %v4382
      %v4407 = vadd.f32 %v4368, %v4382
      %v4408 = vadd.f32 %v4369, %v4382
      %v4409 = vadd.f32 %v4370, %v4382
      %v4410 = vadd.f32 %v4371, %v4382
      %v4411 = vadd.f32 %v4372, %v4382
      %v4412 = vadd.f32 %v4373, %v4382
      %v4413 = vadd.f32 %v4374, %v4382
      %v4414 = vadd.f32 %v4375, %v4382
      %v4415 = vadd.f32 %v4376, %v4382
      %v4416 = vmax.f32 %v4384, 0.0
      %v4417 = vmax.f32 %v4385, 0.0
      %v4418 = vmax.f32 %v4386, 0.0
      %v4419 = vmax.f32 %v4387, 0.0
      %v4420 = vmax.f32 %v4388, 0.0
      %v4421 = vmax.f32 %v4389, 0.0
      %v4422 = vmax.f32 %v4390, 0.0
      %v4423 = vmax.f32 %v4391, 0.0
      %v4424 = vmax.f32 %v4392, 0.0
      %v4425 = vmax.f32 %v4393, 0.0
      %v4426 = vmax.f32 %v4394, 0.0
      %v4427 = vmax.f32 %v4395, 0.0
      %v4428 = vmax.f32 %v4396, 0.0
      %v4429 = vmax.f32 %v4397, 0.0
      %v4430 = vmax.f32 %v4398, 0.0
      %v4431 = vmax.f32 %v4399, 0.0
      %v4432 = vmax.f32 %v4400, 0.0
      %v4433 = vmax.f32 %v4401, 0.0
      %v4434 = vmax.f32 %v4402, 0.0
      %v4435 = vmax.f32 %v4403, 0.0
      %v4436 = vmax.f32 %v4404, 0.0
      %v4437 = vmax.f32 %v4405, 0.0
      %v4438 = vmax.f32 %v4406, 0.0
      %v4439 = vmax.f32 %v4407, 0.0
      %v4440 = vmax.f32 %v4408, 0.0
      %v4441 = vmax.f32 %v4409, 0.0
      %v4442 = vmax.f32 %v4410, 0.0
      %v4443 = vmax.f32 %v4411, 0.0
      %v4444 = vmax.f32 %v4412, 0.0
      %v4445 = vmax.f32 %v4413, 0.0
      %v4446 = vmax.f32 %v4414, 0.0
      %v4447 = vmax.f32 %v4415, 0.0
      %4448 = vst.msk [vmem:[%s278] sm:$0xff] %vm1619, %v4416
      %4449 = vst.msk [vmem:[%s278 + $0x8] sm:$0xff] %vm1619, %v4417
      %4450 = vst.msk [vmem:[%s278 + $0x10] sm:$0xff] %vm1619, %v4418
      %4451 = vst.msk [vmem:[%s278 + $0x18] sm:$0xff] %vm1619, %v4419
      %4452 = vst.msk [vmem:[%s278 + $0x20] sm:$0xff] %vm1619, %v4420
      %4453 = vst.msk [vmem:[%s278 + $0x28] sm:$0xff] %vm1619, %v4421
      %4454 = vst.msk [vmem:[%s278 + $0x30] sm:$0xff] %vm1619, %v4422
      %4455 = vst.msk [vmem:[%s278 + $0x38] sm:$0xff] %vm1619, %v4423
      %4456 = vst.msk [vmem:[%s278 + $0x40] sm:$0xff] %vm1619, %v4424
      %4457 = vst.msk [vmem:[%s278 + $0x48] sm:$0xff] %vm1619, %v4425
      %4458 = vst.msk [vmem:[%s278 + $0x50] sm:$0xff] %vm1619, %v4426
      %4459 = vst.msk [vmem:[%s278 + $0x58] sm:$0xff] %vm1619, %v4427
      %4460 = vst.msk [vmem:[%s278 + $0x60] sm:$0xff] %vm1619, %v4428
      %4461 = vst.msk [vmem:[%s278 + $0x68] sm:$0xff] %vm1619, %v4429
      %4462 = vst.msk [vmem:[%s278 + $0x70] sm:$0xff] %vm1619, %v4430
      %4463 = vst.msk [vmem:[%s278 + $0x78] sm:$0xff] %vm1619, %v4431
      %4464 = vst.msk [vmem:[%s278 + $0x80] sm:$0xff] %vm1619, %v4432
      %4465 = vst.msk [vmem:[%s278 + $0x88] sm:$0xff] %vm1619, %v4433
      %4466 = vst.msk [vmem:[%s278 + $0x90] sm:$0xff] %vm1619, %v4434
      %4467 = vst.msk [vmem:[%s278 + $0x98] sm:$0xff] %vm1619, %v4435
      %4468 = vst.msk [vmem:[%s278 + $0xa0] sm:$0xff] %vm1619, %v4436
      %4469 = vst.msk [vmem:[%s278 + $0xa8] sm:$0xff] %vm1619, %v4437
      %4470 = vst.msk [vmem:[%s278 + $0xb0] sm:$0xff] %vm1619, %v4438
      %4471 = vst.msk [vmem:[%s278 + $0xb8] sm:$0xff] %vm1619, %v4439
      %4472 = vst.msk [vmem:[%s278 + $0xc0] sm:$0xff] %vm1619, %v4440
      %4473 = vst.msk [vmem:[%s278 + $0xc8] sm:$0xff] %vm1619, %v4441
      %4474 = vst.msk [vmem:[%s278 + $0xd0] sm:$0xff] %vm1619, %v4442
      %4475 = vst.msk [vmem:[%s278 + $0xd8] sm:$0xff] %vm1619, %v4443
      %4476 = vst.msk [vmem:[%s278 + $0xe0] sm:$0xff] %vm1619, %v4444
      %4477 = vst.msk [vmem:[%s278 + $0xe8] sm:$0xff] %vm1619, %v4445
      %4478 = vst.msk [vmem:[%s278 + $0xf0] sm:$0xff] %vm1619, %v4446
      %4479 = vst.msk [vmem:[%s278 + $0xf8] sm:$0xff] %vm1619, %v4447
      %p4480 = scmp.lt.s32.totalorder %s18, 1
      %s4481 = scalar_select %p4480, %s18, 1
      %s4482 = smul.addr %s4481, 32
      %s4483 = smul.addr %s4482, 8
      %s4484 = scalar_lea.vmem %s7, %s4483
      // Predicated region
      $region49: #{tpu_custom_call.1} parent=47 // pred_check
        %p4485 = pneg %p188
      $region50: #{tpu_custom_call.1} parent=47 // pred_check_branch
        %4487 = sbr.rel (%p4485) target = $region52
      $region51: #{tpu_custom_call.1} parent=47 // pred_region
        _
      $region52: #{tpu_custom_call.1} parent=47 // pred_fallthru
        _
    $region48: #{tpu_custom_call.1} parent=5 // pred_fallthru
      _
    %p4488 = scmp.le.s32.totalorder 2, %s13
    // Predicated region
    $region53: #{tpu_custom_call.1} parent=5 // pred_check
      %p4489 = pneg %p4488
    $region54: #{tpu_custom_call.1} parent=5 // pred_check_branch
      %4491 = sbr.rel (%p4489) target = $region56
    $region55: #{tpu_custom_call.1} parent=5 // pred_region
      %s4492 = ssub.s32 %s13, 2
      // Predicated region
      $region57: #{tpu_custom_call.1} parent=55 // pred_check
        %p4493 = pneg %p194
      $region58: #{tpu_custom_call.1} parent=55 // pred_check_branch
        %4495 = sbr.rel (%p4493) target = $region60
      $region59: #{tpu_custom_call.1} parent=55 // pred_region
        %p4496 = scmp.lt.s32.totalorder %s19, 1
        %s4497 = scalar_select %p4496, %s19, 1
        %s4498 = smul.addr %s4497, 32
        %s4499 = smul.addr %s4498, 8
        %s4500 = scalar_lea.vmem %s7, %s4499
      $region60: #{tpu_custom_call.1} parent=55 // pred_fallthru
        _
    $region56: #{tpu_custom_call.1} parent=5 // pred_fallthru
      _
  $region6: #{tpu_custom_call.1} parent=0 // loop_footer
    %s17 = sadd.s32 1, %s13
  $region7: #{tpu_custom_call.1} parent=0 // loop_footer_branch
    %12 = sbr.rel target = $region3
  $region8: #{tpu_custom_call.1} parent=0 // loop_exit
    _

</llo_original>
